<compile_context>
chip_gen: v5e
topology: v5e:2x2
jax: 0.10.0
libtpu: 0.0.40
codegen_flags: <defaults>
</compile_context>

<pallas_src>
import numpy as np
import jax
import jax.numpy as jnp
from jax import lax
from jax.experimental import pallas as pl
from jax.experimental.pallas import tpu as pltpu

# ---- model dims: HDN_DDI_Block(n_heads=2, head_out_feats=16) ----------------
N_HEADS = 2
HEAD_OUT = 16
EMB = N_HEADS * HEAD_OUT            # 32 = node feature width entering the block
ATT_HEADS = 2                       # heads inside intra / inter GAT
ATT_DIM = EMB // (2 * ATT_HEADS)    # 8  -> intra & inter each emit 16, concat -> 32
NEG_SLOPE = 0.2                     # PyG GATConv LeakyReLU default
LN_EPS = 1e-5                       # PyG LayerNorm default eps
MASK_NEG = -1e30

# ---- packing geometry --------------------------------------------------------
NODES_PER_GRAPH = 8                 # nodes per drug graph (last node is "global", type 2)
PAIR_NODES = 2 * NODES_PER_GRAPH    # h graph + t graph of one pair
PAIRS_PER_STEP = 8
NODES_STEP = PAIRS_PER_STEP * PAIR_NODES      # 128 nodes per grid step
GRAPHS_STEP = 2 * PAIRS_PER_STEP              # 16 LayerNorm groups per step
OUT_WIDTH = 128                     # lane-dense packed output row
ATTN_COLS = N_HEADS * NODES_PER_GRAPH         # 16 compact-attention lanes


def _elu(y):
    return jnp.where(y > 0, y, jnp.exp(jnp.minimum(y, 0.0)) - 1.0)


def _masked_softmax(e, mask_bias):
    # mask_bias: 0 on edges, -1e30 elsewhere, added once after LeakyReLU.
    # exp() of masked entries underflows to exactly 0; every dst row has at
    # least one edge (self loop / bipartite edge), so the max and denom are
    # always taken from real edges.
    e = jnp.where(e > 0, e, NEG_SLOPE * e) + mask_bias
    m = jnp.max(e, axis=-1, keepdims=True)
    p = jnp.exp(e - m)
    inv = pl.reciprocal(jnp.sum(p, axis=-1, keepdims=True), approx=True)  # EUP
    return p * inv


# ------------------------------------------------------------------------------
# Fused HDN_DDI_Block kernel.  One grid step = PAIRS_PER_STEP drug pairs
# (128 nodes), everything stays in VMEM / vregs.
# ------------------------------------------------------------------------------
def _hdn_block_kernel(x_ref, mintra_ref, minter_ref, wall_ref, attr_ref,
                      poolw_ref, pattr_ref, vec_ref, sel_ref, oneh_ref,
                      onehts_ref, out_ref):
    f32 = jnp.float32
    xe = _elu(x_ref[...])                       # F.elu on inputs      [N, EMB]
    mask_intra = mintra_ref[...]                # additive edge bias   [N, N]
    mask_inter = minter_ref[...]
    vec = vec_ref[...]                          # [1, 128] packed small params

    # --- intra + inter GAT fused: one projection, one src / one dst score dot --
    proj = jnp.dot(xe, wall_ref[...], preferred_element_type=f32)        # [N, 48]
    a_src_rows = attr_ref[0:4, :]                                        # [4, 48]
    a_dst_rows = attr_ref[4:8, :]                                        # [4, 48]
    a_sT = lax.dot_general(a_src_rows, proj, (((1,), (1,)), ((), ())),
                           preferred_element_type=f32)                   # [4, N]
    a_d = lax.dot_general(proj, a_dst_rows, (((1,), (1,)), ((), ())),
                          preferred_element_type=f32)                    # [N, 4]

    # fused heads: 0,1 = intra (messages = proj cols 0:16),
    #              2,3 = inter (messages = inter_wsrc proj cols 16:32)
    plan = ((mask_intra, 0 * ATT_DIM), (mask_intra, 1 * ATT_DIM),
            (mask_inter, 2 * ATT_DIM), (mask_inter, 3 * ATT_DIM))
    head_outs = []
    for h, (mask, c0) in enumerate(plan):
        attn = _masked_softmax(a_d[:, h:h + 1] + a_sT[h:h + 1, :], mask)
        head_outs.append(jnp.dot(attn, proj[:, c0:c0 + ATT_DIM],
                                 preferred_element_type=f32))
    # rep = concat([intra, inter]) + [intra_b | inter_b], built in registers.
    rep = jnp.concatenate(head_outs, axis=1) + vec[:, 0:EMB]             # [N, 32]

    # --- graph-wise LayerNorm (PyG mode='graph') fused with ELU ---------------
    oneh = oneh_ref[...]                        # [N, G]
    oneht_s = onehts_ref[...]                   # [G, N], pre-scaled by 1/(n_g*D)
    mean_g = jnp.sum(jnp.dot(oneht_s, rep, preferred_element_type=f32),
                     axis=-1, keepdims=True)                             # [G, 1]
    xc = rep - jnp.dot(oneh, mean_g, preferred_element_type=f32)
    var_g = jnp.sum(jnp.dot(oneht_s, xc * xc, preferred_element_type=f32),
                    axis=-1, keepdims=True)
    rstd_n = jnp.dot(oneh, lax.rsqrt(var_g + LN_EPS),
                     preferred_element_type=f32)                         # [N, 1]
    xnorm = _elu(xc * rstd_n * vec[:, 2 * EMB:3 * EMB] + vec[:, 3 * EMB:4 * EMB])

    # --- pool GATConv + compact per-graph attention, one lane-dense store -----
    ps_pool = jnp.dot(xnorm, poolw_ref[...], preferred_element_type=f32)  # [N, 32]
    p_src_rows = pattr_ref[0:2, :]                                        # [2, 32]
    p_dst_rows = pattr_ref[2:4, :]
    p_sT = lax.dot_general(p_src_rows, ps_pool, (((1,), (1,)), ((), ())),
                           preferred_element_type=f32)                    # [2, N]
    p_d = lax.dot_general(ps_pool, p_dst_rows, (((1,), (1,)), ((), ())),
                          preferred_element_type=f32)                     # [N, 2]
    sel = sel_ref[...]                                                    # [N, 8]
    pool_b = vec[:, EMB:2 * EMB]
    feat_pieces, attn_pieces = [], []
    for h in range(N_HEADS):
        c0 = h * HEAD_OUT
        attn = _masked_softmax(p_d[:, h:h + 1] + p_sT[h:h + 1, :], mask_intra)
        # one MXU push yields both the head output and its compact attention
        vmat = jnp.concatenate([ps_pool[:, c0:c0 + HEAD_OUT], sel], axis=1)
        res = jnp.dot(attn, vmat, preferred_element_type=f32)             # [N, 24]
        feat_pieces.append(res[:, :HEAD_OUT] + pool_b[:, c0:c0 + HEAD_OUT])
        attn_pieces.append(res[:, HEAD_OUT:])
    pad = jnp.zeros((NODES_STEP, OUT_WIDTH - EMB - ATTN_COLS), f32)
    out_ref[...] = jnp.concatenate(feat_pieces + attn_pieces + [pad], axis=1)


# ------------------------------------------------------------------------------
# Host-side parameter packing and the pallas_call wrapper.
# ------------------------------------------------------------------------------
def _place_rows(att, total, offset):
    """[H, C] per-head attention vectors -> [H, total] with att[h] at offset+h*C."""
    att = np.asarray(att, np.float32)
    h, c = att.shape
    out = np.zeros((h, total), np.float32)
    for i in range(h):
        out[i, offset + i * c: offset + (i + 1) * c] = att[i]
    return out


def pack_params(p):
    w_all = np.concatenate([np.asarray(p["intra_w"]), np.asarray(p["inter_wsrc"]),
                            np.asarray(p["inter_wdst"])], axis=1)          # [32, 48]
    att_rows = np.concatenate([
        _place_rows(p["intra_asrc"], 48, 0),      # fused heads 0,1 (src)
        _place_rows(p["inter_asrc"], 48, 16),     # fused heads 2,3 (src)
        _place_rows(p["intra_adst"], 48, 0),      # fused heads 0,1 (dst)
        _place_rows(p["inter_adst"], 48, 32)], axis=0)                     # [8, 48]
    pool_att_rows = np.concatenate([
        _place_rows(p["pool_asrc"], EMB, 0),
        _place_rows(p["pool_adst"], EMB, 0)], axis=0)                      # [4, 32]
    vec = np.concatenate([np.asarray(p["intra_b"]), np.asarray(p["inter_b"]),
                          np.asarray(p["pool_b"]), np.asarray(p["ln_w"]),
                          np.asarray(p["ln_b"])]).astype(np.float32)[None, :]  # [1,128]
    return (jnp.asarray(w_all.astype(np.float32)), jnp.asarray(att_rows),
            jnp.asarray(np.asarray(p["pool_w"], np.float32)),
            jnp.asarray(pool_att_rows), jnp.asarray(vec))


def run_block(x_all, mask_intra, mask_inter, w_all, att_rows, pool_w,
              pool_att_rows, vec_pack, sel8, oneh, oneht_s):
    n_total = x_all.shape[0]
    n_steps = n_total // NODES_STEP

    def const(shape):
        return pl.BlockSpec(shape, lambda b, _s=shape: (0,) * len(_s))

    in_specs = [
        pl.BlockSpec((NODES_STEP, EMB), lambda b: (b, 0)),          # x (per step)
        pl.BlockSpec((NODES_STEP, NODES_STEP), lambda b: (b, 0)),   # intra mask
        pl.BlockSpec((NODES_STEP, NODES_STEP), lambda b: (b, 0)),   # inter mask
        const((EMB, 3 * ATT_HEADS * ATT_DIM)),                      # w_all [32,48]
        const((2 * 2 * ATT_HEADS, 3 * ATT_HEADS * ATT_DIM)),        # att_rows [8,48]
        const((EMB, N_HEADS * HEAD_OUT)),                           # pool_w [32,32]
        const((2 * N_HEADS, EMB)),                                  # pool_att [4,32]
        const((1, 128)),                                            # vec_pack
        const((NODES_STEP, NODES_PER_GRAPH)),                       # sel8
        const((NODES_STEP, GRAPHS_STEP)),                           # oneh
        const((GRAPHS_STEP, NODES_STEP)),                           # oneht_s
    ]
    return pl.pallas_call(
        _hdn_block_kernel,
        grid=(n_steps,),
        in_specs=in_specs,
        out_specs=pl.BlockSpec((NODES_STEP, OUT_WIDTH), lambda b: (b, 0)),
        out_shape=jax.ShapeDtypeStruct((n_total, OUT_WIDTH), jnp.float32),
        compiler_params=pltpu.CompilerParams(
            dimension_semantics=("parallel",)),   # shards pair packs on v7x's 2 TCs
    )(x_all, mask_intra, mask_inter, w_all, att_rows, pool_w,
      pool_att_rows, vec_pack, sel8, oneh, oneht_s)


# ------------------------------------------------------------------------------
# Deterministic test data.
# ------------------------------------------------------------------------------
def build_step_masks():
    """Additive adjacency biases for one packed step of PAIRS_PER_STEP pairs."""
    npg = NODES_PER_GRAPH
    g = np.zeros((npg, npg), np.float32)
    glob = npg - 1
    for i in range(npg):
        j = (i + 1) % npg
        g[i, j] = g[j, i] = 1.0
        g[glob, i] = g[i, glob] = 1.0               # one "global" (type 2) node
    np.fill_diagonal(g, 1.0)                        # PyG GATConv self loops
    zero = np.zeros_like(g)
    ones = np.ones((npg, npg), np.float32)
    pair_intra = np.block([[g, zero], [zero, g]])
    pair_inter = np.block([[zero, ones], [ones, zero]])   # complete bipartite
    step_intra = np.kron(np.eye(PAIRS_PER_STEP, dtype=np.float32), pair_intra)
    step_inter = np.kron(np.eye(PAIRS_PER_STEP, dtype=np.float32), pair_inter)
    bias = lambda a: np.where(a > 0, 0.0, MASK_NEG).astype(np.float32)
    return bias(step_intra), bias(step_inter)


if __name__ == "__main__":
    N_PAIRS = 64
    n_steps = N_PAIRS // PAIRS_PER_STEP
    n_total = N_PAIRS * PAIR_NODES                  # 1024 nodes

    key = jax.random.PRNGKey(0)
    ks = jax.random.split(key, 16)
    init = lambda k, s: 0.2 * jax.random.normal(k, s, jnp.float32)
    params = {
        "intra_w":    init(ks[0], (EMB, ATT_HEADS * ATT_DIM)),
        "intra_asrc": init(ks[1], (ATT_HEADS, ATT_DIM)),
        "intra_adst": init(ks[2], (ATT_HEADS, ATT_DIM)),
        "intra_b":    init(ks[3], (ATT_HEADS * ATT_DIM,)),
        "inter_wsrc": init(ks[4], (EMB, ATT_HEADS * ATT_DIM)),
        "inter_wdst": init(ks[5], (EMB, ATT_HEADS * ATT_DIM)),
        "inter_asrc": init(ks[6], (ATT_HEADS, ATT_DIM)),
        "inter_adst": init(ks[7], (ATT_HEADS, ATT_DIM)),
        "inter_b":    init(ks[8], (ATT_HEADS * ATT_DIM,)),
        "ln_w":       jnp.ones((EMB,), jnp.float32),
        "ln_b":       jnp.zeros((EMB,), jnp.float32),
        "pool_w":     init(ks[9], (EMB, N_HEADS * HEAD_OUT)),
        "pool_asrc":  init(ks[10], (N_HEADS, HEAD_OUT)),
        "pool_adst":  init(ks[11], (N_HEADS, HEAD_OUT)),
        "pool_b":     init(ks[12], (N_HEADS * HEAD_OUT,)),
    }
    w_all, att_rows, pool_w, pool_att_rows, vec_pack = pack_params(params)

    step_intra, step_inter = build_step_masks()
    mask_intra = jnp.asarray(np.tile(step_intra, (n_steps, 1)))
    mask_inter = jnp.asarray(np.tile(step_inter, (n_steps, 1)))

    # Step-invariant LayerNorm one-hots (graphs are contiguous 8-node blocks)
    # and the compact-attention selector (tile of eye(8)).
    oneh = np.kron(np.eye(GRAPHS_STEP, dtype=np.float32),
                   np.ones((NODES_PER_GRAPH, 1), np.float32))            # [128, 16]
    oneht_s = (oneh.T / float(NODES_PER_GRAPH * EMB)).astype(np.float32)  # [16, 128]
    sel8 = np.tile(np.eye(NODES_PER_GRAPH, dtype=np.float32),
                   (GRAPHS_STEP, 1))                                     # [128, 8]

    # Node layout: pair p -> rows [16p,16p+8) = h-drug graph, [16p+8,16p+16) = t-drug.
    x_all = jax.random.normal(ks[13], (n_total, EMB), jnp.float32)

    fwd = jax.jit(run_block)
    packed = fwd(x_all, mask_intra, mask_inter, w_all, att_rows, pool_w,
                 pool_att_rows, vec_pack, jnp.asarray(sel8),
                 jnp.asarray(oneh), jnp.asarray(oneht_s))
    jax.block_until_ready(packed)
    packed = np.asarray(packed)                                          # [n, 128]

    feats = packed[:, :EMB]                         # pooled node features
    attn = packed[:, EMB:EMB + ATTN_COLS]           # per-head in-graph attention

    graph_idx = np.arange(n_total) // NODES_PER_GRAPH
    is_h = (graph_idx % 2 == 0)                     # even graphs = h drug, odd = t
    is_glob = (np.arange(n_total) % NODES_PER_GRAPH == NODES_PER_GRAPH - 1)

    h_new, t_new = feats[is_h], feats[~is_h]
    h_w, t_w = attn[is_h], attn[~is_h]
    h_global = feats[is_h & is_glob]                # get_node(..., type == 2)
    t_global = feats[~is_h & is_glob]

    assert np.isfinite(packed).all()
    assert h_new.shape == (N_PAIRS * NODES_PER_GRAPH, EMB)
    assert t_new.shape == (N_PAIRS * NODES_PER_GRAPH, EMB)
    assert h_global.shape == (N_PAIRS, EMB) and t_global.shape == (N_PAIRS, EMB)
    assert h_w.shape == (N_PAIRS * NODES_PER_GRAPH, ATTN_COLS)
    # pool attention rows are a softmax over each node's own graph -> sum to ~1
    row_sums = attn.reshape(n_total, N_HEADS, NODES_PER_GRAPH).sum(-1)
    assert np.allclose(row_sums, 1.0, atol=5e-3)
    # padding lanes of the lane-dense packed output stay exactly zero
    assert np.all(packed[:, EMB + ATTN_COLS:] == 0.0)
    print("KERNEL_OK")
</pallas_src>

<mosaic_0001>
module attributes {stable_mosaic.version = 11 : i64} {
  func.func @_hdn_block_kernel(%arg0: i32, %arg1: memref<128x32xf32, #tpu.memory_space<vmem>>, %arg2: memref<128x128xf32, #tpu.memory_space<vmem>>, %arg3: memref<128x128xf32, #tpu.memory_space<vmem>>, %arg4: memref<32x48xf32, #tpu.memory_space<vmem>>, %arg5: memref<8x48xf32, #tpu.memory_space<vmem>>, %arg6: memref<32x32xf32, #tpu.memory_space<vmem>>, %arg7: memref<4x32xf32, #tpu.memory_space<vmem>>, %arg8: memref<1x128xf32, #tpu.memory_space<vmem>>, %arg9: memref<128x8xf32, #tpu.memory_space<vmem>>, %arg10: memref<128x16xf32, #tpu.memory_space<vmem>>, %arg11: memref<16x128xf32, #tpu.memory_space<vmem>>, %arg12: memref<128x128xf32, #tpu.memory_space<vmem>>) attributes {dimension_semantics = [#tpu.dimension_semantics<parallel>], iteration_bounds = array<i64: 8>, scalar_prefetch = 0 : i64, scratch_operands = 0 : i64, tpu.core_type = #tpu.core_type<tc>, window_params = [{transform_indices = @transform_0, window_bounds = array<i64: 128, 32>}, {transform_indices = @transform_1, window_bounds = array<i64: 128, 128>}, {transform_indices = @transform_2, window_bounds = array<i64: 128, 128>}, {pipeline_mode = #tpu.pipeline_mode<synchronous>, transform_indices = @transform_3, window_bounds = array<i64: 32, 48>}, {pipeline_mode = #tpu.pipeline_mode<synchronous>, transform_indices = @transform_4, window_bounds = array<i64: 8, 48>}, {pipeline_mode = #tpu.pipeline_mode<synchronous>, transform_indices = @transform_5, window_bounds = array<i64: 32, 32>}, {pipeline_mode = #tpu.pipeline_mode<synchronous>, transform_indices = @transform_6, window_bounds = array<i64: 4, 32>}, {pipeline_mode = #tpu.pipeline_mode<synchronous>, transform_indices = @transform_7, window_bounds = array<i64: 1, 128>}, {pipeline_mode = #tpu.pipeline_mode<synchronous>, transform_indices = @transform_8, window_bounds = array<i64: 128, 8>}, {pipeline_mode = #tpu.pipeline_mode<synchronous>, transform_indices = @transform_9, window_bounds = array<i64: 128, 16>}, {pipeline_mode = #tpu.pipeline_mode<synchronous>, transform_indices = @transform_10, window_bounds = array<i64: 16, 128>}, {transform_indices = @transform_11, window_bounds = array<i64: 128, 128>}]} {
    %c0 = arith.constant 0 : index
    %c0_0 = arith.constant 0 : index
    %0 = vector.load %arg1[%c0, %c0_0] : memref<128x32xf32, #tpu.memory_space<vmem>>, vector<128x32xf32>
    %cst = arith.constant 0.000000e+00 : f32
    %1 = vector.broadcast %cst : f32 to vector<128x32xf32>
    %2 = arith.cmpf ogt, %0, %1 : vector<128x32xf32>
    %cst_1 = arith.constant 0.000000e+00 : f32
    %3 = vector.broadcast %cst_1 : f32 to vector<128x32xf32>
    %4 = arith.minimumf %0, %3 : vector<128x32xf32>
    %5 = math.exp %4 : vector<128x32xf32>
    %cst_2 = arith.constant 1.000000e+00 : f32
    %6 = vector.broadcast %cst_2 : f32 to vector<128x32xf32>
    %7 = arith.subf %5, %6 : vector<128x32xf32>
    %8 = arith.select %2, %0, %7 : vector<128x32xi1>, vector<128x32xf32>
    %c0_3 = arith.constant 0 : index
    %c0_4 = arith.constant 0 : index
    %9 = vector.load %arg2[%c0_3, %c0_4] : memref<128x128xf32, #tpu.memory_space<vmem>>, vector<128x128xf32>
    %c0_5 = arith.constant 0 : index
    %c0_6 = arith.constant 0 : index
    %10 = vector.load %arg3[%c0_5, %c0_6] : memref<128x128xf32, #tpu.memory_space<vmem>>, vector<128x128xf32>
    %c0_7 = arith.constant 0 : index
    %c0_8 = arith.constant 0 : index
    %11 = vector.load %arg8[%c0_7, %c0_8] : memref<1x128xf32, #tpu.memory_space<vmem>>, vector<1x128xf32>
    %c0_9 = arith.constant 0 : index
    %c0_10 = arith.constant 0 : index
    %12 = vector.load %arg4[%c0_9, %c0_10] : memref<32x48xf32, #tpu.memory_space<vmem>>, vector<32x48xf32>
    %cst_11 = arith.constant dense<0.000000e+00> : vector<128x48xf32>
    %13 = tpu.matmul %8, %12, %cst_11 {dimension_numbers = #tpu.dot_dimension_numbers<[1], [0], [0], [1], [0, 0, 1, 1], [], []>} : vector<128x32xf32>, vector<32x48xf32>, vector<128x48xf32> -> vector<128x48xf32>
    %c0_12 = arith.constant 0 : index
    %c0_13 = arith.constant 0 : index
    %14 = vector.load %arg5[%c0_12, %c0_13] : memref<8x48xf32, #tpu.memory_space<vmem>>, vector<4x48xf32>
    %c4 = arith.constant 4 : index
    %c0_14 = arith.constant 0 : index
    %15 = vector.load %arg5[%c4, %c0_14] : memref<8x48xf32, #tpu.memory_space<vmem>>, vector<4x48xf32>
    %cst_15 = arith.constant dense<0.000000e+00> : vector<4x128xf32>
    %16 = tpu.matmul %14, %13, %cst_15 {dimension_numbers = #tpu.dot_dimension_numbers<[1], [1], [0], [0], [0, 0, 1, 0], [], []>} : vector<4x48xf32>, vector<128x48xf32>, vector<4x128xf32> -> vector<4x128xf32>
    %cst_16 = arith.constant dense<0.000000e+00> : vector<128x4xf32>
    %17 = tpu.matmul %13, %15, %cst_16 {dimension_numbers = #tpu.dot_dimension_numbers<[1], [1], [0], [0], [0, 0, 1, 0], [], []>} : vector<128x48xf32>, vector<4x48xf32>, vector<128x4xf32> -> vector<128x4xf32>
    %18 = vector.extract_strided_slice %17 {offsets = [0, 0], sizes = [128, 1], strides = [1, 1]} : vector<128x4xf32> to vector<128x1xf32>
    %19 = vector.extract_strided_slice %16 {offsets = [0, 0], sizes = [1, 128], strides = [1, 1]} : vector<4x128xf32> to vector<1x128xf32>
    %20 = vector.broadcast %18 : vector<128x1xf32> to vector<128x128xf32>
    %21 = vector.broadcast %19 : vector<1x128xf32> to vector<128x128xf32>
    %22 = arith.addf %20, %21 : vector<128x128xf32>
    %cst_17 = arith.constant 0.000000e+00 : f32
    %23 = vector.broadcast %cst_17 : f32 to vector<128x128xf32>
    %24 = arith.cmpf ogt, %22, %23 : vector<128x128xf32>
    %cst_18 = arith.constant 2.000000e-01 : f32
    %25 = vector.broadcast %cst_18 : f32 to vector<128x128xf32>
    %26 = arith.mulf %25, %22 : vector<128x128xf32>
    %27 = arith.select %24, %22, %26 : vector<128x128xi1>, vector<128x128xf32>
    %28 = arith.addf %27, %9 : vector<128x128xf32>
    %cst_19 = arith.constant dense<0xFF800000> : vector<128xf32>
    %29 = vector.multi_reduction <maximumf>, %28, %cst_19 [1] : vector<128x128xf32> to vector<128xf32>
    %30 = vector.shape_cast %29 : vector<128xf32> to vector<128x1xf32>
    %31 = vector.broadcast %30 : vector<128x1xf32> to vector<128x128xf32>
    %32 = arith.subf %28, %31 : vector<128x128xf32>
    %33 = math.exp %32 : vector<128x128xf32>
    %cst_20 = arith.constant dense<0.000000e+00> : vector<128xf32>
    %34 = vector.multi_reduction <add>, %33, %cst_20 [1] : vector<128x128xf32> to vector<128xf32>
    %35 = vector.shape_cast %34 : vector<128xf32> to vector<128x1xf32>
    %36 = tpu.reciprocal %35 {approx = true} : vector<128x1xf32> -> vector<128x1xf32>
    %37 = vector.broadcast %36 : vector<128x1xf32> to vector<128x128xf32>
    %38 = arith.mulf %33, %37 : vector<128x128xf32>
    %39 = vector.extract_strided_slice %13 {offsets = [0, 0], sizes = [128, 8], strides = [1, 1]} : vector<128x48xf32> to vector<128x8xf32>
    %cst_21 = arith.constant dense<0.000000e+00> : vector<128x8xf32>
    %40 = tpu.matmul %38, %39, %cst_21 {dimension_numbers = #tpu.dot_dimension_numbers<[1], [0], [0], [1], [0, 0, 1, 1], [], []>} : vector<128x128xf32>, vector<128x8xf32>, vector<128x8xf32> -> vector<128x8xf32>
    %41 = vector.extract_strided_slice %17 {offsets = [0, 1], sizes = [128, 1], strides = [1, 1]} : vector<128x4xf32> to vector<128x1xf32>
    %42 = vector.extract_strided_slice %16 {offsets = [1, 0], sizes = [1, 128], strides = [1, 1]} : vector<4x128xf32> to vector<1x128xf32>
    %43 = vector.broadcast %41 : vector<128x1xf32> to vector<128x128xf32>
    %44 = vector.broadcast %42 : vector<1x128xf32> to vector<128x128xf32>
    %45 = arith.addf %43, %44 : vector<128x128xf32>
    %cst_22 = arith.constant 0.000000e+00 : f32
    %46 = vector.broadcast %cst_22 : f32 to vector<128x128xf32>
    %47 = arith.cmpf ogt, %45, %46 : vector<128x128xf32>
    %cst_23 = arith.constant 2.000000e-01 : f32
    %48 = vector.broadcast %cst_23 : f32 to vector<128x128xf32>
    %49 = arith.mulf %48, %45 : vector<128x128xf32>
    %50 = arith.select %47, %45, %49 : vector<128x128xi1>, vector<128x128xf32>
    %51 = arith.addf %50, %9 : vector<128x128xf32>
    %cst_24 = arith.constant dense<0xFF800000> : vector<128xf32>
    %52 = vector.multi_reduction <maximumf>, %51, %cst_24 [1] : vector<128x128xf32> to vector<128xf32>
    %53 = vector.shape_cast %52 : vector<128xf32> to vector<128x1xf32>
    %54 = vector.broadcast %53 : vector<128x1xf32> to vector<128x128xf32>
    %55 = arith.subf %51, %54 : vector<128x128xf32>
    %56 = math.exp %55 : vector<128x128xf32>
    %cst_25 = arith.constant dense<0.000000e+00> : vector<128xf32>
    %57 = vector.multi_reduction <add>, %56, %cst_25 [1] : vector<128x128xf32> to vector<128xf32>
    %58 = vector.shape_cast %57 : vector<128xf32> to vector<128x1xf32>
    %59 = tpu.reciprocal %58 {approx = true} : vector<128x1xf32> -> vector<128x1xf32>
    %60 = vector.broadcast %59 : vector<128x1xf32> to vector<128x128xf32>
    %61 = arith.mulf %56, %60 : vector<128x128xf32>
    %62 = vector.extract_strided_slice %13 {offsets = [0, 8], sizes = [128, 8], strides = [1, 1]} : vector<128x48xf32> to vector<128x8xf32>
    %cst_26 = arith.constant dense<0.000000e+00> : vector<128x8xf32>
    %63 = tpu.matmul %61, %62, %cst_26 {dimension_numbers = #tpu.dot_dimension_numbers<[1], [0], [0], [1], [0, 0, 1, 1], [], []>} : vector<128x128xf32>, vector<128x8xf32>, vector<128x8xf32> -> vector<128x8xf32>
    %64 = vector.extract_strided_slice %17 {offsets = [0, 2], sizes = [128, 1], strides = [1, 1]} : vector<128x4xf32> to vector<128x1xf32>
    %65 = vector.extract_strided_slice %16 {offsets = [2, 0], sizes = [1, 128], strides = [1, 1]} : vector<4x128xf32> to vector<1x128xf32>
    %66 = vector.broadcast %64 : vector<128x1xf32> to vector<128x128xf32>
    %67 = vector.broadcast %65 : vector<1x128xf32> to vector<128x128xf32>
    %68 = arith.addf %66, %67 : vector<128x128xf32>
    %cst_27 = arith.constant 0.000000e+00 : f32
    %69 = vector.broadcast %cst_27 : f32 to vector<128x128xf32>
    %70 = arith.cmpf ogt, %68, %69 : vector<128x128xf32>
    %cst_28 = arith.constant 2.000000e-01 : f32
    %71 = vector.broadcast %cst_28 : f32 to vector<128x128xf32>
    %72 = arith.mulf %71, %68 : vector<128x128xf32>
    %73 = arith.select %70, %68, %72 : vector<128x128xi1>, vector<128x128xf32>
    %74 = arith.addf %73, %10 : vector<128x128xf32>
    %cst_29 = arith.constant dense<0xFF800000> : vector<128xf32>
    %75 = vector.multi_reduction <maximumf>, %74, %cst_29 [1] : vector<128x128xf32> to vector<128xf32>
    %76 = vector.shape_cast %75 : vector<128xf32> to vector<128x1xf32>
    %77 = vector.broadcast %76 : vector<128x1xf32> to vector<128x128xf32>
    %78 = arith.subf %74, %77 : vector<128x128xf32>
    %79 = math.exp %78 : vector<128x128xf32>
    %cst_30 = arith.constant dense<0.000000e+00> : vector<128xf32>
    %80 = vector.multi_reduction <add>, %79, %cst_30 [1] : vector<128x128xf32> to vector<128xf32>
    %81 = vector.shape_cast %80 : vector<128xf32> to vector<128x1xf32>
    %82 = tpu.reciprocal %81 {approx = true} : vector<128x1xf32> -> vector<128x1xf32>
    %83 = vector.broadcast %82 : vector<128x1xf32> to vector<128x128xf32>
    %84 = arith.mulf %79, %83 : vector<128x128xf32>
    %85 = vector.extract_strided_slice %13 {offsets = [0, 16], sizes = [128, 8], strides = [1, 1]} : vector<128x48xf32> to vector<128x8xf32>
    %cst_31 = arith.constant dense<0.000000e+00> : vector<128x8xf32>
    %86 = tpu.matmul %84, %85, %cst_31 {dimension_numbers = #tpu.dot_dimension_numbers<[1], [0], [0], [1], [0, 0, 1, 1], [], []>} : vector<128x128xf32>, vector<128x8xf32>, vector<128x8xf32> -> vector<128x8xf32>
    %87 = vector.extract_strided_slice %17 {offsets = [0, 3], sizes = [128, 1], strides = [1, 1]} : vector<128x4xf32> to vector<128x1xf32>
    %88 = vector.extract_strided_slice %16 {offsets = [3, 0], sizes = [1, 128], strides = [1, 1]} : vector<4x128xf32> to vector<1x128xf32>
    %89 = vector.broadcast %87 : vector<128x1xf32> to vector<128x128xf32>
    %90 = vector.broadcast %88 : vector<1x128xf32> to vector<128x128xf32>
    %91 = arith.addf %89, %90 : vector<128x128xf32>
    %cst_32 = arith.constant 0.000000e+00 : f32
    %92 = vector.broadcast %cst_32 : f32 to vector<128x128xf32>
    %93 = arith.cmpf ogt, %91, %92 : vector<128x128xf32>
    %cst_33 = arith.constant 2.000000e-01 : f32
    %94 = vector.broadcast %cst_33 : f32 to vector<128x128xf32>
    %95 = arith.mulf %94, %91 : vector<128x128xf32>
    %96 = arith.select %93, %91, %95 : vector<128x128xi1>, vector<128x128xf32>
    %97 = arith.addf %96, %10 : vector<128x128xf32>
    %cst_34 = arith.constant dense<0xFF800000> : vector<128xf32>
    %98 = vector.multi_reduction <maximumf>, %97, %cst_34 [1] : vector<128x128xf32> to vector<128xf32>
    %99 = vector.shape_cast %98 : vector<128xf32> to vector<128x1xf32>
    %100 = vector.broadcast %99 : vector<128x1xf32> to vector<128x128xf32>
    %101 = arith.subf %97, %100 : vector<128x128xf32>
    %102 = math.exp %101 : vector<128x128xf32>
    %cst_35 = arith.constant dense<0.000000e+00> : vector<128xf32>
    %103 = vector.multi_reduction <add>, %102, %cst_35 [1] : vector<128x128xf32> to vector<128xf32>
    %104 = vector.shape_cast %103 : vector<128xf32> to vector<128x1xf32>
    %105 = tpu.reciprocal %104 {approx = true} : vector<128x1xf32> -> vector<128x1xf32>
    %106 = vector.broadcast %105 : vector<128x1xf32> to vector<128x128xf32>
    %107 = arith.mulf %102, %106 : vector<128x128xf32>
    %108 = vector.extract_strided_slice %13 {offsets = [0, 24], sizes = [128, 8], strides = [1, 1]} : vector<128x48xf32> to vector<128x8xf32>
    %cst_36 = arith.constant dense<0.000000e+00> : vector<128x8xf32>
    %109 = tpu.matmul %107, %108, %cst_36 {dimension_numbers = #tpu.dot_dimension_numbers<[1], [0], [0], [1], [0, 0, 1, 1], [], []>} : vector<128x128xf32>, vector<128x8xf32>, vector<128x8xf32> -> vector<128x8xf32>
    %110 = tpu.concatenate %40, %63, %86, %109 in 1 : vector<128x8xf32>, vector<128x8xf32>, vector<128x8xf32>, vector<128x8xf32> -> vector<128x32xf32>
    %111 = vector.extract_strided_slice %11 {offsets = [0, 0], sizes = [1, 32], strides = [1, 1]} : vector<1x128xf32> to vector<1x32xf32>
    %112 = vector.broadcast %111 : vector<1x32xf32> to vector<128x32xf32>
    %113 = arith.addf %110, %112 : vector<128x32xf32>
    %c0_37 = arith.constant 0 : index
    %c0_38 = arith.constant 0 : index
    %114 = vector.load %arg10[%c0_37, %c0_38] : memref<128x16xf32, #tpu.memory_space<vmem>>, vector<128x16xf32>
    %c0_39 = arith.constant 0 : index
    %c0_40 = arith.constant 0 : index
    %115 = vector.load %arg11[%c0_39, %c0_40] : memref<16x128xf32, #tpu.memory_space<vmem>>, vector<16x128xf32>
    %cst_41 = arith.constant dense<0.000000e+00> : vector<16x32xf32>
    %116 = tpu.matmul %115, %113, %cst_41 {dimension_numbers = #tpu.dot_dimension_numbers<[1], [0], [0], [1], [0, 0, 1, 1], [], []>} : vector<16x128xf32>, vector<128x32xf32>, vector<16x32xf32> -> vector<16x32xf32>
    %cst_42 = arith.constant dense<0.000000e+00> : vector<16xf32>
    %117 = vector.multi_reduction <add>, %116, %cst_42 [1] : vector<16x32xf32> to vector<16xf32>
    %118 = vector.shape_cast %117 : vector<16xf32> to vector<16x1xf32>
    %cst_43 = arith.constant dense<0.000000e+00> : vector<128x1xf32>
    %119 = tpu.matmul %114, %118, %cst_43 {dimension_numbers = #tpu.dot_dimension_numbers<[1], [0], [0], [1], [0, 0, 1, 1], [], []>} : vector<128x16xf32>, vector<16x1xf32>, vector<128x1xf32> -> vector<128x1xf32>
    %120 = vector.broadcast %119 : vector<128x1xf32> to vector<128x32xf32>
    %121 = arith.subf %113, %120 : vector<128x32xf32>
    %122 = arith.mulf %121, %121 : vector<128x32xf32>
    %cst_44 = arith.constant dense<0.000000e+00> : vector<16x32xf32>
    %123 = tpu.matmul %115, %122, %cst_44 {dimension_numbers = #tpu.dot_dimension_numbers<[1], [0], [0], [1], [0, 0, 1, 1], [], []>} : vector<16x128xf32>, vector<128x32xf32>, vector<16x32xf32> -> vector<16x32xf32>
    %cst_45 = arith.constant dense<0.000000e+00> : vector<16xf32>
    %124 = vector.multi_reduction <add>, %123, %cst_45 [1] : vector<16x32xf32> to vector<16xf32>
    %125 = vector.shape_cast %124 : vector<16xf32> to vector<16x1xf32>
    %cst_46 = arith.constant 9.99999974E-6 : f32
    %126 = vector.broadcast %cst_46 : f32 to vector<16x1xf32>
    %127 = arith.addf %125, %126 : vector<16x1xf32>
    %128 = math.rsqrt %127 : vector<16x1xf32>
    %cst_47 = arith.constant dense<0.000000e+00> : vector<128x1xf32>
    %129 = tpu.matmul %114, %128, %cst_47 {dimension_numbers = #tpu.dot_dimension_numbers<[1], [0], [0], [1], [0, 0, 1, 1], [], []>} : vector<128x16xf32>, vector<16x1xf32>, vector<128x1xf32> -> vector<128x1xf32>
    %130 = vector.broadcast %129 : vector<128x1xf32> to vector<128x32xf32>
    %131 = arith.mulf %121, %130 : vector<128x32xf32>
    %132 = vector.extract_strided_slice %11 {offsets = [0, 64], sizes = [1, 32], strides = [1, 1]} : vector<1x128xf32> to vector<1x32xf32>
    %133 = vector.broadcast %132 : vector<1x32xf32> to vector<128x32xf32>
    %134 = arith.mulf %131, %133 : vector<128x32xf32>
    %135 = vector.extract_strided_slice %11 {offsets = [0, 96], sizes = [1, 32], strides = [1, 1]} : vector<1x128xf32> to vector<1x32xf32>
    %136 = vector.broadcast %135 : vector<1x32xf32> to vector<128x32xf32>
    %137 = arith.addf %134, %136 : vector<128x32xf32>
    %cst_48 = arith.constant 0.000000e+00 : f32
    %138 = vector.broadcast %cst_48 : f32 to vector<128x32xf32>
    %139 = arith.cmpf ogt, %137, %138 : vector<128x32xf32>
    %cst_49 = arith.constant 0.000000e+00 : f32
    %140 = vector.broadcast %cst_49 : f32 to vector<128x32xf32>
    %141 = arith.minimumf %137, %140 : vector<128x32xf32>
    %142 = math.exp %141 : vector<128x32xf32>
    %cst_50 = arith.constant 1.000000e+00 : f32
    %143 = vector.broadcast %cst_50 : f32 to vector<128x32xf32>
    %144 = arith.subf %142, %143 : vector<128x32xf32>
    %145 = arith.select %139, %137, %144 : vector<128x32xi1>, vector<128x32xf32>
    %c0_51 = arith.constant 0 : index
    %c0_52 = arith.constant 0 : index
    %146 = vector.load %arg6[%c0_51, %c0_52] : memref<32x32xf32, #tpu.memory_space<vmem>>, vector<32x32xf32>
    %cst_53 = arith.constant dense<0.000000e+00> : vector<128x32xf32>
    %147 = tpu.matmul %145, %146, %cst_53 {dimension_numbers = #tpu.dot_dimension_numbers<[1], [0], [0], [1], [0, 0, 1, 1], [], []>} : vector<128x32xf32>, vector<32x32xf32>, vector<128x32xf32> -> vector<128x32xf32>
    %c0_54 = arith.constant 0 : index
    %c0_55 = arith.constant 0 : index
    %148 = vector.load %arg7[%c0_54, %c0_55] : memref<4x32xf32, #tpu.memory_space<vmem>>, vector<2x32xf32>
    %c2 = arith.constant 2 : index
    %c0_56 = arith.constant 0 : index
    %149 = vector.load %arg7[%c2, %c0_56] : memref<4x32xf32, #tpu.memory_space<vmem>>, vector<2x32xf32>
    %cst_57 = arith.constant dense<0.000000e+00> : vector<2x128xf32>
    %150 = tpu.matmul %148, %147, %cst_57 {dimension_numbers = #tpu.dot_dimension_numbers<[1], [1], [0], [0], [0, 0, 1, 0], [], []>} : vector<2x32xf32>, vector<128x32xf32>, vector<2x128xf32> -> vector<2x128xf32>
    %cst_58 = arith.constant dense<0.000000e+00> : vector<128x2xf32>
    %151 = tpu.matmul %147, %149, %cst_58 {dimension_numbers = #tpu.dot_dimension_numbers<[1], [1], [0], [0], [0, 0, 1, 0], [], []>} : vector<128x32xf32>, vector<2x32xf32>, vector<128x2xf32> -> vector<128x2xf32>
    %c0_59 = arith.constant 0 : index
    %c0_60 = arith.constant 0 : index
    %152 = vector.load %arg9[%c0_59, %c0_60] : memref<128x8xf32, #tpu.memory_space<vmem>>, vector<128x8xf32>
    %153 = vector.extract_strided_slice %11 {offsets = [0, 32], sizes = [1, 32], strides = [1, 1]} : vector<1x128xf32> to vector<1x32xf32>
    %154 = vector.extract_strided_slice %151 {offsets = [0, 0], sizes = [128, 1], strides = [1, 1]} : vector<128x2xf32> to vector<128x1xf32>
    %155 = vector.extract_strided_slice %150 {offsets = [0, 0], sizes = [1, 128], strides = [1, 1]} : vector<2x128xf32> to vector<1x128xf32>
    %156 = vector.broadcast %154 : vector<128x1xf32> to vector<128x128xf32>
    %157 = vector.broadcast %155 : vector<1x128xf32> to vector<128x128xf32>
    %158 = arith.addf %156, %157 : vector<128x128xf32>
    %cst_61 = arith.constant 0.000000e+00 : f32
    %159 = vector.broadcast %cst_61 : f32 to vector<128x128xf32>
    %160 = arith.cmpf ogt, %158, %159 : vector<128x128xf32>
    %cst_62 = arith.constant 2.000000e-01 : f32
    %161 = vector.broadcast %cst_62 : f32 to vector<128x128xf32>
    %162 = arith.mulf %161, %158 : vector<128x128xf32>
    %163 = arith.select %160, %158, %162 : vector<128x128xi1>, vector<128x128xf32>
    %164 = arith.addf %163, %9 : vector<128x128xf32>
    %cst_63 = arith.constant dense<0xFF800000> : vector<128xf32>
    %165 = vector.multi_reduction <maximumf>, %164, %cst_63 [1] : vector<128x128xf32> to vector<128xf32>
    %166 = vector.shape_cast %165 : vector<128xf32> to vector<128x1xf32>
    %167 = vector.broadcast %166 : vector<128x1xf32> to vector<128x128xf32>
    %168 = arith.subf %164, %167 : vector<128x128xf32>
    %169 = math.exp %168 : vector<128x128xf32>
    %cst_64 = arith.constant dense<0.000000e+00> : vector<128xf32>
    %170 = vector.multi_reduction <add>, %169, %cst_64 [1] : vector<128x128xf32> to vector<128xf32>
    %171 = vector.shape_cast %170 : vector<128xf32> to vector<128x1xf32>
    %172 = tpu.reciprocal %171 {approx = true} : vector<128x1xf32> -> vector<128x1xf32>
    %173 = vector.broadcast %172 : vector<128x1xf32> to vector<128x128xf32>
    %174 = arith.mulf %169, %173 : vector<128x128xf32>
    %175 = vector.extract_strided_slice %147 {offsets = [0, 0], sizes = [128, 16], strides = [1, 1]} : vector<128x32xf32> to vector<128x16xf32>
    %176 = tpu.concatenate %175, %152 in 1 : vector<128x16xf32>, vector<128x8xf32> -> vector<128x24xf32>
    %cst_65 = arith.constant dense<0.000000e+00> : vector<128x24xf32>
    %177 = tpu.matmul %174, %176, %cst_65 {dimension_numbers = #tpu.dot_dimension_numbers<[1], [0], [0], [1], [0, 0, 1, 1], [], []>} : vector<128x128xf32>, vector<128x24xf32>, vector<128x24xf32> -> vector<128x24xf32>
    %178 = vector.extract_strided_slice %177 {offsets = [0, 0], sizes = [128, 16], strides = [1, 1]} : vector<128x24xf32> to vector<128x16xf32>
    %179 = vector.extract_strided_slice %153 {offsets = [0, 0], sizes = [1, 16], strides = [1, 1]} : vector<1x32xf32> to vector<1x16xf32>
    %180 = vector.broadcast %179 : vector<1x16xf32> to vector<128x16xf32>
    %181 = arith.addf %178, %180 : vector<128x16xf32>
    %182 = vector.extract_strided_slice %177 {offsets = [0, 16], sizes = [128, 8], strides = [1, 1]} : vector<128x24xf32> to vector<128x8xf32>
    %183 = vector.extract_strided_slice %151 {offsets = [0, 1], sizes = [128, 1], strides = [1, 1]} : vector<128x2xf32> to vector<128x1xf32>
    %184 = vector.extract_strided_slice %150 {offsets = [1, 0], sizes = [1, 128], strides = [1, 1]} : vector<2x128xf32> to vector<1x128xf32>
    %185 = vector.broadcast %183 : vector<128x1xf32> to vector<128x128xf32>
    %186 = vector.broadcast %184 : vector<1x128xf32> to vector<128x128xf32>
    %187 = arith.addf %185, %186 : vector<128x128xf32>
    %cst_66 = arith.constant 0.000000e+00 : f32
    %188 = vector.broadcast %cst_66 : f32 to vector<128x128xf32>
    %189 = arith.cmpf ogt, %187, %188 : vector<128x128xf32>
    %cst_67 = arith.constant 2.000000e-01 : f32
    %190 = vector.broadcast %cst_67 : f32 to vector<128x128xf32>
    %191 = arith.mulf %190, %187 : vector<128x128xf32>
    %192 = arith.select %189, %187, %191 : vector<128x128xi1>, vector<128x128xf32>
    %193 = arith.addf %192, %9 : vector<128x128xf32>
    %cst_68 = arith.constant dense<0xFF800000> : vector<128xf32>
    %194 = vector.multi_reduction <maximumf>, %193, %cst_68 [1] : vector<128x128xf32> to vector<128xf32>
    %195 = vector.shape_cast %194 : vector<128xf32> to vector<128x1xf32>
    %196 = vector.broadcast %195 : vector<128x1xf32> to vector<128x128xf32>
    %197 = arith.subf %193, %196 : vector<128x128xf32>
    %198 = math.exp %197 : vector<128x128xf32>
    %cst_69 = arith.constant dense<0.000000e+00> : vector<128xf32>
    %199 = vector.multi_reduction <add>, %198, %cst_69 [1] : vector<128x128xf32> to vector<128xf32>
    %200 = vector.shape_cast %199 : vector<128xf32> to vector<128x1xf32>
    %201 = tpu.reciprocal %200 {approx = true} : vector<128x1xf32> -> vector<128x1xf32>
    %202 = vector.broadcast %201 : vector<128x1xf32> to vector<128x128xf32>
    %203 = arith.mulf %198, %202 : vector<128x128xf32>
    %204 = vector.extract_strided_slice %147 {offsets = [0, 16], sizes = [128, 16], strides = [1, 1]} : vector<128x32xf32> to vector<128x16xf32>
    %205 = tpu.concatenate %204, %152 in 1 : vector<128x16xf32>, vector<128x8xf32> -> vector<128x24xf32>
    %cst_70 = arith.constant dense<0.000000e+00> : vector<128x24xf32>
    %206 = tpu.matmul %203, %205, %cst_70 {dimension_numbers = #tpu.dot_dimension_numbers<[1], [0], [0], [1], [0, 0, 1, 1], [], []>} : vector<128x128xf32>, vector<128x24xf32>, vector<128x24xf32> -> vector<128x24xf32>
    %207 = vector.extract_strided_slice %206 {offsets = [0, 0], sizes = [128, 16], strides = [1, 1]} : vector<128x24xf32> to vector<128x16xf32>
    %208 = vector.extract_strided_slice %153 {offsets = [0, 16], sizes = [1, 16], strides = [1, 1]} : vector<1x32xf32> to vector<1x16xf32>
    %209 = vector.broadcast %208 : vector<1x16xf32> to vector<128x16xf32>
    %210 = arith.addf %207, %209 : vector<128x16xf32>
    %211 = vector.extract_strided_slice %206 {offsets = [0, 16], sizes = [128, 8], strides = [1, 1]} : vector<128x24xf32> to vector<128x8xf32>
    %cst_71 = arith.constant 0.000000e+00 : f32
    %212 = vector.broadcast %cst_71 : f32 to vector<128x80xf32>
    %213 = tpu.concatenate %181, %210, %182, %211, %212 in 1 : vector<128x16xf32>, vector<128x16xf32>, vector<128x8xf32>, vector<128x8xf32>, vector<128x80xf32> -> vector<128x128xf32>
    %c0_72 = arith.constant 0 : index
    %c0_73 = arith.constant 0 : index
    %214 = vector.load %arg12[%c0_72, %c0_73] : memref<128x128xf32, #tpu.memory_space<vmem>>, vector<128x128xf32>
    tpu.vector_store %arg12[%c0_72, %c0_73], %213 {strides = array<i32>} : memref<128x128xf32, #tpu.memory_space<vmem>>, vector<128x128xf32>,
    return
  }
  func.func @transform_0(%arg0: i32) -> (i32, i32) {
    %c0_i32 = arith.constant 0 : i32
    %c0_i32_0 = arith.constant 0 : i32
    return %arg0, %c0_i32 : i32, i32
  }
  func.func @transform_1(%arg0: i32) -> (i32, i32) {
    %c0_i32 = arith.constant 0 : i32
    %c0_i32_0 = arith.constant 0 : i32
    return %arg0, %c0_i32 : i32, i32
  }
  func.func @transform_2(%arg0: i32) -> (i32, i32) {
    %c0_i32 = arith.constant 0 : i32
    %c0_i32_0 = arith.constant 0 : i32
    return %arg0, %c0_i32 : i32, i32
  }
  func.func @transform_3(%arg0: i32) -> (i32, i32) {
    %c0_i32 = arith.constant 0 : i32
    %c0_i32_0 = arith.constant 0 : i32
    %c0_i32_1 = arith.constant 0 : i32
    return %c0_i32, %c0_i32_0 : i32, i32
  }
  func.func @transform_4(%arg0: i32) -> (i32, i32) {
    %c0_i32 = arith.constant 0 : i32
    %c0_i32_0 = arith.constant 0 : i32
    %c0_i32_1 = arith.constant 0 : i32
    return %c0_i32, %c0_i32_0 : i32, i32
  }
  func.func @transform_5(%arg0: i32) -> (i32, i32) {
    %c0_i32 = arith.constant 0 : i32
    %c0_i32_0 = arith.constant 0 : i32
    %c0_i32_1 = arith.constant 0 : i32
    return %c0_i32, %c0_i32_0 : i32, i32
  }
  func.func @transform_6(%arg0: i32) -> (i32, i32) {
    %c0_i32 = arith.constant 0 : i32
    %c0_i32_0 = arith.constant 0 : i32
    %c0_i32_1 = arith.constant 0 : i32
    return %c0_i32, %c0_i32_0 : i32, i32
  }
  func.func @transform_7(%arg0: i32) -> (i32, i32) {
    %c0_i32 = arith.constant 0 : i32
    %c0_i32_0 = arith.constant 0 : i32
    %c0_i32_1 = arith.constant 0 : i32
    return %c0_i32, %c0_i32_0 : i32, i32
  }
  func.func @transform_8(%arg0: i32) -> (i32, i32) {
    %c0_i32 = arith.constant 0 : i32
    %c0_i32_0 = arith.constant 0 : i32
    %c0_i32_1 = arith.constant 0 : i32
    return %c0_i32, %c0_i32_0 : i32, i32
  }
  func.func @transform_9(%arg0: i32) -> (i32, i32) {
    %c0_i32 = arith.constant 0 : i32
    %c0_i32_0 = arith.constant 0 : i32
    %c0_i32_1 = arith.constant 0 : i32
    return %c0_i32, %c0_i32_0 : i32, i32
  }
  func.func @transform_10(%arg0: i32) -> (i32, i32) {
    %c0_i32 = arith.constant 0 : i32
    %c0_i32_0 = arith.constant 0 : i32
    %c0_i32_1 = arith.constant 0 : i32
    return %c0_i32, %c0_i32_0 : i32, i32
  }
  func.func @transform_11(%arg0: i32) -> (i32, i32) {
    %c0_i32 = arith.constant 0 : i32
    %c0_i32_0 = arith.constant 0 : i32
    return %arg0, %c0_i32 : i32, i32
  }
}

</mosaic_0001>

<llo_original>
// kernel: run_block.1
$region0: #{run_block.1}
  #allocation0 [shape = 'u32[]', space=smem, size = 0x4, offset = 0x4, fixed_abs, tag = 'smem constant byte address 0x4 - core index']
  #allocation1 [shape = 'u32[72,128]{1,0:T(1,128)}', space=vmem, size = 0x9000, scoped, tag = 'internal scratch']
  %s0 = inlined_call_operand.vmem [shape: f32[1024,32], index: 0, kind: input, shape index: {}]
  %s1 = inlined_call_operand.vmem [shape: f32[1024,128], index: 1, kind: input, shape index: {}]
  %s2 = inlined_call_operand.hbm [shape: f32[1024,128], index: 2, kind: input, shape index: {}]
  %s3 = inlined_call_operand.vmem [shape: f32[32,48], index: 3, kind: input, shape index: {}]
  %s4 = inlined_call_operand.vmem [shape: f32[8,48], index: 4, kind: input, shape index: {}]
  %s5 = inlined_call_operand.vmem [shape: f32[32,32], index: 5, kind: input, shape index: {}]
  %s6 = inlined_call_operand.vmem [shape: f32[4,32], index: 6, kind: input, shape index: {}]
  %s7 = inlined_call_operand.vmem [shape: f32[1,128], index: 7, kind: input, shape index: {}]
  %s8 = inlined_call_operand.vmem [shape: f32[128,8], index: 8, kind: input, shape index: {}]
  %s9 = inlined_call_operand.vmem [shape: f32[128,16], index: 9, kind: input, shape index: {}]
  %s10 = inlined_call_operand.vmem [shape: f32[16,128], index: 10, kind: input, shape index: {}]
  %s11 = inlined_call_operand.hbm [shape: f32[1024,128], index: 11, kind: output, shape index: {}]
  %s12 = sld [smem:[#allocation0]]
  $region81: #{run_block.1} parent=0
    _
  %s14 = ssub.s32 1, %s12
  %s15 = scalar_select 0, %s14, %s12
  $region1: #{run_block.1} parent=0
    #allocation2 [shape = 'u8[131072]{0}', space=vmem, size = 0x20000, scoped, tag = 'input window, operand 2']
    #allocation3 [shape = 's32[2]{0}', space=sflag, size = 0x8, scoped, tag = 'scoped memory for run_block.1']
    #allocation4 [shape = 's32[2]{0}', space=sflag, size = 0x8, scoped, tag = 'scoped memory for run_block.1']
    #allocation5 [shape = 'u8[131072]{0}', space=vmem, size = 0x20000, scoped, tag = 'output window, operand 0']
    %16 = vsyncpa [#allocation3], 0
    %s17 = scalar_lea.sflag [#allocation3], 1
    %18 = vsyncpa %s17, 0
    %19 = vsyncpa [#allocation4], 0
    %s20 = scalar_lea.sflag [#allocation4], 1
    %21 = vsyncpa %s20, 0
    loop: start=0, step=1, limit=10
    $region2: #{run_block.1} parent=1 // loop_pre_header
      _
    $region3: #{run_block.1} parent=1 // loop_header
      %s23 = sphi 0, %s27
      %p24 = scmp.ge.s32.totalorder %s23, 10
      %s33 = sphi 0, %s35
      %s36 = sphi 0, %s33
      %s37 = sphi 0, %s36
      %s53 = sphi 0, %s37
      %s59 = sphi 0, %s61
      %s62 = sphi 0, %s59
      %s63 = sphi 0, %s62
      %s79 = sphi 0, %s63
      %s85 = sphi 0, %s87
      %s88 = sphi 0, %s85
      %s89 = sphi 0, %s88
      %s105 = sphi 0, %s89
      %s109 = sphi 0, %s109
      %s111 = sphi 0, %s109
      %s112 = sphi 0, %s111
      %s126 = sphi 0, %s112
      %s130 = sphi 0, %s130
      %s132 = sphi 0, %s130
      %s133 = sphi 0, %s132
      %s147 = sphi 0, %s133
      %s151 = sphi 0, %s151
      %s153 = sphi 0, %s151
      %s154 = sphi 0, %s153
      %s168 = sphi 0, %s154
      %s172 = sphi 0, %s172
      %s174 = sphi 0, %s172
      %s175 = sphi 0, %s174
      %s189 = sphi 0, %s175
      %s193 = sphi 0, %s193
      %s195 = sphi 0, %s193
      %s196 = sphi 0, %s195
      %s210 = sphi 0, %s196
      %s214 = sphi 0, %s214
      %s216 = sphi 0, %s214
      %s217 = sphi 0, %s216
      %s231 = sphi 0, %s217
      %s235 = sphi 0, %s235
      %s237 = sphi 0, %s235
      %s238 = sphi 0, %s237
      %s252 = sphi 0, %s238
      %s256 = sphi 0, %s256
      %s258 = sphi 0, %s256
      %s259 = sphi 0, %s258
      %s273 = sphi 0, %s259
      %s279 = sphi 0, %s281
      %s282 = sphi 0, %s279
      %s283 = sphi 0, %s282
      %s299 = sphi 0, %s283
    $region4: #{run_block.1} parent=1 // loop_header_branch
      %26 = sbr.rel (%p24) target = $region8
    $region5: #{run_block.1} parent=1 // loop_body
      %s28 = ssub.s32 %s23, 1
      %s29 = ssub.s32 %s23, 2
      %s30 = sadd.s32 %s23, 1
      %s31 = ssub.s32 %s23, %s30
      %p32 = scmp.eq.s32.totalorder %s31, 0
      %s34 = sadd.s32 %s33, 1
      %s35 = scalar_select %p32, %s33, %s34
      %p38 = pneg %p32
      %p39 = scmp.eq.s32.totalorder %s23, 7
      %p40 = por %p38, %p39
      %p41 = scmp.ne.s32.totalorder %s33, %s36
      %p42 = scmp.eq.s32.totalorder %s23, 0
      %p43 = por %p41, %p42
      %p44 = scmp.ne.s32.totalorder %s33, %s36
      %p45 = scmp.eq.s32.totalorder %s28, 7
      %p46 = por %p44, %p45
      %p47 = scmp.ne.s32.totalorder %s36, %s37
      %p48 = scmp.eq.s32.totalorder %s28, 0
      %p49 = por %p47, %p48
      %p50 = scmp.ne.s32.totalorder %s36, %s37
      %p51 = scmp.eq.s32.totalorder %s29, 7
      %p52 = por %p50, %p51
      %p54 = scmp.ne.s32.totalorder %s37, %s53
      %p55 = scmp.eq.s32.totalorder %s29, 0
      %p56 = por %p54, %p55
      %s57 = ssub.s32 %s23, %s30
      %p58 = scmp.eq.s32.totalorder %s57, 0
      %s60 = sadd.s32 %s59, 1
      %s61 = scalar_select %p58, %s59, %s60
      %p64 = pneg %p58
      %p65 = scmp.eq.s32.totalorder %s23, 7
      %p66 = por %p64, %p65
      %p67 = scmp.ne.s32.totalorder %s59, %s62
      %p68 = scmp.eq.s32.totalorder %s23, 0
      %p69 = por %p67, %p68
      %p70 = scmp.ne.s32.totalorder %s59, %s62
      %p71 = scmp.eq.s32.totalorder %s28, 7
      %p72 = por %p70, %p71
      %p73 = scmp.ne.s32.totalorder %s62, %s63
      %p74 = scmp.eq.s32.totalorder %s28, 0
      %p75 = por %p73, %p74
      %p76 = scmp.ne.s32.totalorder %s62, %s63
      %p77 = scmp.eq.s32.totalorder %s29, 7
      %p78 = por %p76, %p77
      %p80 = scmp.ne.s32.totalorder %s63, %s79
      %p81 = scmp.eq.s32.totalorder %s29, 0
      %p82 = por %p80, %p81
      %s83 = ssub.s32 %s23, %s30
      %p84 = scmp.eq.s32.totalorder %s83, 0
      %s86 = sadd.s32 %s85, 1
      %s87 = scalar_select %p84, %s85, %s86
      %p90 = pneg %p84
      %p91 = scmp.eq.s32.totalorder %s23, 7
      %p92 = por %p90, %p91
      %p93 = scmp.ne.s32.totalorder %s85, %s88
      %p94 = scmp.eq.s32.totalorder %s23, 0
      %p95 = por %p93, %p94
      %p96 = scmp.ne.s32.totalorder %s85, %s88
      %p97 = scmp.eq.s32.totalorder %s28, 7
      %p98 = por %p96, %p97
      %p99 = scmp.ne.s32.totalorder %s88, %s89
      %p100 = scmp.eq.s32.totalorder %s28, 0
      %p101 = por %p99, %p100
      %p102 = scmp.ne.s32.totalorder %s88, %s89
      %p103 = scmp.eq.s32.totalorder %s29, 7
      %p104 = por %p102, %p103
      %p106 = scmp.ne.s32.totalorder %s89, %s105
      %p107 = scmp.eq.s32.totalorder %s29, 0
      %p108 = por %p106, %p107
      %s110 = sadd.s32 %s109, 1
      %p113 = scmp.eq.s32.totalorder %s23, 7
      %p114 = scmp.ne.s32.totalorder %s109, %s111
      %p115 = scmp.eq.s32.totalorder %s23, 0
      %p116 = por %p114, %p115
      %p117 = scmp.ne.s32.totalorder %s109, %s111
      %p118 = scmp.eq.s32.totalorder %s28, 7
      %p119 = por %p117, %p118
      %p120 = scmp.ne.s32.totalorder %s111, %s112
      %p121 = scmp.eq.s32.totalorder %s28, 0
      %p122 = por %p120, %p121
      %p123 = scmp.ne.s32.totalorder %s111, %s112
      %p124 = scmp.eq.s32.totalorder %s29, 7
      %p125 = por %p123, %p124
      %p127 = scmp.ne.s32.totalorder %s112, %s126
      %p128 = scmp.eq.s32.totalorder %s29, 0
      %p129 = por %p127, %p128
      %s131 = sadd.s32 %s130, 1
      %p134 = scmp.eq.s32.totalorder %s23, 7
      %p135 = scmp.ne.s32.totalorder %s130, %s132
      %p136 = scmp.eq.s32.totalorder %s23, 0
      %p137 = por %p135, %p136
      %p138 = scmp.ne.s32.totalorder %s130, %s132
      %p139 = scmp.eq.s32.totalorder %s28, 7
      %p140 = por %p138, %p139
      %p141 = scmp.ne.s32.totalorder %s132, %s133
      %p142 = scmp.eq.s32.totalorder %s28, 0
      %p143 = por %p141, %p142
      %p144 = scmp.ne.s32.totalorder %s132, %s133
      %p145 = scmp.eq.s32.totalorder %s29, 7
      %p146 = por %p144, %p145
      %p148 = scmp.ne.s32.totalorder %s133, %s147
      %p149 = scmp.eq.s32.totalorder %s29, 0
      %p150 = por %p148, %p149
      %s152 = sadd.s32 %s151, 1
      %p155 = scmp.eq.s32.totalorder %s23, 7
      %p156 = scmp.ne.s32.totalorder %s151, %s153
      %p157 = scmp.eq.s32.totalorder %s23, 0
      %p158 = por %p156, %p157
      %p159 = scmp.ne.s32.totalorder %s151, %s153
      %p160 = scmp.eq.s32.totalorder %s28, 7
      %p161 = por %p159, %p160
      %p162 = scmp.ne.s32.totalorder %s153, %s154
      %p163 = scmp.eq.s32.totalorder %s28, 0
      %p164 = por %p162, %p163
      %p165 = scmp.ne.s32.totalorder %s153, %s154
      %p166 = scmp.eq.s32.totalorder %s29, 7
      %p167 = por %p165, %p166
      %p169 = scmp.ne.s32.totalorder %s154, %s168
      %p170 = scmp.eq.s32.totalorder %s29, 0
      %p171 = por %p169, %p170
      %s173 = sadd.s32 %s172, 1
      %p176 = scmp.eq.s32.totalorder %s23, 7
      %p177 = scmp.ne.s32.totalorder %s172, %s174
      %p178 = scmp.eq.s32.totalorder %s23, 0
      %p179 = por %p177, %p178
      %p180 = scmp.ne.s32.totalorder %s172, %s174
      %p181 = scmp.eq.s32.totalorder %s28, 7
      %p182 = por %p180, %p181
      %p183 = scmp.ne.s32.totalorder %s174, %s175
      %p184 = scmp.eq.s32.totalorder %s28, 0
      %p185 = por %p183, %p184
      %p186 = scmp.ne.s32.totalorder %s174, %s175
      %p187 = scmp.eq.s32.totalorder %s29, 7
      %p188 = por %p186, %p187
      %p190 = scmp.ne.s32.totalorder %s175, %s189
      %p191 = scmp.eq.s32.totalorder %s29, 0
      %p192 = por %p190, %p191
      %s194 = sadd.s32 %s193, 1
      %p197 = scmp.eq.s32.totalorder %s23, 7
      %p198 = scmp.ne.s32.totalorder %s193, %s195
      %p199 = scmp.eq.s32.totalorder %s23, 0
      %p200 = por %p198, %p199
      %p201 = scmp.ne.s32.totalorder %s193, %s195
      %p202 = scmp.eq.s32.totalorder %s28, 7
      %p203 = por %p201, %p202
      %p204 = scmp.ne.s32.totalorder %s195, %s196
      %p205 = scmp.eq.s32.totalorder %s28, 0
      %p206 = por %p204, %p205
      %p207 = scmp.ne.s32.totalorder %s195, %s196
      %p208 = scmp.eq.s32.totalorder %s29, 7
      %p209 = por %p207, %p208
      %p211 = scmp.ne.s32.totalorder %s196, %s210
      %p212 = scmp.eq.s32.totalorder %s29, 0
      %p213 = por %p211, %p212
      %s215 = sadd.s32 %s214, 1
      %p218 = scmp.eq.s32.totalorder %s23, 7
      %p219 = scmp.ne.s32.totalorder %s214, %s216
      %p220 = scmp.eq.s32.totalorder %s23, 0
      %p221 = por %p219, %p220
      %p222 = scmp.ne.s32.totalorder %s214, %s216
      %p223 = scmp.eq.s32.totalorder %s28, 7
      %p224 = por %p222, %p223
      %p225 = scmp.ne.s32.totalorder %s216, %s217
      %p226 = scmp.eq.s32.totalorder %s28, 0
      %p227 = por %p225, %p226
      %p228 = scmp.ne.s32.totalorder %s216, %s217
      %p229 = scmp.eq.s32.totalorder %s29, 7
      %p230 = por %p228, %p229
      %p232 = scmp.ne.s32.totalorder %s217, %s231
      %p233 = scmp.eq.s32.totalorder %s29, 0
      %p234 = por %p232, %p233
      %s236 = sadd.s32 %s235, 1
      %p239 = scmp.eq.s32.totalorder %s23, 7
      %p240 = scmp.ne.s32.totalorder %s235, %s237
      %p241 = scmp.eq.s32.totalorder %s23, 0
      %p242 = por %p240, %p241
      %p243 = scmp.ne.s32.totalorder %s235, %s237
      %p244 = scmp.eq.s32.totalorder %s28, 7
      %p245 = por %p243, %p244
      %p246 = scmp.ne.s32.totalorder %s237, %s238
      %p247 = scmp.eq.s32.totalorder %s28, 0
      %p248 = por %p246, %p247
      %p249 = scmp.ne.s32.totalorder %s237, %s238
      %p250 = scmp.eq.s32.totalorder %s29, 7
      %p251 = por %p249, %p250
      %p253 = scmp.ne.s32.totalorder %s238, %s252
      %p254 = scmp.eq.s32.totalorder %s29, 0
      %p255 = por %p253, %p254
      %s257 = sadd.s32 %s256, 1
      %p260 = scmp.eq.s32.totalorder %s23, 7
      %p261 = scmp.ne.s32.totalorder %s256, %s258
      %p262 = scmp.eq.s32.totalorder %s23, 0
      %p263 = por %p261, %p262
      %p264 = scmp.ne.s32.totalorder %s256, %s258
      %p265 = scmp.eq.s32.totalorder %s28, 7
      %p266 = por %p264, %p265
      %p267 = scmp.ne.s32.totalorder %s258, %s259
      %p268 = scmp.eq.s32.totalorder %s28, 0
      %p269 = por %p267, %p268
      %p270 = scmp.ne.s32.totalorder %s258, %s259
      %p271 = scmp.eq.s32.totalorder %s29, 7
      %p272 = por %p270, %p271
      %p274 = scmp.ne.s32.totalorder %s259, %s273
      %p275 = scmp.eq.s32.totalorder %s29, 0
      %p276 = por %p274, %p275
      %s277 = ssub.s32 %s23, %s30
      %p278 = scmp.eq.s32.totalorder %s277, 0
      %s280 = sadd.s32 %s279, 1
      %s281 = scalar_select %p278, %s279, %s280
      %p284 = pneg %p278
      %p285 = scmp.eq.s32.totalorder %s23, 7
      %p286 = por %p284, %p285
      %p287 = scmp.ne.s32.totalorder %s279, %s282
      %p288 = scmp.eq.s32.totalorder %s23, 0
      %p289 = por %p287, %p288
      %p290 = scmp.ne.s32.totalorder %s279, %s282
      %p291 = scmp.eq.s32.totalorder %s28, 7
      %p292 = por %p290, %p291
      %p293 = scmp.ne.s32.totalorder %s282, %s283
      %p294 = scmp.eq.s32.totalorder %s28, 0
      %p295 = por %p293, %p294
      %p296 = scmp.ne.s32.totalorder %s282, %s283
      %p297 = scmp.eq.s32.totalorder %s29, 7
      %p298 = por %p296, %p297
      %p300 = scmp.ne.s32.totalorder %s283, %s299
      %p301 = scmp.eq.s32.totalorder %s29, 0
      %p302 = por %p300, %p301
      %p303 = scmp.le.s32.totalorder 1, %s23
      %p304 = scmp.lt.s32.totalorder %s23, 9
      %p305 = pnand %p303, %p304
      %p306 = pneg %p305
      // Predicated region
      $region9: #{run_block.1} parent=5 // pred_check
        _
      $region10: #{run_block.1} parent=5 // pred_check_branch
        %308 = sbr.rel (%p305) target = $region12
      $region11: #{run_block.1} parent=5 // pred_region
        %s309 = ssub.s32 %s23, 1
        // Predicated region
        $region13: #{run_block.1} parent=11 // pred_check
          %p310 = pneg %p122
        $region14: #{run_block.1} parent=11 // pred_check_branch
          %312 = sbr.rel (%p310) target = $region16
        $region15: #{run_block.1} parent=11 // pred_region
          _
        $region16: #{run_block.1} parent=11 // pred_fallthru
          _
        // Predicated region
        $region17: #{run_block.1} parent=11 // pred_check
          %p313 = pneg %p143
        $region18: #{run_block.1} parent=11 // pred_check_branch
          %315 = sbr.rel (%p313) target = $region20
        $region19: #{run_block.1} parent=11 // pred_region
          _
        $region20: #{run_block.1} parent=11 // pred_fallthru
          _
        // Predicated region
        $region21: #{run_block.1} parent=11 // pred_check
          %p316 = pneg %p164
        $region22: #{run_block.1} parent=11 // pred_check_branch
          %318 = sbr.rel (%p316) target = $region24
        $region23: #{run_block.1} parent=11 // pred_region
          _
        $region24: #{run_block.1} parent=11 // pred_fallthru
          _
        // Predicated region
        $region25: #{run_block.1} parent=11 // pred_check
          %p319 = pneg %p185
        $region26: #{run_block.1} parent=11 // pred_check_branch
          %321 = sbr.rel (%p319) target = $region28
        $region27: #{run_block.1} parent=11 // pred_region
          _
        $region28: #{run_block.1} parent=11 // pred_fallthru
          _
        // Predicated region
        $region29: #{run_block.1} parent=11 // pred_check
          %p322 = pneg %p206
        $region30: #{run_block.1} parent=11 // pred_check_branch
          %324 = sbr.rel (%p322) target = $region32
        $region31: #{run_block.1} parent=11 // pred_region
          _
        $region32: #{run_block.1} parent=11 // pred_fallthru
          _
        // Predicated region
        $region33: #{run_block.1} parent=11 // pred_check
          %p325 = pneg %p227
        $region34: #{run_block.1} parent=11 // pred_check_branch
          %327 = sbr.rel (%p325) target = $region36
        $region35: #{run_block.1} parent=11 // pred_region
          _
        $region36: #{run_block.1} parent=11 // pred_fallthru
          _
        // Predicated region
        $region37: #{run_block.1} parent=11 // pred_check
          %p328 = pneg %p248
        $region38: #{run_block.1} parent=11 // pred_check_branch
          %330 = sbr.rel (%p328) target = $region40
        $region39: #{run_block.1} parent=11 // pred_region
          _
        $region40: #{run_block.1} parent=11 // pred_fallthru
          _
        // Predicated region
        $region41: #{run_block.1} parent=11 // pred_check
          %p331 = pneg %p269
        $region42: #{run_block.1} parent=11 // pred_check_branch
          %333 = sbr.rel (%p331) target = $region44
        $region43: #{run_block.1} parent=11 // pred_region
          _
        $region44: #{run_block.1} parent=11 // pred_fallthru
          _
      $region12: #{run_block.1} parent=5 // pred_fallthru
        _
      %p334 = scmp.lt.s32.totalorder %s23, 8
      // Predicated region
      $region45: #{run_block.1} parent=5 // pred_check
        %p335 = pneg %p334
      $region46: #{run_block.1} parent=5 // pred_check_branch
        %337 = sbr.rel (%p335) target = $region48
      $region47: #{run_block.1} parent=5 // pred_region
        // Predicated region
        $region49: #{run_block.1} parent=47 // pred_check
          %p338 = pneg %p43
        $region50: #{run_block.1} parent=47 // pred_check_branch
          %340 = sbr.rel (%p338) target = $region52
        $region51: #{run_block.1} parent=47 // pred_region
          %s341 = smul.u32 16, %s23
          %p342 = scmp.lt.s32.totalorder %s341, 127
          %s343 = scalar_select %p342, %s341, 127
          %s344 = smul.addr %s343, 8
          %s345 = scalar_lea.vmem %s0, %s344
          %s346 = smul.u32 16, %s23
        $region52: #{run_block.1} parent=47 // pred_fallthru
          _
        // Predicated region
        $region53: #{run_block.1} parent=47 // pred_check
          %p347 = pneg %p69
        $region54: #{run_block.1} parent=47 // pred_check_branch
          %349 = sbr.rel (%p347) target = $region56
        $region55: #{run_block.1} parent=47 // pred_region
          %s350 = smul.u32 16, %s23
          %p351 = scmp.lt.s32.totalorder %s350, 127
          %s352 = scalar_select %p351, %s350, 127
          %s353 = smul.addr %s352, 8
          %s354 = scalar_lea.vmem %s1, %s353
          %s355 = smul.u32 16, %s23
        $region56: #{run_block.1} parent=47 // pred_fallthru
          _
        // Predicated region
        $region57: #{run_block.1} parent=47 // pred_check
          %p356 = pneg %p95
        $region58: #{run_block.1} parent=47 // pred_check_branch
          %358 = sbr.rel (%p356) target = $region60
        $region59: #{run_block.1} parent=47 // pred_region
          %s359 = sand.u32 %s85, 1
          %s360 = scalar_lea.sflag [#allocation3], %s359
          %s361 = sand.u32 %s85, 1
          %s362 = smul.addr %s361, 128
          %s363 = scalar_lea.vmem [#allocation2], %s362
          %s364 = smul.u32 16, %s23
          %366 = vsyncadd %s360, 0
          %s367 = smul.addr %s364, 8
          %s368 = scalar_lea.hbm %s2, %s367
          %s369 = sshll.u32 %s368, 4
          %s370 = int_to_ptr.hbm [resolvable:$true] %s369
          %s371 = sshll.u32 %s363, 4
          %s372 = int_to_ptr.vmem [resolvable:$true] %s371
          %377 = dma.hbm_to_vmem [thread:$0]  %s370, 2048, %s372, %s360, 128, 128, 8
        $region60: #{run_block.1} parent=47 // pred_fallthru
          _
      $region48: #{run_block.1} parent=5 // pred_fallthru
        _
      %p378 = scmp.le.s32.totalorder 1, %s23
      %p379 = scmp.lt.s32.totalorder %s23, 9
      %p380 = pnand %p378, %p379
      %p381 = pneg %p380
      // Predicated region
      $region61: #{run_block.1} parent=5 // pred_check
        _
      $region62: #{run_block.1} parent=5 // pred_check_branch
        %383 = sbr.rel (%p380) target = $region64
      $region63: #{run_block.1} parent=5 // pred_region
        %s384 = ssub.s32 %s23, 1
        %s385 = sand.u32 %s88, 1
        %s386 = scalar_lea.sflag [#allocation3], %s385
        %s387 = sand.u32 %s88, 1
        %s388 = smul.addr %s387, 128
        %s389 = scalar_lea.vmem [#allocation2], %s388
        // Predicated region
        $region65: #{run_block.1} parent=63 // pred_check
          %p390 = pneg %p101
        $region66: #{run_block.1} parent=63 // pred_check_branch
          %392 = sbr.rel (%p390) target = $region68
        $region67: #{run_block.1} parent=63 // pred_region
          %394 = dma.done %s386, 2048
        $region68: #{run_block.1} parent=63 // pred_fallthru
          _
        %s395 = smul.u32 16, %s28
        %p396 = scmp.lt.s32.totalorder %s395, 127
        %s397 = scalar_select %p396, %s395, 127
        %s398 = smul.addr %s397, 8
        %s399 = scalar_lea.vmem %s0, %s398
        %p400 = pneg %p49
        %p401 = pneg %p46
        %s402 = smul.u32 16, %s28
        %p403 = scmp.lt.s32.totalorder %s402, 127
        %s404 = scalar_select %p403, %s402, 127
        %s405 = smul.addr %s404, 8
        %s406 = scalar_lea.vmem %s1, %s405
        %p407 = pneg %p75
        %p408 = pneg %p72
        %s409 = sand.u32 %s88, 1
        %s410 = scalar_lea.sflag [#allocation3], %s409
        %s411 = sand.u32 %s88, 1
        %s412 = smul.addr %s411, 128
        %s413 = scalar_lea.vmem [#allocation2], %s412
        %p414 = pneg %p101
        %p415 = pneg %p98
        %p416 = pneg %p122
        %p417 = pneg %p119
        %p418 = pneg %p143
        %p419 = pneg %p140
        %p420 = pneg %p164
        %p421 = pneg %p161
        %p422 = pneg %p185
        %p423 = pneg %p182
        %p424 = pneg %p206
        %p425 = pneg %p203
        %p426 = pneg %p227
        %p427 = pneg %p224
        %p428 = pneg %p248
        %p429 = pneg %p245
        %p430 = pneg %p269
        %p431 = pneg %p266
        %p432 = pneg %p295
        %p433 = pneg %p292
        %s434 = sand.u32 %s282, 1
        %s435 = scalar_lea.sflag [#allocation4], %s434
        %s436 = sand.u32 %s282, 1
        %s437 = smul.addr %s436, 128
        %s438 = scalar_lea.vmem [#allocation5], %s437
        %s439 = smul.u32 16, %s28
        %p440 = scmp.lt.s32.totalorder %s439, 127
        %s441 = scalar_select %p440, %s439, 127
        %s442 = smul.addr %s441, 8
        %s443 = scalar_lea.vmem %s0, %s442
        %s444 = smul.u32 16, %s28
        %s445 = smul.u32 16, %s28
        %p446 = scmp.lt.s32.totalorder %s445, 127
        %s447 = scalar_select %p446, %s445, 127
        %s448 = smul.addr %s447, 8
        %s449 = scalar_lea.vmem %s1, %s448
        %s450 = smul.u32 16, %s28
        %s451 = smul.u32 16, %s28
        %s452 = smul.u32 16, %s28
        %v453 = vld [vmem:[%s443] sm:$0xff]
        %v454 = vld [vmem:[%s443 + $0x8] sm:$0xff]
        %v455 = vld [vmem:[%s443 + $0x10] sm:$0xff]
        %v456 = vld [vmem:[%s443 + $0x18] sm:$0xff]
        %v457 = vld [vmem:[%s443 + $0x20] sm:$0xff]
        %v458 = vld [vmem:[%s443 + $0x28] sm:$0xff]
        %v459 = vld [vmem:[%s443 + $0x30] sm:$0xff]
        %v460 = vld [vmem:[%s443 + $0x38] sm:$0xff]
        %v461 = vld [vmem:[%s443 + $0x40] sm:$0xff]
        %v462 = vld [vmem:[%s443 + $0x48] sm:$0xff]
        %v463 = vld [vmem:[%s443 + $0x50] sm:$0xff]
        %v464 = vld [vmem:[%s443 + $0x58] sm:$0xff]
        %v465 = vld [vmem:[%s443 + $0x60] sm:$0xff]
        %v466 = vld [vmem:[%s443 + $0x68] sm:$0xff]
        %v467 = vld [vmem:[%s443 + $0x70] sm:$0xff]
        %v468 = vld [vmem:[%s443 + $0x78] sm:$0xff]
        %vm469 = vcmp.gt.f32.partialorder %v453, 0.0
        %vm470 = vcmp.gt.f32.partialorder %v454, 0.0
        %vm471 = vcmp.gt.f32.partialorder %v455, 0.0
        %vm472 = vcmp.gt.f32.partialorder %v456, 0.0
        %vm473 = vcmp.gt.f32.partialorder %v457, 0.0
        %vm474 = vcmp.gt.f32.partialorder %v458, 0.0
        %vm475 = vcmp.gt.f32.partialorder %v459, 0.0
        %vm476 = vcmp.gt.f32.partialorder %v460, 0.0
        %vm477 = vcmp.gt.f32.partialorder %v461, 0.0
        %vm478 = vcmp.gt.f32.partialorder %v462, 0.0
        %vm479 = vcmp.gt.f32.partialorder %v463, 0.0
        %vm480 = vcmp.gt.f32.partialorder %v464, 0.0
        %vm481 = vcmp.gt.f32.partialorder %v465, 0.0
        %vm482 = vcmp.gt.f32.partialorder %v466, 0.0
        %vm483 = vcmp.gt.f32.partialorder %v467, 0.0
        %vm484 = vcmp.gt.f32.partialorder %v468, 0.0
        %v485 = vmin.f32 %v453, 0.0
        %v486 = vmin.f32 %v454, 0.0
        %v487 = vmin.f32 %v455, 0.0
        %v488 = vmin.f32 %v456, 0.0
        %v489 = vmin.f32 %v457, 0.0
        %v490 = vmin.f32 %v458, 0.0
        %v491 = vmin.f32 %v459, 0.0
        %v492 = vmin.f32 %v460, 0.0
        %v493 = vmin.f32 %v461, 0.0
        %v494 = vmin.f32 %v462, 0.0
        %v495 = vmin.f32 %v463, 0.0
        %v496 = vmin.f32 %v464, 0.0
        %v497 = vmin.f32 %v465, 0.0
        %v498 = vmin.f32 %v466, 0.0
        %v499 = vmin.f32 %v467, 0.0
        %v500 = vmin.f32 %v468, 0.0
        %v501 = vmul.f32 %v485, 1.442695
        %v502 = vpow.pop %v501
        %v503 = vmul.f32 %v486, 1.442695
        %v504 = vpow.pop %v503
        %v505 = vmul.f32 %v487, 1.442695
        %v506 = vpow.pop %v505
        %v507 = vmul.f32 %v488, 1.442695
        %v508 = vpow.pop %v507
        %v509 = vmul.f32 %v489, 1.442695
        %v510 = vpow.pop %v509
        %v511 = vmul.f32 %v490, 1.442695
        %v512 = vpow.pop %v511
        %v513 = vmul.f32 %v491, 1.442695
        %v514 = vpow.pop %v513
        %v515 = vmul.f32 %v492, 1.442695
        %v516 = vpow.pop %v515
        %v517 = vmul.f32 %v493, 1.442695
        %v518 = vpow.pop %v517
        %v519 = vmul.f32 %v494, 1.442695
        %v520 = vpow.pop %v519
        %v521 = vmul.f32 %v495, 1.442695
        %v522 = vpow.pop %v521
        %v523 = vmul.f32 %v496, 1.442695
        %v524 = vpow.pop %v523
        %v525 = vmul.f32 %v497, 1.442695
        %v526 = vpow.pop %v525
        %v527 = vmul.f32 %v498, 1.442695
        %v528 = vpow.pop %v527
        %v529 = vmul.f32 %v499, 1.442695
        %v530 = vpow.pop %v529
        %v531 = vmul.f32 %v500, 1.442695
        %v532 = vpow.pop %v531
        %v533 = vsub.f32 %v502, 1.0
        %v534 = vsub.f32 %v504, 1.0
        %v535 = vsub.f32 %v506, 1.0
        %v536 = vsub.f32 %v508, 1.0
        %v537 = vsub.f32 %v510, 1.0
        %v538 = vsub.f32 %v512, 1.0
        %v539 = vsub.f32 %v514, 1.0
        %v540 = vsub.f32 %v516, 1.0
        %v541 = vsub.f32 %v518, 1.0
        %v542 = vsub.f32 %v520, 1.0
        %v543 = vsub.f32 %v522, 1.0
        %v544 = vsub.f32 %v524, 1.0
        %v545 = vsub.f32 %v526, 1.0
        %v546 = vsub.f32 %v528, 1.0
        %v547 = vsub.f32 %v530, 1.0
        %v548 = vsub.f32 %v532, 1.0
        %v549 = vsel %vm469, %v453, %v533
        %v550 = vsel %vm470, %v454, %v534
        %v551 = vsel %vm471, %v455, %v535
        %v552 = vsel %vm472, %v456, %v536
        %v553 = vsel %vm473, %v457, %v537
        %v554 = vsel %vm474, %v458, %v538
        %v555 = vsel %vm475, %v459, %v539
        %v556 = vsel %vm476, %v460, %v540
        %v557 = vsel %vm477, %v461, %v541
        %v558 = vsel %vm478, %v462, %v542
        %v559 = vsel %vm479, %v463, %v543
        %v560 = vsel %vm480, %v464, %v544
        %v561 = vsel %vm481, %v465, %v545
        %v562 = vsel %vm482, %v466, %v546
        %v563 = vsel %vm483, %v467, %v547
        %v564 = vsel %vm484, %v468, %v548
        %v565 = vld [vmem:[%s449] sm:$0xff]
        %v566 = vld [vmem:[%s449 + $0x8] sm:$0xff]
        %v567 = vld [vmem:[%s449 + $0x10] sm:$0xff]
        %v568 = vld [vmem:[%s449 + $0x18] sm:$0xff]
        %v569 = vld [vmem:[%s449 + $0x20] sm:$0xff]
        %v570 = vld [vmem:[%s449 + $0x28] sm:$0xff]
        %v571 = vld [vmem:[%s449 + $0x30] sm:$0xff]
        %v572 = vld [vmem:[%s449 + $0x38] sm:$0xff]
        %v573 = vld [vmem:[%s449 + $0x40] sm:$0xff]
        %v574 = vld [vmem:[%s449 + $0x48] sm:$0xff]
        %v575 = vld [vmem:[%s449 + $0x50] sm:$0xff]
        %v576 = vld [vmem:[%s449 + $0x58] sm:$0xff]
        %v577 = vld [vmem:[%s449 + $0x60] sm:$0xff]
        %v578 = vld [vmem:[%s449 + $0x68] sm:$0xff]
        %v579 = vld [vmem:[%s449 + $0x70] sm:$0xff]
        %v580 = vld [vmem:[%s449 + $0x78] sm:$0xff]
        %v581 = vld [vmem:[%s389] sm:$0xff]
        %v582 = vld [vmem:[%s389 + $0x8] sm:$0xff]
        %v583 = vld [vmem:[%s389 + $0x10] sm:$0xff]
        %v584 = vld [vmem:[%s389 + $0x18] sm:$0xff]
        %v585 = vld [vmem:[%s389 + $0x20] sm:$0xff]
        %v586 = vld [vmem:[%s389 + $0x28] sm:$0xff]
        %v587 = vld [vmem:[%s389 + $0x30] sm:$0xff]
        %v588 = vld [vmem:[%s389 + $0x38] sm:$0xff]
        %v589 = vld [vmem:[%s389 + $0x40] sm:$0xff]
        %v590 = vld [vmem:[%s389 + $0x48] sm:$0xff]
        %v591 = vld [vmem:[%s389 + $0x50] sm:$0xff]
        %v592 = vld [vmem:[%s389 + $0x58] sm:$0xff]
        %v593 = vld [vmem:[%s389 + $0x60] sm:$0xff]
        %v594 = vld [vmem:[%s389 + $0x68] sm:$0xff]
        %v595 = vld [vmem:[%s389 + $0x70] sm:$0xff]
        %v596 = vld [vmem:[%s389 + $0x78] sm:$0xff]
        %v597 = vld [vmem:[%s7] sm:$0x1]
        %v598 = vld [vmem:[%s3] sm:$0xff]
        %v599 = vld [vmem:[%s3 + $0x8] sm:$0xff]
        %v600 = vld [vmem:[%s3 + $0x10] sm:$0xff]
        %v601 = vld [vmem:[%s3 + $0x18] sm:$0xff]
        %vm602 = vcmask 261120
        %v604 = vsel %vm602, %v549, 0
        %v607 = vsel %vm602, %v550, 0
        %v610 = vsel %vm602, %v551, 0
        %v613 = vsel %vm602, %v552, 0
        %v616 = vsel %vm602, %v553, 0
        %v619 = vsel %vm602, %v554, 0
        %v622 = vsel %vm602, %v555, 0
        %v625 = vsel %vm602, %v556, 0
        %v628 = vsel %vm602, %v557, 0
        %v631 = vsel %vm602, %v558, 0
        %v634 = vsel %vm602, %v559, 0
        %v637 = vsel %vm602, %v560, 0
        %v640 = vsel %vm602, %v561, 0
        %v643 = vsel %vm602, %v562, 0
        %v646 = vsel %vm602, %v563, 0
        %v649 = vsel %vm602, %v564, 0
        %651 = vmatpush.msra.mxu0 0.0
        %652 = vmatpush.msra.mxu0 0.0
        %653 = vmatpush.msra.mxu0 0.0
        %654 = vmatpush.msra.mxu0 0.0
        %655 = vmatpush.msra.mxu0 0.0
        %656 = vmatpush.msra.mxu0 0.0
        %657 = vmatpush.msra.mxu0 0.0
        %658 = vmatpush.msra.mxu0 0.0
        %659 = vmatpush.msra.mxu0 0.0
        %660 = vmatpush.msra.mxu0 0.0
        %661 = vmatpush.msra.mxu0 0.0
        %662 = vmatpush.msra.mxu0 0.0
        %663 = vmatpush.msra.mxu0 %v601
        %664 = vmatpush.msra.mxu0 %v600
        %665 = vmatpush.msra.mxu0 %v599
        %666 = vmatpush.msra.mxu0 %v598
        %667 = vmatmul.f32.gmra.mxu0 %v604
        %v668 = vpop.f32.mrf.mxu0
        %v669 = vadd.f32 0.0, %v668
        %670 = vmatmul.f32.gmra.mxu0 %v607
        %v671 = vpop.f32.mrf.mxu0
        %v672 = vadd.f32 0.0, %v671
        %673 = vmatmul.f32.gmra.mxu0 %v610
        %v674 = vpop.f32.mrf.mxu0
        %v675 = vadd.f32 0.0, %v674
        %676 = vmatmul.f32.gmra.mxu0 %v613
        %v677 = vpop.f32.mrf.mxu0
        %v678 = vadd.f32 0.0, %v677
        %679 = vmatmul.f32.gmra.mxu0 %v616
        %v680 = vpop.f32.mrf.mxu0
        %v681 = vadd.f32 0.0, %v680
        %682 = vmatmul.f32.gmra.mxu0 %v619
        %v683 = vpop.f32.mrf.mxu0
        %v684 = vadd.f32 0.0, %v683
        %685 = vmatmul.f32.gmra.mxu0 %v622
        %v686 = vpop.f32.mrf.mxu0
        %v687 = vadd.f32 0.0, %v686
        %688 = vmatmul.f32.gmra.mxu0 %v625
        %v689 = vpop.f32.mrf.mxu0
        %v690 = vadd.f32 0.0, %v689
        %691 = vmatmul.f32.gmra.mxu0 %v628
        %v692 = vpop.f32.mrf.mxu0
        %v693 = vadd.f32 0.0, %v692
        %694 = vmatmul.f32.gmra.mxu0 %v631
        %v695 = vpop.f32.mrf.mxu0
        %v696 = vadd.f32 0.0, %v695
        %697 = vmatmul.f32.gmra.mxu0 %v634
        %v698 = vpop.f32.mrf.mxu0
        %v699 = vadd.f32 0.0, %v698
        %700 = vmatmul.f32.gmra.mxu0 %v637
        %v701 = vpop.f32.mrf.mxu0
        %v702 = vadd.f32 0.0, %v701
        %703 = vmatmul.f32.gmra.mxu0 %v640
        %v704 = vpop.f32.mrf.mxu0
        %v705 = vadd.f32 0.0, %v704
        %706 = vmatmul.f32.gmra.mxu0 %v643
        %v707 = vpop.f32.mrf.mxu0
        %v708 = vadd.f32 0.0, %v707
        %709 = vmatmul.f32.gmra.mxu0 %v646
        %v710 = vpop.f32.mrf.mxu0
        %v711 = vadd.f32 0.0, %v710
        %712 = vmatmul.f32.gmra.mxu0 %v649
        %v713 = vpop.f32.mrf.mxu0
        %v714 = vadd.f32 0.0, %v713
        %715 = vdwg.mxu0
        %v716 = vld [vmem:[%s4] sm:$0xf]
        %v717 = vld [vmem:[%s4 + $0x4] sm:$0xf]
        %vm718 = vcmask 392192
        %v720 = vsel %vm718, %v716, 0
        %v723 = vsel %vm718, %v669, 0
        %v726 = vsel %vm718, %v672, 0
        %v729 = vsel %vm718, %v675, 0
        %v732 = vsel %vm718, %v678, 0
        %v735 = vsel %vm718, %v681, 0
        %v738 = vsel %vm718, %v684, 0
        %v741 = vsel %vm718, %v687, 0
        %v744 = vsel %vm718, %v690, 0
        %v747 = vsel %vm718, %v693, 0
        %v750 = vsel %vm718, %v696, 0
        %v753 = vsel %vm718, %v699, 0
        %v756 = vsel %vm718, %v702, 0
        %v759 = vsel %vm718, %v705, 0
        %v762 = vsel %vm718, %v708, 0
        %v765 = vsel %vm718, %v711, 0
        %v768 = vsel %vm718, %v714, 0
        %770 = vmatpush.xpose.msra.mxu0 %v768
        %771 = vmatpush.xpose.msra.mxu0 %v765
        %772 = vmatpush.xpose.msra.mxu0 %v762
        %773 = vmatpush.xpose.msra.mxu0 %v759
        %774 = vmatpush.xpose.msra.mxu0 %v756
        %775 = vmatpush.xpose.msra.mxu0 %v753
        %776 = vmatpush.xpose.msra.mxu0 %v750
        %777 = vmatpush.xpose.msra.mxu0 %v747
        %778 = vmatpush.xpose.msra.mxu0 %v744
        %779 = vmatpush.xpose.msra.mxu0 %v741
        %780 = vmatpush.xpose.msra.mxu0 %v738
        %781 = vmatpush.xpose.msra.mxu0 %v735
        %782 = vmatpush.xpose.msra.mxu0 %v732
        %783 = vmatpush.xpose.msra.mxu0 %v729
        %784 = vmatpush.xpose.msra.mxu0 %v726
        %785 = vmatpush.xpose.msra.mxu0 %v723
        %786 = vmatmul.f32.gmra.mxu0 %v720
        %v787 = vpop.f32.mrf.mxu0
        %v788 = vadd.f32 0.0, %v787
        %789 = vdwg.mxu0
        %v791 = vsel %vm718, %v717, 0
        %793 = vmatpush.xpose.msra.mxu0 0.0
        %794 = vmatpush.xpose.msra.mxu0 0.0
        %795 = vmatpush.xpose.msra.mxu0 0.0
        %796 = vmatpush.xpose.msra.mxu0 0.0
        %797 = vmatpush.xpose.msra.mxu0 0.0
        %798 = vmatpush.xpose.msra.mxu0 0.0
        %799 = vmatpush.xpose.msra.mxu0 0.0
        %800 = vmatpush.xpose.msra.mxu0 0.0
        %801 = vmatpush.xpose.msra.mxu0 0.0
        %802 = vmatpush.xpose.msra.mxu0 0.0
        %803 = vmatpush.xpose.msra.mxu0 0.0
        %804 = vmatpush.xpose.msra.mxu0 0.0
        %805 = vmatpush.xpose.msra.mxu0 0.0
        %806 = vmatpush.xpose.msra.mxu0 0.0
        %807 = vmatpush.xpose.msra.mxu0 0.0
        %808 = vmatpush.xpose.msra.mxu0 %v791
        %809 = vmatmul.f32.gmra.mxu0 %v723
        %v810 = vpop.f32.mrf.mxu0
        %v811 = vadd.f32 0.0, %v810
        %812 = vmatmul.f32.gmra.mxu0 %v726
        %v813 = vpop.f32.mrf.mxu0
        %v814 = vadd.f32 0.0, %v813
        %815 = vmatmul.f32.gmra.mxu0 %v729
        %v816 = vpop.f32.mrf.mxu0
        %v817 = vadd.f32 0.0, %v816
        %818 = vmatmul.f32.gmra.mxu0 %v732
        %v819 = vpop.f32.mrf.mxu0
        %v820 = vadd.f32 0.0, %v819
        %821 = vmatmul.f32.gmra.mxu0 %v735
        %v822 = vpop.f32.mrf.mxu0
        %v823 = vadd.f32 0.0, %v822
        %824 = vmatmul.f32.gmra.mxu0 %v738
        %v825 = vpop.f32.mrf.mxu0
        %v826 = vadd.f32 0.0, %v825
        %827 = vmatmul.f32.gmra.mxu0 %v741
        %v828 = vpop.f32.mrf.mxu0
        %v829 = vadd.f32 0.0, %v828
        %830 = vmatmul.f32.gmra.mxu0 %v744
        %v831 = vpop.f32.mrf.mxu0
        %v832 = vadd.f32 0.0, %v831
        %833 = vmatmul.f32.gmra.mxu0 %v747
        %v834 = vpop.f32.mrf.mxu0
        %v835 = vadd.f32 0.0, %v834
        %836 = vmatmul.f32.gmra.mxu0 %v750
        %v837 = vpop.f32.mrf.mxu0
        %v838 = vadd.f32 0.0, %v837
        %839 = vmatmul.f32.gmra.mxu0 %v753
        %v840 = vpop.f32.mrf.mxu0
        %v841 = vadd.f32 0.0, %v840
        %842 = vmatmul.f32.gmra.mxu0 %v756
        %v843 = vpop.f32.mrf.mxu0
        %v844 = vadd.f32 0.0, %v843
        %845 = vmatmul.f32.gmra.mxu0 %v759
        %v846 = vpop.f32.mrf.mxu0
        %v847 = vadd.f32 0.0, %v846
        %848 = vmatmul.f32.gmra.mxu0 %v762
        %v849 = vpop.f32.mrf.mxu0
        %v850 = vadd.f32 0.0, %v849
        %851 = vmatmul.f32.gmra.mxu0 %v765
        %v852 = vpop.f32.mrf.mxu0
        %v853 = vadd.f32 0.0, %v852
        %854 = vmatmul.f32.gmra.mxu0 %v768
        %v855 = vpop.f32.mrf.mxu0
        %v856 = vadd.f32 0.0, %v855
        %857 = vdwg.mxu0
        %859 = vset.pattern.permute.xlu0 0
        %860 = vperm.xlu0 %859, %v811
        %v861 = vpop.permute.xlu0 %860
        %864 = vset.pattern.permute.xlu0 0
        %865 = vperm.xlu0 %864, %v814
        %v866 = vpop.permute.xlu0 %865
        %869 = vset.pattern.permute.xlu0 0
        %870 = vperm.xlu0 %869, %v817
        %v871 = vpop.permute.xlu0 %870
        %874 = vset.pattern.permute.xlu0 0
        %875 = vperm.xlu0 %874, %v820
        %v876 = vpop.permute.xlu0 %875
        %879 = vset.pattern.permute.xlu0 0
        %880 = vperm.xlu0 %879, %v823
        %v881 = vpop.permute.xlu0 %880
        %884 = vset.pattern.permute.xlu0 0
        %885 = vperm.xlu0 %884, %v826
        %v886 = vpop.permute.xlu0 %885
        %889 = vset.pattern.permute.xlu0 0
        %890 = vperm.xlu0 %889, %v829
        %v891 = vpop.permute.xlu0 %890
        %894 = vset.pattern.permute.xlu0 0
        %895 = vperm.xlu0 %894, %v832
        %v896 = vpop.permute.xlu0 %895
        %899 = vset.pattern.permute.xlu0 0
        %900 = vperm.xlu0 %899, %v835
        %v901 = vpop.permute.xlu0 %900
        %904 = vset.pattern.permute.xlu0 0
        %905 = vperm.xlu0 %904, %v838
        %v906 = vpop.permute.xlu0 %905
        %909 = vset.pattern.permute.xlu0 0
        %910 = vperm.xlu0 %909, %v841
        %v911 = vpop.permute.xlu0 %910
        %914 = vset.pattern.permute.xlu0 0
        %915 = vperm.xlu0 %914, %v844
        %v916 = vpop.permute.xlu0 %915
        %919 = vset.pattern.permute.xlu0 0
        %920 = vperm.xlu0 %919, %v847
        %v921 = vpop.permute.xlu0 %920
        %924 = vset.pattern.permute.xlu0 0
        %925 = vperm.xlu0 %924, %v850
        %v926 = vpop.permute.xlu0 %925
        %929 = vset.pattern.permute.xlu0 0
        %930 = vperm.xlu0 %929, %v853
        %v931 = vpop.permute.xlu0 %930
        %934 = vset.pattern.permute.xlu0 0
        %935 = vperm.xlu0 %934, %v856
        %v936 = vpop.permute.xlu0 %935
        %v938 = vperm.slane %v788, 0
        %v939 = vadd.f32 %v861, %v938
        %v940 = vadd.f32 %v866, %v938
        %v941 = vadd.f32 %v871, %v938
        %v942 = vadd.f32 %v876, %v938
        %v943 = vadd.f32 %v881, %v938
        %v944 = vadd.f32 %v886, %v938
        %v945 = vadd.f32 %v891, %v938
        %v946 = vadd.f32 %v896, %v938
        %v947 = vadd.f32 %v901, %v938
        %v948 = vadd.f32 %v906, %v938
        %v949 = vadd.f32 %v911, %v938
        %v950 = vadd.f32 %v916, %v938
        %v951 = vadd.f32 %v921, %v938
        %v952 = vadd.f32 %v926, %v938
        %v953 = vadd.f32 %v931, %v938
        %v954 = vadd.f32 %v936, %v938
        %vm955 = vcmp.gt.f32.partialorder %v939, 0.0
        %vm956 = vcmp.gt.f32.partialorder %v940, 0.0
        %vm957 = vcmp.gt.f32.partialorder %v941, 0.0
        %vm958 = vcmp.gt.f32.partialorder %v942, 0.0
        %vm959 = vcmp.gt.f32.partialorder %v943, 0.0
        %vm960 = vcmp.gt.f32.partialorder %v944, 0.0
        %vm961 = vcmp.gt.f32.partialorder %v945, 0.0
        %vm962 = vcmp.gt.f32.partialorder %v946, 0.0
        %vm963 = vcmp.gt.f32.partialorder %v947, 0.0
        %vm964 = vcmp.gt.f32.partialorder %v948, 0.0
        %vm965 = vcmp.gt.f32.partialorder %v949, 0.0
        %vm966 = vcmp.gt.f32.partialorder %v950, 0.0
        %vm967 = vcmp.gt.f32.partialorder %v951, 0.0
        %vm968 = vcmp.gt.f32.partialorder %v952, 0.0
        %vm969 = vcmp.gt.f32.partialorder %v953, 0.0
        %vm970 = vcmp.gt.f32.partialorder %v954, 0.0
        %v971 = vmul.f32 %v939, 0.2
        %v972 = vmul.f32 %v940, 0.2
        %v973 = vmul.f32 %v941, 0.2
        %v974 = vmul.f32 %v942, 0.2
        %v975 = vmul.f32 %v943, 0.2
        %v976 = vmul.f32 %v944, 0.2
        %v977 = vmul.f32 %v945, 0.2
        %v978 = vmul.f32 %v946, 0.2
        %v979 = vmul.f32 %v947, 0.2
        %v980 = vmul.f32 %v948, 0.2
        %v981 = vmul.f32 %v949, 0.2
        %v982 = vmul.f32 %v950, 0.2
        %v983 = vmul.f32 %v951, 0.2
        %v984 = vmul.f32 %v952, 0.2
        %v985 = vmul.f32 %v953, 0.2
        %v986 = vmul.f32 %v954, 0.2
        %v987 = vsel %vm955, %v939, %v971
        %v988 = vsel %vm956, %v940, %v972
        %v989 = vsel %vm957, %v941, %v973
        %v990 = vsel %vm958, %v942, %v974
        %v991 = vsel %vm959, %v943, %v975
        %v992 = vsel %vm960, %v944, %v976
        %v993 = vsel %vm961, %v945, %v977
        %v994 = vsel %vm962, %v946, %v978
        %v995 = vsel %vm963, %v947, %v979
        %v996 = vsel %vm964, %v948, %v980
        %v997 = vsel %vm965, %v949, %v981
        %v998 = vsel %vm966, %v950, %v982
        %v999 = vsel %vm967, %v951, %v983
        %v1000 = vsel %vm968, %v952, %v984
        %v1001 = vsel %vm969, %v953, %v985
        %v1002 = vsel %vm970, %v954, %v986
        %v1003 = vadd.f32 %v987, %v565
        %v1004 = vadd.f32 %v988, %v566
        %v1005 = vadd.f32 %v989, %v567
        %v1006 = vadd.f32 %v990, %v568
        %v1007 = vadd.f32 %v991, %v569
        %v1008 = vadd.f32 %v992, %v570
        %v1009 = vadd.f32 %v993, %v571
        %v1010 = vadd.f32 %v994, %v572
        %v1011 = vadd.f32 %v995, %v573
        %v1012 = vadd.f32 %v996, %v574
        %v1013 = vadd.f32 %v997, %v575
        %v1014 = vadd.f32 %v998, %v576
        %v1015 = vadd.f32 %v999, %v577
        %v1016 = vadd.f32 %v1000, %v578
        %v1017 = vadd.f32 %v1001, %v579
        %v1018 = vadd.f32 %v1002, %v580
        %1019 = vmax.xlane.f32.xlu0 %v1003
        %v1020 = vpop.xlane.xlu0 %1019
        %1021 = vmax.xlane.f32.xlu0 %v1004
        %v1022 = vpop.xlane.xlu0 %1021
        %1023 = vmax.xlane.f32.xlu0 %v1005
        %v1024 = vpop.xlane.xlu0 %1023
        %1025 = vmax.xlane.f32.xlu0 %v1006
        %v1026 = vpop.xlane.xlu0 %1025
        %1027 = vmax.xlane.f32.xlu0 %v1007
        %v1028 = vpop.xlane.xlu0 %1027
        %1029 = vmax.xlane.f32.xlu0 %v1008
        %v1030 = vpop.xlane.xlu0 %1029
        %1031 = vmax.xlane.f32.xlu0 %v1009
        %v1032 = vpop.xlane.xlu0 %1031
        %1033 = vmax.xlane.f32.xlu0 %v1010
        %v1034 = vpop.xlane.xlu0 %1033
        %1035 = vmax.xlane.f32.xlu0 %v1011
        %v1036 = vpop.xlane.xlu0 %1035
        %1037 = vmax.xlane.f32.xlu0 %v1012
        %v1038 = vpop.xlane.xlu0 %1037
        %1039 = vmax.xlane.f32.xlu0 %v1013
        %v1040 = vpop.xlane.xlu0 %1039
        %1041 = vmax.xlane.f32.xlu0 %v1014
        %v1042 = vpop.xlane.xlu0 %1041
        %1043 = vmax.xlane.f32.xlu0 %v1015
        %v1044 = vpop.xlane.xlu0 %1043
        %1045 = vmax.xlane.f32.xlu0 %v1016
        %v1046 = vpop.xlane.xlu0 %1045
        %1047 = vmax.xlane.f32.xlu0 %v1017
        %v1048 = vpop.xlane.xlu0 %1047
        %1049 = vmax.xlane.f32.xlu0 %v1018
        %v1050 = vpop.xlane.xlu0 %1049
        %v1051 = vsub.f32 %v1003, %v1020
        %v1052 = vsub.f32 %v1004, %v1022
        %v1053 = vsub.f32 %v1005, %v1024
        %v1054 = vsub.f32 %v1006, %v1026
        %v1055 = vsub.f32 %v1007, %v1028
        %v1056 = vsub.f32 %v1008, %v1030
        %v1057 = vsub.f32 %v1009, %v1032
        %v1058 = vsub.f32 %v1010, %v1034
        %v1059 = vsub.f32 %v1011, %v1036
        %v1060 = vsub.f32 %v1012, %v1038
        %v1061 = vsub.f32 %v1013, %v1040
        %v1062 = vsub.f32 %v1014, %v1042
        %v1063 = vsub.f32 %v1015, %v1044
        %v1064 = vsub.f32 %v1016, %v1046
        %v1065 = vsub.f32 %v1017, %v1048
        %v1066 = vsub.f32 %v1018, %v1050
        %v1067 = vmul.f32 %v1051, 1.442695
        %v1068 = vpow.pop %v1067
        %v1069 = vmul.f32 %v1052, 1.442695
        %v1070 = vpow.pop %v1069
        %v1071 = vmul.f32 %v1053, 1.442695
        %v1072 = vpow.pop %v1071
        %v1073 = vmul.f32 %v1054, 1.442695
        %v1074 = vpow.pop %v1073
        %v1075 = vmul.f32 %v1055, 1.442695
        %v1076 = vpow.pop %v1075
        %v1077 = vmul.f32 %v1056, 1.442695
        %v1078 = vpow.pop %v1077
        %v1079 = vmul.f32 %v1057, 1.442695
        %v1080 = vpow.pop %v1079
        %v1081 = vmul.f32 %v1058, 1.442695
        %v1082 = vpow.pop %v1081
        %v1083 = vmul.f32 %v1059, 1.442695
        %v1084 = vpow.pop %v1083
        %v1085 = vmul.f32 %v1060, 1.442695
        %v1086 = vpow.pop %v1085
        %v1087 = vmul.f32 %v1061, 1.442695
        %v1088 = vpow.pop %v1087
        %v1089 = vmul.f32 %v1062, 1.442695
        %v1090 = vpow.pop %v1089
        %v1091 = vmul.f32 %v1063, 1.442695
        %v1092 = vpow.pop %v1091
        %v1093 = vmul.f32 %v1064, 1.442695
        %v1094 = vpow.pop %v1093
        %v1095 = vmul.f32 %v1065, 1.442695
        %v1096 = vpow.pop %v1095
        %v1097 = vmul.f32 %v1066, 1.442695
        %v1098 = vpow.pop %v1097
        %1099 = vadd.xlane.f32.xlu0 %v1068
        %v1100 = vpop.xlane.xlu0 %1099
        %1101 = vadd.xlane.f32.xlu0 %v1070
        %v1102 = vpop.xlane.xlu0 %1101
        %1103 = vadd.xlane.f32.xlu0 %v1072
        %v1104 = vpop.xlane.xlu0 %1103
        %1105 = vadd.xlane.f32.xlu0 %v1074
        %v1106 = vpop.xlane.xlu0 %1105
        %1107 = vadd.xlane.f32.xlu0 %v1076
        %v1108 = vpop.xlane.xlu0 %1107
        %1109 = vadd.xlane.f32.xlu0 %v1078
        %v1110 = vpop.xlane.xlu0 %1109
        %1111 = vadd.xlane.f32.xlu0 %v1080
        %v1112 = vpop.xlane.xlu0 %1111
        %1113 = vadd.xlane.f32.xlu0 %v1082
        %v1114 = vpop.xlane.xlu0 %1113
        %1115 = vadd.xlane.f32.xlu0 %v1084
        %v1116 = vpop.xlane.xlu0 %1115
        %1117 = vadd.xlane.f32.xlu0 %v1086
        %v1118 = vpop.xlane.xlu0 %1117
        %1119 = vadd.xlane.f32.xlu0 %v1088
        %v1120 = vpop.xlane.xlu0 %1119
        %1121 = vadd.xlane.f32.xlu0 %v1090
        %v1122 = vpop.xlane.xlu0 %1121
        %1123 = vadd.xlane.f32.xlu0 %v1092
        %v1124 = vpop.xlane.xlu0 %1123
        %1125 = vadd.xlane.f32.xlu0 %v1094
        %v1126 = vpop.xlane.xlu0 %1125
        %1127 = vadd.xlane.f32.xlu0 %v1096
        %v1128 = vpop.xlane.xlu0 %1127
        %1129 = vadd.xlane.f32.xlu0 %v1098
        %v1130 = vpop.xlane.xlu0 %1129
        %v1131 = vrcp.pop %v1100
        %v1132 = vrcp.pop %v1102
        %v1133 = vrcp.pop %v1104
        %v1134 = vrcp.pop %v1106
        %v1135 = vrcp.pop %v1108
        %v1136 = vrcp.pop %v1110
        %v1137 = vrcp.pop %v1112
        %v1138 = vrcp.pop %v1114
        %v1139 = vrcp.pop %v1116
        %v1140 = vrcp.pop %v1118
        %v1141 = vrcp.pop %v1120
        %v1142 = vrcp.pop %v1122
        %v1143 = vrcp.pop %v1124
        %v1144 = vrcp.pop %v1126
        %v1145 = vrcp.pop %v1128
        %v1146 = vrcp.pop %v1130
        %v1147 = vmul.f32 %v1068, %v1131
        %v1148 = vmul.f32 %v1070, %v1132
        %v1149 = vmul.f32 %v1072, %v1133
        %v1150 = vmul.f32 %v1074, %v1134
        %v1151 = vmul.f32 %v1076, %v1135
        %v1152 = vmul.f32 %v1078, %v1136
        %v1153 = vmul.f32 %v1080, %v1137
        %v1154 = vmul.f32 %v1082, %v1138
        %v1155 = vmul.f32 %v1084, %v1139
        %v1156 = vmul.f32 %v1086, %v1140
        %v1157 = vmul.f32 %v1088, %v1141
        %v1158 = vmul.f32 %v1090, %v1142
        %v1159 = vmul.f32 %v1092, %v1143
        %v1160 = vmul.f32 %v1094, %v1144
        %v1161 = vmul.f32 %v1096, %v1145
        %v1162 = vmul.f32 %v1098, %v1146
        %1163 = vmatpush.msra.mxu0 %v714
        %1164 = vmatpush.msra.mxu0 %v711
        %1165 = vmatpush.msra.mxu0 %v708
        %1166 = vmatpush.msra.mxu0 %v705
        %1167 = vmatpush.msra.mxu0 %v702
        %1168 = vmatpush.msra.mxu0 %v699
        %1169 = vmatpush.msra.mxu0 %v696
        %1170 = vmatpush.msra.mxu0 %v693
        %1171 = vmatpush.msra.mxu0 %v690
        %1172 = vmatpush.msra.mxu0 %v687
        %1173 = vmatpush.msra.mxu0 %v684
        %1174 = vmatpush.msra.mxu0 %v681
        %1175 = vmatpush.msra.mxu0 %v678
        %1176 = vmatpush.msra.mxu0 %v675
        %1177 = vmatpush.msra.mxu0 %v672
        %1178 = vmatpush.msra.mxu0 %v669
        %1179 = vmatmul.f32.gmra.mxu0 %v1147
        %v1180 = vpop.f32.mrf.mxu0
        %v1181 = vadd.f32 0.0, %v1180
        %1182 = vmatmul.f32.gmra.mxu0 %v1148
        %v1183 = vpop.f32.mrf.mxu0
        %v1184 = vadd.f32 0.0, %v1183
        %1185 = vmatmul.f32.gmra.mxu0 %v1149
        %v1186 = vpop.f32.mrf.mxu0
        %v1187 = vadd.f32 0.0, %v1186
        %1188 = vmatmul.f32.gmra.mxu0 %v1150
        %v1189 = vpop.f32.mrf.mxu0
        %v1190 = vadd.f32 0.0, %v1189
        %1191 = vmatmul.f32.gmra.mxu0 %v1151
        %v1192 = vpop.f32.mrf.mxu0
        %v1193 = vadd.f32 0.0, %v1192
        %1194 = vmatmul.f32.gmra.mxu0 %v1152
        %v1195 = vpop.f32.mrf.mxu0
        %v1196 = vadd.f32 0.0, %v1195
        %1197 = vmatmul.f32.gmra.mxu0 %v1153
        %v1198 = vpop.f32.mrf.mxu0
        %v1199 = vadd.f32 0.0, %v1198
        %1200 = vmatmul.f32.gmra.mxu0 %v1154
        %v1201 = vpop.f32.mrf.mxu0
        %v1202 = vadd.f32 0.0, %v1201
        %1203 = vmatmul.f32.gmra.mxu0 %v1155
        %v1204 = vpop.f32.mrf.mxu0
        %v1205 = vadd.f32 0.0, %v1204
        %1206 = vmatmul.f32.gmra.mxu0 %v1156
        %v1207 = vpop.f32.mrf.mxu0
        %v1208 = vadd.f32 0.0, %v1207
        %1209 = vmatmul.f32.gmra.mxu0 %v1157
        %v1210 = vpop.f32.mrf.mxu0
        %v1211 = vadd.f32 0.0, %v1210
        %1212 = vmatmul.f32.gmra.mxu0 %v1158
        %v1213 = vpop.f32.mrf.mxu0
        %v1214 = vadd.f32 0.0, %v1213
        %1215 = vmatmul.f32.gmra.mxu0 %v1159
        %v1216 = vpop.f32.mrf.mxu0
        %v1217 = vadd.f32 0.0, %v1216
        %1218 = vmatmul.f32.gmra.mxu0 %v1160
        %v1219 = vpop.f32.mrf.mxu0
        %v1220 = vadd.f32 0.0, %v1219
        %1221 = vmatmul.f32.gmra.mxu0 %v1161
        %v1222 = vpop.f32.mrf.mxu0
        %v1223 = vadd.f32 0.0, %v1222
        %1224 = vmatmul.f32.gmra.mxu0 %v1162
        %v1225 = vpop.f32.mrf.mxu0
        %v1226 = vadd.f32 0.0, %v1225
        %1227 = vdwg.mxu0
        %1228 = vset.pattern.permute.xlu0 1
        %1229 = vperm.xlu0 %1228, %v811
        %v1230 = vpop.permute.xlu0 %1229
        %1232 = vset.pattern.permute.xlu0 1
        %1233 = vperm.xlu0 %1232, %v814
        %v1234 = vpop.permute.xlu0 %1233
        %1236 = vset.pattern.permute.xlu0 1
        %1237 = vperm.xlu0 %1236, %v817
        %v1238 = vpop.permute.xlu0 %1237
        %1240 = vset.pattern.permute.xlu0 1
        %1241 = vperm.xlu0 %1240, %v820
        %v1242 = vpop.permute.xlu0 %1241
        %1244 = vset.pattern.permute.xlu0 1
        %1245 = vperm.xlu0 %1244, %v823
        %v1246 = vpop.permute.xlu0 %1245
        %1248 = vset.pattern.permute.xlu0 1
        %1249 = vperm.xlu0 %1248, %v826
        %v1250 = vpop.permute.xlu0 %1249
        %1252 = vset.pattern.permute.xlu0 1
        %1253 = vperm.xlu0 %1252, %v829
        %v1254 = vpop.permute.xlu0 %1253
        %1256 = vset.pattern.permute.xlu0 1
        %1257 = vperm.xlu0 %1256, %v832
        %v1258 = vpop.permute.xlu0 %1257
        %1260 = vset.pattern.permute.xlu0 1
        %1261 = vperm.xlu0 %1260, %v835
        %v1262 = vpop.permute.xlu0 %1261
        %1264 = vset.pattern.permute.xlu0 1
        %1265 = vperm.xlu0 %1264, %v838
        %v1266 = vpop.permute.xlu0 %1265
        %1268 = vset.pattern.permute.xlu0 1
        %1269 = vperm.xlu0 %1268, %v841
        %v1270 = vpop.permute.xlu0 %1269
        %1272 = vset.pattern.permute.xlu0 1
        %1273 = vperm.xlu0 %1272, %v844
        %v1274 = vpop.permute.xlu0 %1273
        %1276 = vset.pattern.permute.xlu0 1
        %1277 = vperm.xlu0 %1276, %v847
        %v1278 = vpop.permute.xlu0 %1277
        %1280 = vset.pattern.permute.xlu0 1
        %1281 = vperm.xlu0 %1280, %v850
        %v1282 = vpop.permute.xlu0 %1281
        %1284 = vset.pattern.permute.xlu0 1
        %1285 = vperm.xlu0 %1284, %v853
        %v1286 = vpop.permute.xlu0 %1285
        %1288 = vset.pattern.permute.xlu0 1
        %1289 = vperm.xlu0 %1288, %v856
        %v1290 = vpop.permute.xlu0 %1289
        %v1292 = vperm.slane %v788, 1
        %v1293 = vadd.f32 %v1230, %v1292
        %v1294 = vadd.f32 %v1234, %v1292
        %v1295 = vadd.f32 %v1238, %v1292
        %v1296 = vadd.f32 %v1242, %v1292
        %v1297 = vadd.f32 %v1246, %v1292
        %v1298 = vadd.f32 %v1250, %v1292
        %v1299 = vadd.f32 %v1254, %v1292
        %v1300 = vadd.f32 %v1258, %v1292
        %v1301 = vadd.f32 %v1262, %v1292
        %v1302 = vadd.f32 %v1266, %v1292
        %v1303 = vadd.f32 %v1270, %v1292
        %v1304 = vadd.f32 %v1274, %v1292
        %v1305 = vadd.f32 %v1278, %v1292
        %v1306 = vadd.f32 %v1282, %v1292
        %v1307 = vadd.f32 %v1286, %v1292
        %v1308 = vadd.f32 %v1290, %v1292
        %vm1309 = vcmp.gt.f32.partialorder %v1293, 0.0
        %vm1310 = vcmp.gt.f32.partialorder %v1294, 0.0
        %vm1311 = vcmp.gt.f32.partialorder %v1295, 0.0
        %vm1312 = vcmp.gt.f32.partialorder %v1296, 0.0
        %vm1313 = vcmp.gt.f32.partialorder %v1297, 0.0
        %vm1314 = vcmp.gt.f32.partialorder %v1298, 0.0
        %vm1315 = vcmp.gt.f32.partialorder %v1299, 0.0
        %vm1316 = vcmp.gt.f32.partialorder %v1300, 0.0
        %vm1317 = vcmp.gt.f32.partialorder %v1301, 0.0
        %vm1318 = vcmp.gt.f32.partialorder %v1302, 0.0
        %vm1319 = vcmp.gt.f32.partialorder %v1303, 0.0
        %vm1320 = vcmp.gt.f32.partialorder %v1304, 0.0
        %vm1321 = vcmp.gt.f32.partialorder %v1305, 0.0
        %vm1322 = vcmp.gt.f32.partialorder %v1306, 0.0
        %vm1323 = vcmp.gt.f32.partialorder %v1307, 0.0
        %vm1324 = vcmp.gt.f32.partialorder %v1308, 0.0
        %v1325 = vmul.f32 %v1293, 0.2
        %v1326 = vmul.f32 %v1294, 0.2
        %v1327 = vmul.f32 %v1295, 0.2
        %v1328 = vmul.f32 %v1296, 0.2
        %v1329 = vmul.f32 %v1297, 0.2
        %v1330 = vmul.f32 %v1298, 0.2
        %v1331 = vmul.f32 %v1299, 0.2
        %v1332 = vmul.f32 %v1300, 0.2
        %v1333 = vmul.f32 %v1301, 0.2
        %v1334 = vmul.f32 %v1302, 0.2
        %v1335 = vmul.f32 %v1303, 0.2
        %v1336 = vmul.f32 %v1304, 0.2
        %v1337 = vmul.f32 %v1305, 0.2
        %v1338 = vmul.f32 %v1306, 0.2
        %v1339 = vmul.f32 %v1307, 0.2
        %v1340 = vmul.f32 %v1308, 0.2
        %v1341 = vsel %vm1309, %v1293, %v1325
        %v1342 = vsel %vm1310, %v1294, %v1326
        %v1343 = vsel %vm1311, %v1295, %v1327
        %v1344 = vsel %vm1312, %v1296, %v1328
        %v1345 = vsel %vm1313, %v1297, %v1329
        %v1346 = vsel %vm1314, %v1298, %v1330
        %v1347 = vsel %vm1315, %v1299, %v1331
        %v1348 = vsel %vm1316, %v1300, %v1332
        %v1349 = vsel %vm1317, %v1301, %v1333
        %v1350 = vsel %vm1318, %v1302, %v1334
        %v1351 = vsel %vm1319, %v1303, %v1335
        %v1352 = vsel %vm1320, %v1304, %v1336
        %v1353 = vsel %vm1321, %v1305, %v1337
        %v1354 = vsel %vm1322, %v1306, %v1338
        %v1355 = vsel %vm1323, %v1307, %v1339
        %v1356 = vsel %vm1324, %v1308, %v1340
        %v1357 = vadd.f32 %v1341, %v565
        %v1358 = vadd.f32 %v1342, %v566
        %v1359 = vadd.f32 %v1343, %v567
        %v1360 = vadd.f32 %v1344, %v568
        %v1361 = vadd.f32 %v1345, %v569
        %v1362 = vadd.f32 %v1346, %v570
        %v1363 = vadd.f32 %v1347, %v571
        %v1364 = vadd.f32 %v1348, %v572
        %v1365 = vadd.f32 %v1349, %v573
        %v1366 = vadd.f32 %v1350, %v574
        %v1367 = vadd.f32 %v1351, %v575
        %v1368 = vadd.f32 %v1352, %v576
        %v1369 = vadd.f32 %v1353, %v577
        %v1370 = vadd.f32 %v1354, %v578
        %v1371 = vadd.f32 %v1355, %v579
        %v1372 = vadd.f32 %v1356, %v580
        %1373 = vmax.xlane.f32.xlu0 %v1357
        %v1374 = vpop.xlane.xlu0 %1373
        %1375 = vmax.xlane.f32.xlu0 %v1358
        %v1376 = vpop.xlane.xlu0 %1375
        %1377 = vmax.xlane.f32.xlu0 %v1359
        %v1378 = vpop.xlane.xlu0 %1377
        %1379 = vmax.xlane.f32.xlu0 %v1360
        %v1380 = vpop.xlane.xlu0 %1379
        %1381 = vmax.xlane.f32.xlu0 %v1361
        %v1382 = vpop.xlane.xlu0 %1381
        %1383 = vmax.xlane.f32.xlu0 %v1362
        %v1384 = vpop.xlane.xlu0 %1383
        %1385 = vmax.xlane.f32.xlu0 %v1363
        %v1386 = vpop.xlane.xlu0 %1385
        %1387 = vmax.xlane.f32.xlu0 %v1364
        %v1388 = vpop.xlane.xlu0 %1387
        %1389 = vmax.xlane.f32.xlu0 %v1365
        %v1390 = vpop.xlane.xlu0 %1389
        %1391 = vmax.xlane.f32.xlu0 %v1366
        %v1392 = vpop.xlane.xlu0 %1391
        %1393 = vmax.xlane.f32.xlu0 %v1367
        %v1394 = vpop.xlane.xlu0 %1393
        %1395 = vmax.xlane.f32.xlu0 %v1368
        %v1396 = vpop.xlane.xlu0 %1395
        %1397 = vmax.xlane.f32.xlu0 %v1369
        %v1398 = vpop.xlane.xlu0 %1397
        %1399 = vmax.xlane.f32.xlu0 %v1370
        %v1400 = vpop.xlane.xlu0 %1399
        %1401 = vmax.xlane.f32.xlu0 %v1371
        %v1402 = vpop.xlane.xlu0 %1401
        %1403 = vmax.xlane.f32.xlu0 %v1372
        %v1404 = vpop.xlane.xlu0 %1403
        %v1405 = vsub.f32 %v1357, %v1374
        %v1406 = vsub.f32 %v1358, %v1376
        %v1407 = vsub.f32 %v1359, %v1378
        %v1408 = vsub.f32 %v1360, %v1380
        %v1409 = vsub.f32 %v1361, %v1382
        %v1410 = vsub.f32 %v1362, %v1384
        %v1411 = vsub.f32 %v1363, %v1386
        %v1412 = vsub.f32 %v1364, %v1388
        %v1413 = vsub.f32 %v1365, %v1390
        %v1414 = vsub.f32 %v1366, %v1392
        %v1415 = vsub.f32 %v1367, %v1394
        %v1416 = vsub.f32 %v1368, %v1396
        %v1417 = vsub.f32 %v1369, %v1398
        %v1418 = vsub.f32 %v1370, %v1400
        %v1419 = vsub.f32 %v1371, %v1402
        %v1420 = vsub.f32 %v1372, %v1404
        %v1421 = vmul.f32 %v1405, 1.442695
        %v1422 = vpow.pop %v1421
        %v1423 = vmul.f32 %v1406, 1.442695
        %v1424 = vpow.pop %v1423
        %v1425 = vmul.f32 %v1407, 1.442695
        %v1426 = vpow.pop %v1425
        %v1427 = vmul.f32 %v1408, 1.442695
        %v1428 = vpow.pop %v1427
        %v1429 = vmul.f32 %v1409, 1.442695
        %v1430 = vpow.pop %v1429
        %v1431 = vmul.f32 %v1410, 1.442695
        %v1432 = vpow.pop %v1431
        %v1433 = vmul.f32 %v1411, 1.442695
        %v1434 = vpow.pop %v1433
        %v1435 = vmul.f32 %v1412, 1.442695
        %v1436 = vpow.pop %v1435
        %v1437 = vmul.f32 %v1413, 1.442695
        %v1438 = vpow.pop %v1437
        %v1439 = vmul.f32 %v1414, 1.442695
        %v1440 = vpow.pop %v1439
        %v1441 = vmul.f32 %v1415, 1.442695
        %v1442 = vpow.pop %v1441
        %v1443 = vmul.f32 %v1416, 1.442695
        %v1444 = vpow.pop %v1443
        %v1445 = vmul.f32 %v1417, 1.442695
        %v1446 = vpow.pop %v1445
        %v1447 = vmul.f32 %v1418, 1.442695
        %v1448 = vpow.pop %v1447
        %v1449 = vmul.f32 %v1419, 1.442695
        %v1450 = vpow.pop %v1449
        %v1451 = vmul.f32 %v1420, 1.442695
        %v1452 = vpow.pop %v1451
        %1453 = vadd.xlane.f32.xlu0 %v1422
        %v1454 = vpop.xlane.xlu0 %1453
        %1455 = vadd.xlane.f32.xlu0 %v1424
        %v1456 = vpop.xlane.xlu0 %1455
        %1457 = vadd.xlane.f32.xlu0 %v1426
        %v1458 = vpop.xlane.xlu0 %1457
        %1459 = vadd.xlane.f32.xlu0 %v1428
        %v1460 = vpop.xlane.xlu0 %1459
        %1461 = vadd.xlane.f32.xlu0 %v1430
        %v1462 = vpop.xlane.xlu0 %1461
        %1463 = vadd.xlane.f32.xlu0 %v1432
        %v1464 = vpop.xlane.xlu0 %1463
        %1465 = vadd.xlane.f32.xlu0 %v1434
        %v1466 = vpop.xlane.xlu0 %1465
        %1467 = vadd.xlane.f32.xlu0 %v1436
        %v1468 = vpop.xlane.xlu0 %1467
        %1469 = vadd.xlane.f32.xlu0 %v1438
        %v1470 = vpop.xlane.xlu0 %1469
        %1471 = vadd.xlane.f32.xlu0 %v1440
        %v1472 = vpop.xlane.xlu0 %1471
        %1473 = vadd.xlane.f32.xlu0 %v1442
        %v1474 = vpop.xlane.xlu0 %1473
        %1475 = vadd.xlane.f32.xlu0 %v1444
        %v1476 = vpop.xlane.xlu0 %1475
        %1477 = vadd.xlane.f32.xlu0 %v1446
        %v1478 = vpop.xlane.xlu0 %1477
        %1479 = vadd.xlane.f32.xlu0 %v1448
        %v1480 = vpop.xlane.xlu0 %1479
        %1481 = vadd.xlane.f32.xlu0 %v1450
        %v1482 = vpop.xlane.xlu0 %1481
        %1483 = vadd.xlane.f32.xlu0 %v1452
        %v1484 = vpop.xlane.xlu0 %1483
        %v1485 = vrcp.pop %v1454
        %v1486 = vrcp.pop %v1456
        %v1487 = vrcp.pop %v1458
        %v1488 = vrcp.pop %v1460
        %v1489 = vrcp.pop %v1462
        %v1490 = vrcp.pop %v1464
        %v1491 = vrcp.pop %v1466
        %v1492 = vrcp.pop %v1468
        %v1493 = vrcp.pop %v1470
        %v1494 = vrcp.pop %v1472
        %v1495 = vrcp.pop %v1474
        %v1496 = vrcp.pop %v1476
        %v1497 = vrcp.pop %v1478
        %v1498 = vrcp.pop %v1480
        %v1499 = vrcp.pop %v1482
        %v1500 = vrcp.pop %v1484
        %v1501 = vmul.f32 %v1422, %v1485
        %v1502 = vmul.f32 %v1424, %v1486
        %v1503 = vmul.f32 %v1426, %v1487
        %v1504 = vmul.f32 %v1428, %v1488
        %v1505 = vmul.f32 %v1430, %v1489
        %v1506 = vmul.f32 %v1432, %v1490
        %v1507 = vmul.f32 %v1434, %v1491
        %v1508 = vmul.f32 %v1436, %v1492
        %v1509 = vmul.f32 %v1438, %v1493
        %v1510 = vmul.f32 %v1440, %v1494
        %v1511 = vmul.f32 %v1442, %v1495
        %v1512 = vmul.f32 %v1444, %v1496
        %v1513 = vmul.f32 %v1446, %v1497
        %v1514 = vmul.f32 %v1448, %v1498
        %v1515 = vmul.f32 %v1450, %v1499
        %v1516 = vmul.f32 %v1452, %v1500
        %1517 = vrot.lane.b32.xlu0 %v669, 120
        %v1518 = vpop.permute.xlu0 %1517
        %1519 = vrot.lane.b32.xlu0 %v672, 120
        %v1520 = vpop.permute.xlu0 %1519
        %1521 = vrot.lane.b32.xlu0 %v675, 120
        %v1522 = vpop.permute.xlu0 %1521
        %1523 = vrot.lane.b32.xlu0 %v678, 120
        %v1524 = vpop.permute.xlu0 %1523
        %1525 = vrot.lane.b32.xlu0 %v681, 120
        %v1526 = vpop.permute.xlu0 %1525
        %1527 = vrot.lane.b32.xlu0 %v684, 120
        %v1528 = vpop.permute.xlu0 %1527
        %1529 = vrot.lane.b32.xlu0 %v687, 120
        %v1530 = vpop.permute.xlu0 %1529
        %1531 = vrot.lane.b32.xlu0 %v690, 120
        %v1532 = vpop.permute.xlu0 %1531
        %1533 = vrot.lane.b32.xlu0 %v693, 120
        %v1534 = vpop.permute.xlu0 %1533
        %1535 = vrot.lane.b32.xlu0 %v696, 120
        %v1536 = vpop.permute.xlu0 %1535
        %1537 = vrot.lane.b32.xlu0 %v699, 120
        %v1538 = vpop.permute.xlu0 %1537
        %1539 = vrot.lane.b32.xlu0 %v702, 120
        %v1540 = vpop.permute.xlu0 %1539
        %1541 = vrot.lane.b32.xlu0 %v705, 120
        %v1542 = vpop.permute.xlu0 %1541
        %1543 = vrot.lane.b32.xlu0 %v708, 120
        %v1544 = vpop.permute.xlu0 %1543
        %1545 = vrot.lane.b32.xlu0 %v711, 120
        %v1546 = vpop.permute.xlu0 %1545
        %1547 = vrot.lane.b32.xlu0 %v714, 120
        %v1548 = vpop.permute.xlu0 %1547
        %1565 = vmatpush.msra.mxu0 %v1548
        %1566 = vmatpush.msra.mxu0 %v1546
        %1567 = vmatpush.msra.mxu0 %v1544
        %1568 = vmatpush.msra.mxu0 %v1542
        %1569 = vmatpush.msra.mxu0 %v1540
        %1570 = vmatpush.msra.mxu0 %v1538
        %1571 = vmatpush.msra.mxu0 %v1536
        %1572 = vmatpush.msra.mxu0 %v1534
        %1573 = vmatpush.msra.mxu0 %v1532
        %1574 = vmatpush.msra.mxu0 %v1530
        %1575 = vmatpush.msra.mxu0 %v1528
        %1576 = vmatpush.msra.mxu0 %v1526
        %1577 = vmatpush.msra.mxu0 %v1524
        %1578 = vmatpush.msra.mxu0 %v1522
        %1579 = vmatpush.msra.mxu0 %v1520
        %1580 = vmatpush.msra.mxu0 %v1518
        %1581 = vmatmul.f32.gmra.mxu0 %v1501
        %v1582 = vpop.f32.mrf.mxu0
        %v1583 = vadd.f32 0.0, %v1582
        %1584 = vmatmul.f32.gmra.mxu0 %v1502
        %v1585 = vpop.f32.mrf.mxu0
        %v1586 = vadd.f32 0.0, %v1585
        %1587 = vmatmul.f32.gmra.mxu0 %v1503
        %v1588 = vpop.f32.mrf.mxu0
        %v1589 = vadd.f32 0.0, %v1588
        %1590 = vmatmul.f32.gmra.mxu0 %v1504
        %v1591 = vpop.f32.mrf.mxu0
        %v1592 = vadd.f32 0.0, %v1591
        %1593 = vmatmul.f32.gmra.mxu0 %v1505
        %v1594 = vpop.f32.mrf.mxu0
        %v1595 = vadd.f32 0.0, %v1594
        %1596 = vmatmul.f32.gmra.mxu0 %v1506
        %v1597 = vpop.f32.mrf.mxu0
        %v1598 = vadd.f32 0.0, %v1597
        %1599 = vmatmul.f32.gmra.mxu0 %v1507
        %v1600 = vpop.f32.mrf.mxu0
        %v1601 = vadd.f32 0.0, %v1600
        %1602 = vmatmul.f32.gmra.mxu0 %v1508
        %v1603 = vpop.f32.mrf.mxu0
        %v1604 = vadd.f32 0.0, %v1603
        %1605 = vmatmul.f32.gmra.mxu0 %v1509
        %v1606 = vpop.f32.mrf.mxu0
        %v1607 = vadd.f32 0.0, %v1606
        %1608 = vmatmul.f32.gmra.mxu0 %v1510
        %v1609 = vpop.f32.mrf.mxu0
        %v1610 = vadd.f32 0.0, %v1609
        %1611 = vmatmul.f32.gmra.mxu0 %v1511
        %v1612 = vpop.f32.mrf.mxu0
        %v1613 = vadd.f32 0.0, %v1612
        %1614 = vmatmul.f32.gmra.mxu0 %v1512
        %v1615 = vpop.f32.mrf.mxu0
        %v1616 = vadd.f32 0.0, %v1615
        %1617 = vmatmul.f32.gmra.mxu0 %v1513
        %v1618 = vpop.f32.mrf.mxu0
        %v1619 = vadd.f32 0.0, %v1618
        %1620 = vmatmul.f32.gmra.mxu0 %v1514
        %v1621 = vpop.f32.mrf.mxu0
        %v1622 = vadd.f32 0.0, %v1621
        %1623 = vmatmul.f32.gmra.mxu0 %v1515
        %v1624 = vpop.f32.mrf.mxu0
        %v1625 = vadd.f32 0.0, %v1624
        %1626 = vmatmul.f32.gmra.mxu0 %v1516
        %v1627 = vpop.f32.mrf.mxu0
        %v1628 = vadd.f32 0.0, %v1627
        %1629 = vdwg.mxu0
        %1630 = vset.pattern.permute.xlu0 2
        %1631 = vperm.xlu0 %1630, %v811
        %v1632 = vpop.permute.xlu0 %1631
        %1634 = vset.pattern.permute.xlu0 2
        %1635 = vperm.xlu0 %1634, %v814
        %v1636 = vpop.permute.xlu0 %1635
        %1638 = vset.pattern.permute.xlu0 2
        %1639 = vperm.xlu0 %1638, %v817
        %v1640 = vpop.permute.xlu0 %1639
        %1642 = vset.pattern.permute.xlu0 2
        %1643 = vperm.xlu0 %1642, %v820
        %v1644 = vpop.permute.xlu0 %1643
        %1646 = vset.pattern.permute.xlu0 2
        %1647 = vperm.xlu0 %1646, %v823
        %v1648 = vpop.permute.xlu0 %1647
        %1650 = vset.pattern.permute.xlu0 2
        %1651 = vperm.xlu0 %1650, %v826
        %v1652 = vpop.permute.xlu0 %1651
        %1654 = vset.pattern.permute.xlu0 2
        %1655 = vperm.xlu0 %1654, %v829
        %v1656 = vpop.permute.xlu0 %1655
        %1658 = vset.pattern.permute.xlu0 2
        %1659 = vperm.xlu0 %1658, %v832
        %v1660 = vpop.permute.xlu0 %1659
        %1662 = vset.pattern.permute.xlu0 2
        %1663 = vperm.xlu0 %1662, %v835
        %v1664 = vpop.permute.xlu0 %1663
        %1666 = vset.pattern.permute.xlu0 2
        %1667 = vperm.xlu0 %1666, %v838
        %v1668 = vpop.permute.xlu0 %1667
        %1670 = vset.pattern.permute.xlu0 2
        %1671 = vperm.xlu0 %1670, %v841
        %v1672 = vpop.permute.xlu0 %1671
        %1674 = vset.pattern.permute.xlu0 2
        %1675 = vperm.xlu0 %1674, %v844
        %v1676 = vpop.permute.xlu0 %1675
        %1678 = vset.pattern.permute.xlu0 2
        %1679 = vperm.xlu0 %1678, %v847
        %v1680 = vpop.permute.xlu0 %1679
        %1682 = vset.pattern.permute.xlu0 2
        %1683 = vperm.xlu0 %1682, %v850
        %v1684 = vpop.permute.xlu0 %1683
        %1686 = vset.pattern.permute.xlu0 2
        %1687 = vperm.xlu0 %1686, %v853
        %v1688 = vpop.permute.xlu0 %1687
        %1690 = vset.pattern.permute.xlu0 2
        %1691 = vperm.xlu0 %1690, %v856
        %v1692 = vpop.permute.xlu0 %1691
        %v1694 = vperm.slane %v788, 2
        %v1695 = vadd.f32 %v1632, %v1694
        %v1696 = vadd.f32 %v1636, %v1694
        %v1697 = vadd.f32 %v1640, %v1694
        %v1698 = vadd.f32 %v1644, %v1694
        %v1699 = vadd.f32 %v1648, %v1694
        %v1700 = vadd.f32 %v1652, %v1694
        %v1701 = vadd.f32 %v1656, %v1694
        %v1702 = vadd.f32 %v1660, %v1694
        %v1703 = vadd.f32 %v1664, %v1694
        %v1704 = vadd.f32 %v1668, %v1694
        %v1705 = vadd.f32 %v1672, %v1694
        %v1706 = vadd.f32 %v1676, %v1694
        %v1707 = vadd.f32 %v1680, %v1694
        %v1708 = vadd.f32 %v1684, %v1694
        %v1709 = vadd.f32 %v1688, %v1694
        %v1710 = vadd.f32 %v1692, %v1694
        %vm1711 = vcmp.gt.f32.partialorder %v1695, 0.0
        %vm1712 = vcmp.gt.f32.partialorder %v1696, 0.0
        %vm1713 = vcmp.gt.f32.partialorder %v1697, 0.0
        %vm1714 = vcmp.gt.f32.partialorder %v1698, 0.0
        %vm1715 = vcmp.gt.f32.partialorder %v1699, 0.0
        %vm1716 = vcmp.gt.f32.partialorder %v1700, 0.0
        %vm1717 = vcmp.gt.f32.partialorder %v1701, 0.0
        %vm1718 = vcmp.gt.f32.partialorder %v1702, 0.0
        %vm1719 = vcmp.gt.f32.partialorder %v1703, 0.0
        %vm1720 = vcmp.gt.f32.partialorder %v1704, 0.0
        %vm1721 = vcmp.gt.f32.partialorder %v1705, 0.0
        %vm1722 = vcmp.gt.f32.partialorder %v1706, 0.0
        %vm1723 = vcmp.gt.f32.partialorder %v1707, 0.0
        %vm1724 = vcmp.gt.f32.partialorder %v1708, 0.0
        %vm1725 = vcmp.gt.f32.partialorder %v1709, 0.0
        %vm1726 = vcmp.gt.f32.partialorder %v1710, 0.0
        %v1727 = vmul.f32 %v1695, 0.2
        %v1728 = vmul.f32 %v1696, 0.2
        %v1729 = vmul.f32 %v1697, 0.2
        %v1730 = vmul.f32 %v1698, 0.2
        %v1731 = vmul.f32 %v1699, 0.2
        %v1732 = vmul.f32 %v1700, 0.2
        %v1733 = vmul.f32 %v1701, 0.2
        %v1734 = vmul.f32 %v1702, 0.2
        %v1735 = vmul.f32 %v1703, 0.2
        %v1736 = vmul.f32 %v1704, 0.2
        %v1737 = vmul.f32 %v1705, 0.2
        %v1738 = vmul.f32 %v1706, 0.2
        %v1739 = vmul.f32 %v1707, 0.2
        %v1740 = vmul.f32 %v1708, 0.2
        %v1741 = vmul.f32 %v1709, 0.2
        %v1742 = vmul.f32 %v1710, 0.2
        %v1743 = vsel %vm1711, %v1695, %v1727
        %v1744 = vsel %vm1712, %v1696, %v1728
        %v1745 = vsel %vm1713, %v1697, %v1729
        %v1746 = vsel %vm1714, %v1698, %v1730
        %v1747 = vsel %vm1715, %v1699, %v1731
        %v1748 = vsel %vm1716, %v1700, %v1732
        %v1749 = vsel %vm1717, %v1701, %v1733
        %v1750 = vsel %vm1718, %v1702, %v1734
        %v1751 = vsel %vm1719, %v1703, %v1735
        %v1752 = vsel %vm1720, %v1704, %v1736
        %v1753 = vsel %vm1721, %v1705, %v1737
        %v1754 = vsel %vm1722, %v1706, %v1738
        %v1755 = vsel %vm1723, %v1707, %v1739
        %v1756 = vsel %vm1724, %v1708, %v1740
        %v1757 = vsel %vm1725, %v1709, %v1741
        %v1758 = vsel %vm1726, %v1710, %v1742
        %v1759 = vadd.f32 %v1743, %v581
        %v1760 = vadd.f32 %v1744, %v582
        %v1761 = vadd.f32 %v1745, %v583
        %v1762 = vadd.f32 %v1746, %v584
        %v1763 = vadd.f32 %v1747, %v585
        %v1764 = vadd.f32 %v1748, %v586
        %v1765 = vadd.f32 %v1749, %v587
        %v1766 = vadd.f32 %v1750, %v588
        %v1767 = vadd.f32 %v1751, %v589
        %v1768 = vadd.f32 %v1752, %v590
        %v1769 = vadd.f32 %v1753, %v591
        %v1770 = vadd.f32 %v1754, %v592
        %v1771 = vadd.f32 %v1755, %v593
        %v1772 = vadd.f32 %v1756, %v594
        %v1773 = vadd.f32 %v1757, %v595
        %v1774 = vadd.f32 %v1758, %v596
        %1775 = vmax.xlane.f32.xlu0 %v1759
        %v1776 = vpop.xlane.xlu0 %1775
        %1777 = vmax.xlane.f32.xlu0 %v1760
        %v1778 = vpop.xlane.xlu0 %1777
        %1779 = vmax.xlane.f32.xlu0 %v1761
        %v1780 = vpop.xlane.xlu0 %1779
        %1781 = vmax.xlane.f32.xlu0 %v1762
        %v1782 = vpop.xlane.xlu0 %1781
        %1783 = vmax.xlane.f32.xlu0 %v1763
        %v1784 = vpop.xlane.xlu0 %1783
        %1785 = vmax.xlane.f32.xlu0 %v1764
        %v1786 = vpop.xlane.xlu0 %1785
        %1787 = vmax.xlane.f32.xlu0 %v1765
        %v1788 = vpop.xlane.xlu0 %1787
        %1789 = vmax.xlane.f32.xlu0 %v1766
        %v1790 = vpop.xlane.xlu0 %1789
        %1791 = vmax.xlane.f32.xlu0 %v1767
        %v1792 = vpop.xlane.xlu0 %1791
        %1793 = vmax.xlane.f32.xlu0 %v1768
        %v1794 = vpop.xlane.xlu0 %1793
        %1795 = vmax.xlane.f32.xlu0 %v1769
        %v1796 = vpop.xlane.xlu0 %1795
        %1797 = vmax.xlane.f32.xlu0 %v1770
        %v1798 = vpop.xlane.xlu0 %1797
        %1799 = vmax.xlane.f32.xlu0 %v1771
        %v1800 = vpop.xlane.xlu0 %1799
        %1801 = vmax.xlane.f32.xlu0 %v1772
        %v1802 = vpop.xlane.xlu0 %1801
        %1803 = vmax.xlane.f32.xlu0 %v1773
        %v1804 = vpop.xlane.xlu0 %1803
        %1805 = vmax.xlane.f32.xlu0 %v1774
        %v1806 = vpop.xlane.xlu0 %1805
        %v1807 = vsub.f32 %v1759, %v1776
        %v1808 = vsub.f32 %v1760, %v1778
        %v1809 = vsub.f32 %v1761, %v1780
        %v1810 = vsub.f32 %v1762, %v1782
        %v1811 = vsub.f32 %v1763, %v1784
        %v1812 = vsub.f32 %v1764, %v1786
        %v1813 = vsub.f32 %v1765, %v1788
        %v1814 = vsub.f32 %v1766, %v1790
        %v1815 = vsub.f32 %v1767, %v1792
        %v1816 = vsub.f32 %v1768, %v1794
        %v1817 = vsub.f32 %v1769, %v1796
        %v1818 = vsub.f32 %v1770, %v1798
        %v1819 = vsub.f32 %v1771, %v1800
        %v1820 = vsub.f32 %v1772, %v1802
        %v1821 = vsub.f32 %v1773, %v1804
        %v1822 = vsub.f32 %v1774, %v1806
        %v1823 = vmul.f32 %v1807, 1.442695
        %v1824 = vpow.pop %v1823
        %v1825 = vmul.f32 %v1808, 1.442695
        %v1826 = vpow.pop %v1825
        %v1827 = vmul.f32 %v1809, 1.442695
        %v1828 = vpow.pop %v1827
        %v1829 = vmul.f32 %v1810, 1.442695
        %v1830 = vpow.pop %v1829
        %v1831 = vmul.f32 %v1811, 1.442695
        %v1832 = vpow.pop %v1831
        %v1833 = vmul.f32 %v1812, 1.442695
        %v1834 = vpow.pop %v1833
        %v1835 = vmul.f32 %v1813, 1.442695
        %v1836 = vpow.pop %v1835
        %v1837 = vmul.f32 %v1814, 1.442695
        %v1838 = vpow.pop %v1837
        %v1839 = vmul.f32 %v1815, 1.442695
        %v1840 = vpow.pop %v1839
        %v1841 = vmul.f32 %v1816, 1.442695
        %v1842 = vpow.pop %v1841
        %v1843 = vmul.f32 %v1817, 1.442695
        %v1844 = vpow.pop %v1843
        %v1845 = vmul.f32 %v1818, 1.442695
        %v1846 = vpow.pop %v1845
        %v1847 = vmul.f32 %v1819, 1.442695
        %v1848 = vpow.pop %v1847
        %v1849 = vmul.f32 %v1820, 1.442695
        %v1850 = vpow.pop %v1849
        %v1851 = vmul.f32 %v1821, 1.442695
        %v1852 = vpow.pop %v1851
        %v1853 = vmul.f32 %v1822, 1.442695
        %v1854 = vpow.pop %v1853
        %1855 = vadd.xlane.f32.xlu0 %v1824
        %v1856 = vpop.xlane.xlu0 %1855
        %1857 = vadd.xlane.f32.xlu0 %v1826
        %v1858 = vpop.xlane.xlu0 %1857
        %1859 = vadd.xlane.f32.xlu0 %v1828
        %v1860 = vpop.xlane.xlu0 %1859
        %1861 = vadd.xlane.f32.xlu0 %v1830
        %v1862 = vpop.xlane.xlu0 %1861
        %1863 = vadd.xlane.f32.xlu0 %v1832
        %v1864 = vpop.xlane.xlu0 %1863
        %1865 = vadd.xlane.f32.xlu0 %v1834
        %v1866 = vpop.xlane.xlu0 %1865
        %1867 = vadd.xlane.f32.xlu0 %v1836
        %v1868 = vpop.xlane.xlu0 %1867
        %1869 = vadd.xlane.f32.xlu0 %v1838
        %v1870 = vpop.xlane.xlu0 %1869
        %1871 = vadd.xlane.f32.xlu0 %v1840
        %v1872 = vpop.xlane.xlu0 %1871
        %1873 = vadd.xlane.f32.xlu0 %v1842
        %v1874 = vpop.xlane.xlu0 %1873
        %1875 = vadd.xlane.f32.xlu0 %v1844
        %v1876 = vpop.xlane.xlu0 %1875
        %1877 = vadd.xlane.f32.xlu0 %v1846
        %v1878 = vpop.xlane.xlu0 %1877
        %1879 = vadd.xlane.f32.xlu0 %v1848
        %v1880 = vpop.xlane.xlu0 %1879
        %1881 = vadd.xlane.f32.xlu0 %v1850
        %v1882 = vpop.xlane.xlu0 %1881
        %1883 = vadd.xlane.f32.xlu0 %v1852
        %v1884 = vpop.xlane.xlu0 %1883
        %1885 = vadd.xlane.f32.xlu0 %v1854
        %v1886 = vpop.xlane.xlu0 %1885
        %v1887 = vrcp.pop %v1856
        %v1888 = vrcp.pop %v1858
        %v1889 = vrcp.pop %v1860
        %v1890 = vrcp.pop %v1862
        %v1891 = vrcp.pop %v1864
        %v1892 = vrcp.pop %v1866
        %v1893 = vrcp.pop %v1868
        %v1894 = vrcp.pop %v1870
        %v1895 = vrcp.pop %v1872
        %v1896 = vrcp.pop %v1874
        %v1897 = vrcp.pop %v1876
        %v1898 = vrcp.pop %v1878
        %v1899 = vrcp.pop %v1880
        %v1900 = vrcp.pop %v1882
        %v1901 = vrcp.pop %v1884
        %v1902 = vrcp.pop %v1886
        %v1903 = vmul.f32 %v1824, %v1887
        %v1904 = vmul.f32 %v1826, %v1888
        %v1905 = vmul.f32 %v1828, %v1889
        %v1906 = vmul.f32 %v1830, %v1890
        %v1907 = vmul.f32 %v1832, %v1891
        %v1908 = vmul.f32 %v1834, %v1892
        %v1909 = vmul.f32 %v1836, %v1893
        %v1910 = vmul.f32 %v1838, %v1894
        %v1911 = vmul.f32 %v1840, %v1895
        %v1912 = vmul.f32 %v1842, %v1896
        %v1913 = vmul.f32 %v1844, %v1897
        %v1914 = vmul.f32 %v1846, %v1898
        %v1915 = vmul.f32 %v1848, %v1899
        %v1916 = vmul.f32 %v1850, %v1900
        %v1917 = vmul.f32 %v1852, %v1901
        %v1918 = vmul.f32 %v1854, %v1902
        %1919 = vrot.lane.b32.xlu0 %v669, 112
        %v1920 = vpop.permute.xlu0 %1919
        %1921 = vrot.lane.b32.xlu0 %v672, 112
        %v1922 = vpop.permute.xlu0 %1921
        %1923 = vrot.lane.b32.xlu0 %v675, 112
        %v1924 = vpop.permute.xlu0 %1923
        %1925 = vrot.lane.b32.xlu0 %v678, 112
        %v1926 = vpop.permute.xlu0 %1925
        %1927 = vrot.lane.b32.xlu0 %v681, 112
        %v1928 = vpop.permute.xlu0 %1927
        %1929 = vrot.lane.b32.xlu0 %v684, 112
        %v1930 = vpop.permute.xlu0 %1929
        %1931 = vrot.lane.b32.xlu0 %v687, 112
        %v1932 = vpop.permute.xlu0 %1931
        %1933 = vrot.lane.b32.xlu0 %v690, 112
        %v1934 = vpop.permute.xlu0 %1933
        %1935 = vrot.lane.b32.xlu0 %v693, 112
        %v1936 = vpop.permute.xlu0 %1935
        %1937 = vrot.lane.b32.xlu0 %v696, 112
        %v1938 = vpop.permute.xlu0 %1937
        %1939 = vrot.lane.b32.xlu0 %v699, 112
        %v1940 = vpop.permute.xlu0 %1939
        %1941 = vrot.lane.b32.xlu0 %v702, 112
        %v1942 = vpop.permute.xlu0 %1941
        %1943 = vrot.lane.b32.xlu0 %v705, 112
        %v1944 = vpop.permute.xlu0 %1943
        %1945 = vrot.lane.b32.xlu0 %v708, 112
        %v1946 = vpop.permute.xlu0 %1945
        %1947 = vrot.lane.b32.xlu0 %v711, 112
        %v1948 = vpop.permute.xlu0 %1947
        %1949 = vrot.lane.b32.xlu0 %v714, 112
        %v1950 = vpop.permute.xlu0 %1949
        %1967 = vmatpush.msra.mxu0 %v1950
        %1968 = vmatpush.msra.mxu0 %v1948
        %1969 = vmatpush.msra.mxu0 %v1946
        %1970 = vmatpush.msra.mxu0 %v1944
        %1971 = vmatpush.msra.mxu0 %v1942
        %1972 = vmatpush.msra.mxu0 %v1940
        %1973 = vmatpush.msra.mxu0 %v1938
        %1974 = vmatpush.msra.mxu0 %v1936
        %1975 = vmatpush.msra.mxu0 %v1934
        %1976 = vmatpush.msra.mxu0 %v1932
        %1977 = vmatpush.msra.mxu0 %v1930
        %1978 = vmatpush.msra.mxu0 %v1928
        %1979 = vmatpush.msra.mxu0 %v1926
        %1980 = vmatpush.msra.mxu0 %v1924
        %1981 = vmatpush.msra.mxu0 %v1922
        %1982 = vmatpush.msra.mxu0 %v1920
        %1983 = vmatmul.f32.gmra.mxu0 %v1903
        %v1984 = vpop.f32.mrf.mxu0
        %v1985 = vadd.f32 0.0, %v1984
        %1986 = vmatmul.f32.gmra.mxu0 %v1904
        %v1987 = vpop.f32.mrf.mxu0
        %v1988 = vadd.f32 0.0, %v1987
        %1989 = vmatmul.f32.gmra.mxu0 %v1905
        %v1990 = vpop.f32.mrf.mxu0
        %v1991 = vadd.f32 0.0, %v1990
        %1992 = vmatmul.f32.gmra.mxu0 %v1906
        %v1993 = vpop.f32.mrf.mxu0
        %v1994 = vadd.f32 0.0, %v1993
        %1995 = vmatmul.f32.gmra.mxu0 %v1907
        %v1996 = vpop.f32.mrf.mxu0
        %v1997 = vadd.f32 0.0, %v1996
        %1998 = vmatmul.f32.gmra.mxu0 %v1908
        %v1999 = vpop.f32.mrf.mxu0
        %v2000 = vadd.f32 0.0, %v1999
        %2001 = vmatmul.f32.gmra.mxu0 %v1909
        %v2002 = vpop.f32.mrf.mxu0
        %v2003 = vadd.f32 0.0, %v2002
        %2004 = vmatmul.f32.gmra.mxu0 %v1910
        %v2005 = vpop.f32.mrf.mxu0
        %v2006 = vadd.f32 0.0, %v2005
        %2007 = vmatmul.f32.gmra.mxu0 %v1911
        %v2008 = vpop.f32.mrf.mxu0
        %v2009 = vadd.f32 0.0, %v2008
        %2010 = vmatmul.f32.gmra.mxu0 %v1912
        %v2011 = vpop.f32.mrf.mxu0
        %v2012 = vadd.f32 0.0, %v2011
        %2013 = vmatmul.f32.gmra.mxu0 %v1913
        %v2014 = vpop.f32.mrf.mxu0
        %v2015 = vadd.f32 0.0, %v2014
        %2016 = vmatmul.f32.gmra.mxu0 %v1914
        %v2017 = vpop.f32.mrf.mxu0
        %v2018 = vadd.f32 0.0, %v2017
        %2019 = vmatmul.f32.gmra.mxu0 %v1915
        %v2020 = vpop.f32.mrf.mxu0
        %v2021 = vadd.f32 0.0, %v2020
        %2022 = vmatmul.f32.gmra.mxu0 %v1916
        %v2023 = vpop.f32.mrf.mxu0
        %v2024 = vadd.f32 0.0, %v2023
        %2025 = vmatmul.f32.gmra.mxu0 %v1917
        %v2026 = vpop.f32.mrf.mxu0
        %v2027 = vadd.f32 0.0, %v2026
        %2028 = vmatmul.f32.gmra.mxu0 %v1918
        %v2029 = vpop.f32.mrf.mxu0
        %v2030 = vadd.f32 0.0, %v2029
        %2031 = vdwg.mxu0
        %2032 = vset.pattern.permute.xlu0 3
        %2033 = vperm.xlu0 %2032, %v811
        %v2034 = vpop.permute.xlu0 %2033
        %2036 = vset.pattern.permute.xlu0 3
        %2037 = vperm.xlu0 %2036, %v814
        %v2038 = vpop.permute.xlu0 %2037
        %2040 = vset.pattern.permute.xlu0 3
        %2041 = vperm.xlu0 %2040, %v817
        %v2042 = vpop.permute.xlu0 %2041
        %2044 = vset.pattern.permute.xlu0 3
        %2045 = vperm.xlu0 %2044, %v820
        %v2046 = vpop.permute.xlu0 %2045
        %2048 = vset.pattern.permute.xlu0 3
        %2049 = vperm.xlu0 %2048, %v823
        %v2050 = vpop.permute.xlu0 %2049
        %2052 = vset.pattern.permute.xlu0 3
        %2053 = vperm.xlu0 %2052, %v826
        %v2054 = vpop.permute.xlu0 %2053
        %2056 = vset.pattern.permute.xlu0 3
        %2057 = vperm.xlu0 %2056, %v829
        %v2058 = vpop.permute.xlu0 %2057
        %2060 = vset.pattern.permute.xlu0 3
        %2061 = vperm.xlu0 %2060, %v832
        %v2062 = vpop.permute.xlu0 %2061
        %2064 = vset.pattern.permute.xlu0 3
        %2065 = vperm.xlu0 %2064, %v835
        %v2066 = vpop.permute.xlu0 %2065
        %2068 = vset.pattern.permute.xlu0 3
        %2069 = vperm.xlu0 %2068, %v838
        %v2070 = vpop.permute.xlu0 %2069
        %2072 = vset.pattern.permute.xlu0 3
        %2073 = vperm.xlu0 %2072, %v841
        %v2074 = vpop.permute.xlu0 %2073
        %2076 = vset.pattern.permute.xlu0 3
        %2077 = vperm.xlu0 %2076, %v844
        %v2078 = vpop.permute.xlu0 %2077
        %2080 = vset.pattern.permute.xlu0 3
        %2081 = vperm.xlu0 %2080, %v847
        %v2082 = vpop.permute.xlu0 %2081
        %2084 = vset.pattern.permute.xlu0 3
        %2085 = vperm.xlu0 %2084, %v850
        %v2086 = vpop.permute.xlu0 %2085
        %2088 = vset.pattern.permute.xlu0 3
        %2089 = vperm.xlu0 %2088, %v853
        %v2090 = vpop.permute.xlu0 %2089
        %2092 = vset.pattern.permute.xlu0 3
        %2093 = vperm.xlu0 %2092, %v856
        %v2094 = vpop.permute.xlu0 %2093
        %v2096 = vperm.slane %v788, 3
        %v2097 = vadd.f32 %v2034, %v2096
        %v2098 = vadd.f32 %v2038, %v2096
        %v2099 = vadd.f32 %v2042, %v2096
        %v2100 = vadd.f32 %v2046, %v2096
        %v2101 = vadd.f32 %v2050, %v2096
        %v2102 = vadd.f32 %v2054, %v2096
        %v2103 = vadd.f32 %v2058, %v2096
        %v2104 = vadd.f32 %v2062, %v2096
        %v2105 = vadd.f32 %v2066, %v2096
        %v2106 = vadd.f32 %v2070, %v2096
        %v2107 = vadd.f32 %v2074, %v2096
        %v2108 = vadd.f32 %v2078, %v2096
        %v2109 = vadd.f32 %v2082, %v2096
        %v2110 = vadd.f32 %v2086, %v2096
        %v2111 = vadd.f32 %v2090, %v2096
        %v2112 = vadd.f32 %v2094, %v2096
        %vm2113 = vcmp.gt.f32.partialorder %v2097, 0.0
        %vm2114 = vcmp.gt.f32.partialorder %v2098, 0.0
        %vm2115 = vcmp.gt.f32.partialorder %v2099, 0.0
        %vm2116 = vcmp.gt.f32.partialorder %v2100, 0.0
        %vm2117 = vcmp.gt.f32.partialorder %v2101, 0.0
        %vm2118 = vcmp.gt.f32.partialorder %v2102, 0.0
        %vm2119 = vcmp.gt.f32.partialorder %v2103, 0.0
        %vm2120 = vcmp.gt.f32.partialorder %v2104, 0.0
        %vm2121 = vcmp.gt.f32.partialorder %v2105, 0.0
        %vm2122 = vcmp.gt.f32.partialorder %v2106, 0.0
        %vm2123 = vcmp.gt.f32.partialorder %v2107, 0.0
        %vm2124 = vcmp.gt.f32.partialorder %v2108, 0.0
        %vm2125 = vcmp.gt.f32.partialorder %v2109, 0.0
        %vm2126 = vcmp.gt.f32.partialorder %v2110, 0.0
        %vm2127 = vcmp.gt.f32.partialorder %v2111, 0.0
        %vm2128 = vcmp.gt.f32.partialorder %v2112, 0.0
        %v2129 = vmul.f32 %v2097, 0.2
        %v2130 = vmul.f32 %v2098, 0.2
        %v2131 = vmul.f32 %v2099, 0.2
        %v2132 = vmul.f32 %v2100, 0.2
        %v2133 = vmul.f32 %v2101, 0.2
        %v2134 = vmul.f32 %v2102, 0.2
        %v2135 = vmul.f32 %v2103, 0.2
        %v2136 = vmul.f32 %v2104, 0.2
        %v2137 = vmul.f32 %v2105, 0.2
        %v2138 = vmul.f32 %v2106, 0.2
        %v2139 = vmul.f32 %v2107, 0.2
        %v2140 = vmul.f32 %v2108, 0.2
        %v2141 = vmul.f32 %v2109, 0.2
        %v2142 = vmul.f32 %v2110, 0.2
        %v2143 = vmul.f32 %v2111, 0.2
        %v2144 = vmul.f32 %v2112, 0.2
        %v2145 = vsel %vm2113, %v2097, %v2129
        %v2146 = vsel %vm2114, %v2098, %v2130
        %v2147 = vsel %vm2115, %v2099, %v2131
        %v2148 = vsel %vm2116, %v2100, %v2132
        %v2149 = vsel %vm2117, %v2101, %v2133
        %v2150 = vsel %vm2118, %v2102, %v2134
        %v2151 = vsel %vm2119, %v2103, %v2135
        %v2152 = vsel %vm2120, %v2104, %v2136
        %v2153 = vsel %vm2121, %v2105, %v2137
        %v2154 = vsel %vm2122, %v2106, %v2138
        %v2155 = vsel %vm2123, %v2107, %v2139
        %v2156 = vsel %vm2124, %v2108, %v2140
        %v2157 = vsel %vm2125, %v2109, %v2141
        %v2158 = vsel %vm2126, %v2110, %v2142
        %v2159 = vsel %vm2127, %v2111, %v2143
        %v2160 = vsel %vm2128, %v2112, %v2144
        %v2161 = vadd.f32 %v2145, %v581
        %v2162 = vadd.f32 %v2146, %v582
        %v2163 = vadd.f32 %v2147, %v583
        %v2164 = vadd.f32 %v2148, %v584
        %v2165 = vadd.f32 %v2149, %v585
        %v2166 = vadd.f32 %v2150, %v586
        %v2167 = vadd.f32 %v2151, %v587
        %v2168 = vadd.f32 %v2152, %v588
        %v2169 = vadd.f32 %v2153, %v589
        %v2170 = vadd.f32 %v2154, %v590
        %v2171 = vadd.f32 %v2155, %v591
        %v2172 = vadd.f32 %v2156, %v592
        %v2173 = vadd.f32 %v2157, %v593
        %v2174 = vadd.f32 %v2158, %v594
        %v2175 = vadd.f32 %v2159, %v595
        %v2176 = vadd.f32 %v2160, %v596
        %2177 = vmax.xlane.f32.xlu0 %v2161
        %v2178 = vpop.xlane.xlu0 %2177
        %2179 = vmax.xlane.f32.xlu0 %v2162
        %v2180 = vpop.xlane.xlu0 %2179
        %2181 = vmax.xlane.f32.xlu0 %v2163
        %v2182 = vpop.xlane.xlu0 %2181
        %2183 = vmax.xlane.f32.xlu0 %v2164
        %v2184 = vpop.xlane.xlu0 %2183
        %2185 = vmax.xlane.f32.xlu0 %v2165
        %v2186 = vpop.xlane.xlu0 %2185
        %2187 = vmax.xlane.f32.xlu0 %v2166
        %v2188 = vpop.xlane.xlu0 %2187
        %2189 = vmax.xlane.f32.xlu0 %v2167
        %v2190 = vpop.xlane.xlu0 %2189
        %2191 = vmax.xlane.f32.xlu0 %v2168
        %v2192 = vpop.xlane.xlu0 %2191
        %2193 = vmax.xlane.f32.xlu0 %v2169
        %v2194 = vpop.xlane.xlu0 %2193
        %2195 = vmax.xlane.f32.xlu0 %v2170
        %v2196 = vpop.xlane.xlu0 %2195
        %2197 = vmax.xlane.f32.xlu0 %v2171
        %v2198 = vpop.xlane.xlu0 %2197
        %2199 = vmax.xlane.f32.xlu0 %v2172
        %v2200 = vpop.xlane.xlu0 %2199
        %2201 = vmax.xlane.f32.xlu0 %v2173
        %v2202 = vpop.xlane.xlu0 %2201
        %2203 = vmax.xlane.f32.xlu0 %v2174
        %v2204 = vpop.xlane.xlu0 %2203
        %2205 = vmax.xlane.f32.xlu0 %v2175
        %v2206 = vpop.xlane.xlu0 %2205
        %2207 = vmax.xlane.f32.xlu0 %v2176
        %v2208 = vpop.xlane.xlu0 %2207
        %v2209 = vsub.f32 %v2161, %v2178
        %v2210 = vsub.f32 %v2162, %v2180
        %v2211 = vsub.f32 %v2163, %v2182
        %v2212 = vsub.f32 %v2164, %v2184
        %v2213 = vsub.f32 %v2165, %v2186
        %v2214 = vsub.f32 %v2166, %v2188
        %v2215 = vsub.f32 %v2167, %v2190
        %v2216 = vsub.f32 %v2168, %v2192
        %v2217 = vsub.f32 %v2169, %v2194
        %v2218 = vsub.f32 %v2170, %v2196
        %v2219 = vsub.f32 %v2171, %v2198
        %v2220 = vsub.f32 %v2172, %v2200
        %v2221 = vsub.f32 %v2173, %v2202
        %v2222 = vsub.f32 %v2174, %v2204
        %v2223 = vsub.f32 %v2175, %v2206
        %v2224 = vsub.f32 %v2176, %v2208
        %v2225 = vmul.f32 %v2209, 1.442695
        %v2226 = vpow.pop %v2225
        %v2227 = vmul.f32 %v2210, 1.442695
        %v2228 = vpow.pop %v2227
        %v2229 = vmul.f32 %v2211, 1.442695
        %v2230 = vpow.pop %v2229
        %v2231 = vmul.f32 %v2212, 1.442695
        %v2232 = vpow.pop %v2231
        %v2233 = vmul.f32 %v2213, 1.442695
        %v2234 = vpow.pop %v2233
        %v2235 = vmul.f32 %v2214, 1.442695
        %v2236 = vpow.pop %v2235
        %v2237 = vmul.f32 %v2215, 1.442695
        %v2238 = vpow.pop %v2237
        %v2239 = vmul.f32 %v2216, 1.442695
        %v2240 = vpow.pop %v2239
        %v2241 = vmul.f32 %v2217, 1.442695
        %v2242 = vpow.pop %v2241
        %v2243 = vmul.f32 %v2218, 1.442695
        %v2244 = vpow.pop %v2243
        %v2245 = vmul.f32 %v2219, 1.442695
        %v2246 = vpow.pop %v2245
        %v2247 = vmul.f32 %v2220, 1.442695
        %v2248 = vpow.pop %v2247
        %v2249 = vmul.f32 %v2221, 1.442695
        %v2250 = vpow.pop %v2249
        %v2251 = vmul.f32 %v2222, 1.442695
        %v2252 = vpow.pop %v2251
        %v2253 = vmul.f32 %v2223, 1.442695
        %v2254 = vpow.pop %v2253
        %v2255 = vmul.f32 %v2224, 1.442695
        %v2256 = vpow.pop %v2255
        %2257 = vadd.xlane.f32.xlu0 %v2226
        %v2258 = vpop.xlane.xlu0 %2257
        %2259 = vadd.xlane.f32.xlu0 %v2228
        %v2260 = vpop.xlane.xlu0 %2259
        %2261 = vadd.xlane.f32.xlu0 %v2230
        %v2262 = vpop.xlane.xlu0 %2261
        %2263 = vadd.xlane.f32.xlu0 %v2232
        %v2264 = vpop.xlane.xlu0 %2263
        %2265 = vadd.xlane.f32.xlu0 %v2234
        %v2266 = vpop.xlane.xlu0 %2265
        %2267 = vadd.xlane.f32.xlu0 %v2236
        %v2268 = vpop.xlane.xlu0 %2267
        %2269 = vadd.xlane.f32.xlu0 %v2238
        %v2270 = vpop.xlane.xlu0 %2269
        %2271 = vadd.xlane.f32.xlu0 %v2240
        %v2272 = vpop.xlane.xlu0 %2271
        %2273 = vadd.xlane.f32.xlu0 %v2242
        %v2274 = vpop.xlane.xlu0 %2273
        %2275 = vadd.xlane.f32.xlu0 %v2244
        %v2276 = vpop.xlane.xlu0 %2275
        %2277 = vadd.xlane.f32.xlu0 %v2246
        %v2278 = vpop.xlane.xlu0 %2277
        %2279 = vadd.xlane.f32.xlu0 %v2248
        %v2280 = vpop.xlane.xlu0 %2279
        %2281 = vadd.xlane.f32.xlu0 %v2250
        %v2282 = vpop.xlane.xlu0 %2281
        %2283 = vadd.xlane.f32.xlu0 %v2252
        %v2284 = vpop.xlane.xlu0 %2283
        %2285 = vadd.xlane.f32.xlu0 %v2254
        %v2286 = vpop.xlane.xlu0 %2285
        %2287 = vadd.xlane.f32.xlu0 %v2256
        %v2288 = vpop.xlane.xlu0 %2287
        %v2289 = vrcp.pop %v2258
        %v2290 = vrcp.pop %v2260
        %v2291 = vrcp.pop %v2262
        %v2292 = vrcp.pop %v2264
        %v2293 = vrcp.pop %v2266
        %v2294 = vrcp.pop %v2268
        %v2295 = vrcp.pop %v2270
        %v2296 = vrcp.pop %v2272
        %v2297 = vrcp.pop %v2274
        %v2298 = vrcp.pop %v2276
        %v2299 = vrcp.pop %v2278
        %v2300 = vrcp.pop %v2280
        %v2301 = vrcp.pop %v2282
        %v2302 = vrcp.pop %v2284
        %v2303 = vrcp.pop %v2286
        %v2304 = vrcp.pop %v2288
        %v2305 = vmul.f32 %v2226, %v2289
        %v2306 = vmul.f32 %v2228, %v2290
        %v2307 = vmul.f32 %v2230, %v2291
        %v2308 = vmul.f32 %v2232, %v2292
        %v2309 = vmul.f32 %v2234, %v2293
        %v2310 = vmul.f32 %v2236, %v2294
        %v2311 = vmul.f32 %v2238, %v2295
        %v2312 = vmul.f32 %v2240, %v2296
        %v2313 = vmul.f32 %v2242, %v2297
        %v2314 = vmul.f32 %v2244, %v2298
        %v2315 = vmul.f32 %v2246, %v2299
        %v2316 = vmul.f32 %v2248, %v2300
        %v2317 = vmul.f32 %v2250, %v2301
        %v2318 = vmul.f32 %v2252, %v2302
        %v2319 = vmul.f32 %v2254, %v2303
        %v2320 = vmul.f32 %v2256, %v2304
        %2321 = vrot.lane.b32.xlu0 %v669, 104
        %v2322 = vpop.permute.xlu0 %2321
        %2323 = vrot.lane.b32.xlu0 %v672, 104
        %v2324 = vpop.permute.xlu0 %2323
        %2325 = vrot.lane.b32.xlu0 %v675, 104
        %v2326 = vpop.permute.xlu0 %2325
        %2327 = vrot.lane.b32.xlu0 %v678, 104
        %v2328 = vpop.permute.xlu0 %2327
        %2329 = vrot.lane.b32.xlu0 %v681, 104
        %v2330 = vpop.permute.xlu0 %2329
        %2331 = vrot.lane.b32.xlu0 %v684, 104
        %v2332 = vpop.permute.xlu0 %2331
        %2333 = vrot.lane.b32.xlu0 %v687, 104
        %v2334 = vpop.permute.xlu0 %2333
        %2335 = vrot.lane.b32.xlu0 %v690, 104
        %v2336 = vpop.permute.xlu0 %2335
        %2337 = vrot.lane.b32.xlu0 %v693, 104
        %v2338 = vpop.permute.xlu0 %2337
        %2339 = vrot.lane.b32.xlu0 %v696, 104
        %v2340 = vpop.permute.xlu0 %2339
        %2341 = vrot.lane.b32.xlu0 %v699, 104
        %v2342 = vpop.permute.xlu0 %2341
        %2343 = vrot.lane.b32.xlu0 %v702, 104
        %v2344 = vpop.permute.xlu0 %2343
        %2345 = vrot.lane.b32.xlu0 %v705, 104
        %v2346 = vpop.permute.xlu0 %2345
        %2347 = vrot.lane.b32.xlu0 %v708, 104
        %v2348 = vpop.permute.xlu0 %2347
        %2349 = vrot.lane.b32.xlu0 %v711, 104
        %v2350 = vpop.permute.xlu0 %2349
        %2351 = vrot.lane.b32.xlu0 %v714, 104
        %v2352 = vpop.permute.xlu0 %2351
        %2369 = vmatpush.msra.mxu0 %v2352
        %2370 = vmatpush.msra.mxu0 %v2350
        %2371 = vmatpush.msra.mxu0 %v2348
        %2372 = vmatpush.msra.mxu0 %v2346
        %2373 = vmatpush.msra.mxu0 %v2344
        %2374 = vmatpush.msra.mxu0 %v2342
        %2375 = vmatpush.msra.mxu0 %v2340
        %2376 = vmatpush.msra.mxu0 %v2338
        %2377 = vmatpush.msra.mxu0 %v2336
        %2378 = vmatpush.msra.mxu0 %v2334
        %2379 = vmatpush.msra.mxu0 %v2332
        %2380 = vmatpush.msra.mxu0 %v2330
        %2381 = vmatpush.msra.mxu0 %v2328
        %2382 = vmatpush.msra.mxu0 %v2326
        %2383 = vmatpush.msra.mxu0 %v2324
        %2384 = vmatpush.msra.mxu0 %v2322
        %2385 = vmatmul.f32.gmra.mxu0 %v2305
        %v2386 = vpop.f32.mrf.mxu0
        %v2387 = vadd.f32 0.0, %v2386
        %2388 = vmatmul.f32.gmra.mxu0 %v2306
        %v2389 = vpop.f32.mrf.mxu0
        %v2390 = vadd.f32 0.0, %v2389
        %2391 = vmatmul.f32.gmra.mxu0 %v2307
        %v2392 = vpop.f32.mrf.mxu0
        %v2393 = vadd.f32 0.0, %v2392
        %2394 = vmatmul.f32.gmra.mxu0 %v2308
        %v2395 = vpop.f32.mrf.mxu0
        %v2396 = vadd.f32 0.0, %v2395
        %2397 = vmatmul.f32.gmra.mxu0 %v2309
        %v2398 = vpop.f32.mrf.mxu0
        %v2399 = vadd.f32 0.0, %v2398
        %2400 = vmatmul.f32.gmra.mxu0 %v2310
        %v2401 = vpop.f32.mrf.mxu0
        %v2402 = vadd.f32 0.0, %v2401
        %2403 = vmatmul.f32.gmra.mxu0 %v2311
        %v2404 = vpop.f32.mrf.mxu0
        %v2405 = vadd.f32 0.0, %v2404
        %2406 = vmatmul.f32.gmra.mxu0 %v2312
        %v2407 = vpop.f32.mrf.mxu0
        %v2408 = vadd.f32 0.0, %v2407
        %2409 = vmatmul.f32.gmra.mxu0 %v2313
        %v2410 = vpop.f32.mrf.mxu0
        %v2411 = vadd.f32 0.0, %v2410
        %2412 = vmatmul.f32.gmra.mxu0 %v2314
        %v2413 = vpop.f32.mrf.mxu0
        %v2414 = vadd.f32 0.0, %v2413
        %2415 = vmatmul.f32.gmra.mxu0 %v2315
        %v2416 = vpop.f32.mrf.mxu0
        %v2417 = vadd.f32 0.0, %v2416
        %2418 = vmatmul.f32.gmra.mxu0 %v2316
        %v2419 = vpop.f32.mrf.mxu0
        %v2420 = vadd.f32 0.0, %v2419
        %2421 = vmatmul.f32.gmra.mxu0 %v2317
        %v2422 = vpop.f32.mrf.mxu0
        %v2423 = vadd.f32 0.0, %v2422
        %2424 = vmatmul.f32.gmra.mxu0 %v2318
        %v2425 = vpop.f32.mrf.mxu0
        %v2426 = vadd.f32 0.0, %v2425
        %2427 = vmatmul.f32.gmra.mxu0 %v2319
        %v2428 = vpop.f32.mrf.mxu0
        %v2429 = vadd.f32 0.0, %v2428
        %2430 = vmatmul.f32.gmra.mxu0 %v2320
        %v2431 = vpop.f32.mrf.mxu0
        %v2432 = vadd.f32 0.0, %v2431
        %2433 = vdwg.mxu0
        %2450 = vrot.lane.b32.xlu0 %v1583, 8
        %v2451 = vpop.permute.xlu0 %2450
        %2452 = vrot.lane.b32.xlu0 %v1586, 8
        %v2453 = vpop.permute.xlu0 %2452
        %2454 = vrot.lane.b32.xlu0 %v1589, 8
        %v2455 = vpop.permute.xlu0 %2454
        %2456 = vrot.lane.b32.xlu0 %v1592, 8
        %v2457 = vpop.permute.xlu0 %2456
        %2458 = vrot.lane.b32.xlu0 %v1595, 8
        %v2459 = vpop.permute.xlu0 %2458
        %2460 = vrot.lane.b32.xlu0 %v1598, 8
        %v2461 = vpop.permute.xlu0 %2460
        %2462 = vrot.lane.b32.xlu0 %v1601, 8
        %v2463 = vpop.permute.xlu0 %2462
        %2464 = vrot.lane.b32.xlu0 %v1604, 8
        %v2465 = vpop.permute.xlu0 %2464
        %2466 = vrot.lane.b32.xlu0 %v1607, 8
        %v2467 = vpop.permute.xlu0 %2466
        %2468 = vrot.lane.b32.xlu0 %v1610, 8
        %v2469 = vpop.permute.xlu0 %2468
        %2470 = vrot.lane.b32.xlu0 %v1613, 8
        %v2471 = vpop.permute.xlu0 %2470
        %2472 = vrot.lane.b32.xlu0 %v1616, 8
        %v2473 = vpop.permute.xlu0 %2472
        %2474 = vrot.lane.b32.xlu0 %v1619, 8
        %v2475 = vpop.permute.xlu0 %2474
        %2476 = vrot.lane.b32.xlu0 %v1622, 8
        %v2477 = vpop.permute.xlu0 %2476
        %2478 = vrot.lane.b32.xlu0 %v1625, 8
        %v2479 = vpop.permute.xlu0 %2478
        %2480 = vrot.lane.b32.xlu0 %v1628, 8
        %v2481 = vpop.permute.xlu0 %2480
        %2514 = vrot.lane.b32.xlu0 %v1985, 16
        %v2515 = vpop.permute.xlu0 %2514
        %2516 = vrot.lane.b32.xlu0 %v1988, 16
        %v2517 = vpop.permute.xlu0 %2516
        %2518 = vrot.lane.b32.xlu0 %v1991, 16
        %v2519 = vpop.permute.xlu0 %2518
        %2520 = vrot.lane.b32.xlu0 %v1994, 16
        %v2521 = vpop.permute.xlu0 %2520
        %2522 = vrot.lane.b32.xlu0 %v1997, 16
        %v2523 = vpop.permute.xlu0 %2522
        %2524 = vrot.lane.b32.xlu0 %v2000, 16
        %v2525 = vpop.permute.xlu0 %2524
        %2526 = vrot.lane.b32.xlu0 %v2003, 16
        %v2527 = vpop.permute.xlu0 %2526
        %2528 = vrot.lane.b32.xlu0 %v2006, 16
        %v2529 = vpop.permute.xlu0 %2528
        %2530 = vrot.lane.b32.xlu0 %v2009, 16
        %v2531 = vpop.permute.xlu0 %2530
        %2532 = vrot.lane.b32.xlu0 %v2012, 16
        %v2533 = vpop.permute.xlu0 %2532
        %2534 = vrot.lane.b32.xlu0 %v2015, 16
        %v2535 = vpop.permute.xlu0 %2534
        %2536 = vrot.lane.b32.xlu0 %v2018, 16
        %v2537 = vpop.permute.xlu0 %2536
        %2538 = vrot.lane.b32.xlu0 %v2021, 16
        %v2539 = vpop.permute.xlu0 %2538
        %2540 = vrot.lane.b32.xlu0 %v2024, 16
        %v2541 = vpop.permute.xlu0 %2540
        %2542 = vrot.lane.b32.xlu0 %v2027, 16
        %v2543 = vpop.permute.xlu0 %2542
        %2544 = vrot.lane.b32.xlu0 %v2030, 16
        %v2545 = vpop.permute.xlu0 %2544
        %2578 = vrot.lane.b32.xlu0 %v2387, 24
        %v2579 = vpop.permute.xlu0 %2578
        %2580 = vrot.lane.b32.xlu0 %v2390, 24
        %v2581 = vpop.permute.xlu0 %2580
        %2582 = vrot.lane.b32.xlu0 %v2393, 24
        %v2583 = vpop.permute.xlu0 %2582
        %2584 = vrot.lane.b32.xlu0 %v2396, 24
        %v2585 = vpop.permute.xlu0 %2584
        %2586 = vrot.lane.b32.xlu0 %v2399, 24
        %v2587 = vpop.permute.xlu0 %2586
        %2588 = vrot.lane.b32.xlu0 %v2402, 24
        %v2589 = vpop.permute.xlu0 %2588
        %2590 = vrot.lane.b32.xlu0 %v2405, 24
        %v2591 = vpop.permute.xlu0 %2590
        %2592 = vrot.lane.b32.xlu0 %v2408, 24
        %v2593 = vpop.permute.xlu0 %2592
        %2594 = vrot.lane.b32.xlu0 %v2411, 24
        %v2595 = vpop.permute.xlu0 %2594
        %2596 = vrot.lane.b32.xlu0 %v2414, 24
        %v2597 = vpop.permute.xlu0 %2596
        %2598 = vrot.lane.b32.xlu0 %v2417, 24
        %v2599 = vpop.permute.xlu0 %2598
        %2600 = vrot.lane.b32.xlu0 %v2420, 24
        %v2601 = vpop.permute.xlu0 %2600
        %2602 = vrot.lane.b32.xlu0 %v2423, 24
        %v2603 = vpop.permute.xlu0 %2602
        %2604 = vrot.lane.b32.xlu0 %v2426, 24
        %v2605 = vpop.permute.xlu0 %2604
        %2606 = vrot.lane.b32.xlu0 %v2429, 24
        %v2607 = vpop.permute.xlu0 %2606
        %2608 = vrot.lane.b32.xlu0 %v2432, 24
        %v2609 = vpop.permute.xlu0 %2608
        %vm2626 = vcmask 64512
        %v2627 = vsel %vm2626, %v1181, %v2451
        %v2628 = vsel %vm2626, %v1184, %v2453
        %v2629 = vsel %vm2626, %v1187, %v2455
        %v2630 = vsel %vm2626, %v1190, %v2457
        %v2631 = vsel %vm2626, %v1193, %v2459
        %v2632 = vsel %vm2626, %v1196, %v2461
        %v2633 = vsel %vm2626, %v1199, %v2463
        %v2634 = vsel %vm2626, %v1202, %v2465
        %v2635 = vsel %vm2626, %v1205, %v2467
        %v2636 = vsel %vm2626, %v1208, %v2469
        %v2637 = vsel %vm2626, %v1211, %v2471
        %v2638 = vsel %vm2626, %v1214, %v2473
        %v2639 = vsel %vm2626, %v1217, %v2475
        %v2640 = vsel %vm2626, %v1220, %v2477
        %v2641 = vsel %vm2626, %v1223, %v2479
        %v2642 = vsel %vm2626, %v1226, %v2481
        %vm2643 = vcmask 130048
        %v2644 = vsel %vm2643, %v2627, %v2515
        %v2645 = vsel %vm2643, %v2628, %v2517
        %v2646 = vsel %vm2643, %v2629, %v2519
        %v2647 = vsel %vm2643, %v2630, %v2521
        %v2648 = vsel %vm2643, %v2631, %v2523
        %v2649 = vsel %vm2643, %v2632, %v2525
        %v2650 = vsel %vm2643, %v2633, %v2527
        %v2651 = vsel %vm2643, %v2634, %v2529
        %v2652 = vsel %vm2643, %v2635, %v2531
        %v2653 = vsel %vm2643, %v2636, %v2533
        %v2654 = vsel %vm2643, %v2637, %v2535
        %v2655 = vsel %vm2643, %v2638, %v2537
        %v2656 = vsel %vm2643, %v2639, %v2539
        %v2657 = vsel %vm2643, %v2640, %v2541
        %v2658 = vsel %vm2643, %v2641, %v2543
        %v2659 = vsel %vm2643, %v2642, %v2545
        %vm2660 = vcmask 195584
        %v2661 = vsel %vm2660, %v2644, %v2579
        %v2662 = vsel %vm2660, %v2645, %v2581
        %v2663 = vsel %vm2660, %v2646, %v2583
        %v2664 = vsel %vm2660, %v2647, %v2585
        %v2665 = vsel %vm2660, %v2648, %v2587
        %v2666 = vsel %vm2660, %v2649, %v2589
        %v2667 = vsel %vm2660, %v2650, %v2591
        %v2668 = vsel %vm2660, %v2651, %v2593
        %v2669 = vsel %vm2660, %v2652, %v2595
        %v2670 = vsel %vm2660, %v2653, %v2597
        %v2671 = vsel %vm2660, %v2654, %v2599
        %v2672 = vsel %vm2660, %v2655, %v2601
        %v2673 = vsel %vm2660, %v2656, %v2603
        %v2674 = vsel %vm2660, %v2657, %v2605
        %v2675 = vsel %vm2660, %v2658, %v2607
        %v2676 = vsel %vm2660, %v2659, %v2609
        %v2678 = vperm.slane %v597, 0
        %v2680 = vadd.f32 %v2661, %v2678
        %v2681 = vadd.f32 %v2662, %v2678
        %v2682 = vadd.f32 %v2663, %v2678
        %v2683 = vadd.f32 %v2664, %v2678
        %v2684 = vadd.f32 %v2665, %v2678
        %v2685 = vadd.f32 %v2666, %v2678
        %v2686 = vadd.f32 %v2667, %v2678
        %v2687 = vadd.f32 %v2668, %v2678
        %v2688 = vadd.f32 %v2669, %v2678
        %v2689 = vadd.f32 %v2670, %v2678
        %v2690 = vadd.f32 %v2671, %v2678
        %v2691 = vadd.f32 %v2672, %v2678
        %v2692 = vadd.f32 %v2673, %v2678
        %v2693 = vadd.f32 %v2674, %v2678
        %v2694 = vadd.f32 %v2675, %v2678
        %v2695 = vadd.f32 %v2676, %v2678
        %v2696 = vld [vmem:[%s9] sm:$0xff]
        %v2697 = vld [vmem:[%s9 + $0x8] sm:$0xff]
        %v2698 = vld [vmem:[%s9 + $0x10] sm:$0xff]
        %v2699 = vld [vmem:[%s9 + $0x18] sm:$0xff]
        %v2700 = vld [vmem:[%s9 + $0x20] sm:$0xff]
        %v2701 = vld [vmem:[%s9 + $0x28] sm:$0xff]
        %v2702 = vld [vmem:[%s9 + $0x30] sm:$0xff]
        %v2703 = vld [vmem:[%s9 + $0x38] sm:$0xff]
        %v2704 = vld [vmem:[%s9 + $0x40] sm:$0xff]
        %v2705 = vld [vmem:[%s9 + $0x48] sm:$0xff]
        %v2706 = vld [vmem:[%s9 + $0x50] sm:$0xff]
        %v2707 = vld [vmem:[%s9 + $0x58] sm:$0xff]
        %v2708 = vld [vmem:[%s9 + $0x60] sm:$0xff]
        %v2709 = vld [vmem:[%s9 + $0x68] sm:$0xff]
        %v2710 = vld [vmem:[%s9 + $0x70] sm:$0xff]
        %v2711 = vld [vmem:[%s9 + $0x78] sm:$0xff]
        %v2712 = vld [vmem:[%s10] sm:$0xff]
        %v2713 = vld [vmem:[%s10 + $0x8] sm:$0xff]
        %2714 = vmatpush.msra.mxu0 %v2695
        %2715 = vmatpush.msra.mxu0 %v2694
        %2716 = vmatpush.msra.mxu0 %v2693
        %2717 = vmatpush.msra.mxu0 %v2692
        %2718 = vmatpush.msra.mxu0 %v2691
        %2719 = vmatpush.msra.mxu0 %v2690
        %2720 = vmatpush.msra.mxu0 %v2689
        %2721 = vmatpush.msra.mxu0 %v2688
        %2722 = vmatpush.msra.mxu0 %v2687
        %2723 = vmatpush.msra.mxu0 %v2686
        %2724 = vmatpush.msra.mxu0 %v2685
        %2725 = vmatpush.msra.mxu0 %v2684
        %2726 = vmatpush.msra.mxu0 %v2683
        %2727 = vmatpush.msra.mxu0 %v2682
        %2728 = vmatpush.msra.mxu0 %v2681
        %2729 = vmatpush.msra.mxu0 %v2680
        %2730 = vmatmul.f32.gmra.mxu0 %v2712
        %v2731 = vpop.f32.mrf.mxu0
        %v2732 = vadd.f32 0.0, %v2731
        %2733 = vmatmul.f32.gmra.mxu0 %v2713
        %v2734 = vpop.f32.mrf.mxu0
        %v2735 = vadd.f32 0.0, %v2734
        %2736 = vdwg.mxu0
        %v2737 = vsel %vm602, %v2732, 0.0
        %2738 = vadd.xlane.f32.xlu0 %v2737
        %v2739 = vpop.xlane.xlu0 %2738
        %v2740 = vsel %vm602, %v2735, 0.0
        %2741 = vadd.xlane.f32.xlu0 %v2740
        %v2742 = vpop.xlane.xlu0 %2741
        %v2744 = vsel %vm2643, %v2696, 0
        %v2747 = vsel %vm2643, %v2697, 0
        %v2750 = vsel %vm2643, %v2698, 0
        %v2753 = vsel %vm2643, %v2699, 0
        %v2756 = vsel %vm2643, %v2700, 0
        %v2759 = vsel %vm2643, %v2701, 0
        %v2762 = vsel %vm2643, %v2702, 0
        %v2765 = vsel %vm2643, %v2703, 0
        %v2768 = vsel %vm2643, %v2704, 0
        %v2771 = vsel %vm2643, %v2705, 0
        %v2774 = vsel %vm2643, %v2706, 0
        %v2777 = vsel %vm2643, %v2707, 0
        %v2780 = vsel %vm2643, %v2708, 0
        %v2783 = vsel %vm2643, %v2709, 0
        %v2786 = vsel %vm2643, %v2710, 0
        %v2789 = vsel %vm2643, %v2711, 0
        %2791 = vmatpush.msra.mxu0 0.0
        %2792 = vmatpush.msra.mxu0 0.0
        %2793 = vmatpush.msra.mxu0 0.0
        %2794 = vmatpush.msra.mxu0 0.0
        %2795 = vmatpush.msra.mxu0 0.0
        %2796 = vmatpush.msra.mxu0 0.0
        %2797 = vmatpush.msra.mxu0 0.0
        %2798 = vmatpush.msra.mxu0 0.0
        %2799 = vmatpush.msra.mxu0 0.0
        %2800 = vmatpush.msra.mxu0 0.0
        %2801 = vmatpush.msra.mxu0 0.0
        %2802 = vmatpush.msra.mxu0 0.0
        %2803 = vmatpush.msra.mxu0 0.0
        %2804 = vmatpush.msra.mxu0 0.0
        %2805 = vmatpush.msra.mxu0 %v2742
        %2806 = vmatpush.msra.mxu0 %v2739
        %2807 = vmatmul.f32.gmra.mxu0 %v2744
        %v2808 = vpop.f32.mrf.mxu0
        %v2809 = vadd.f32 0.0, %v2808
        %2810 = vmatmul.f32.gmra.mxu0 %v2747
        %v2811 = vpop.f32.mrf.mxu0
        %v2812 = vadd.f32 0.0, %v2811
        %2813 = vmatmul.f32.gmra.mxu0 %v2750
        %v2814 = vpop.f32.mrf.mxu0
        %v2815 = vadd.f32 0.0, %v2814
        %2816 = vmatmul.f32.gmra.mxu0 %v2753
        %v2817 = vpop.f32.mrf.mxu0
        %v2818 = vadd.f32 0.0, %v2817
        %2819 = vmatmul.f32.gmra.mxu0 %v2756
        %v2820 = vpop.f32.mrf.mxu0
        %v2821 = vadd.f32 0.0, %v2820
        %2822 = vmatmul.f32.gmra.mxu0 %v2759
        %v2823 = vpop.f32.mrf.mxu0
        %v2824 = vadd.f32 0.0, %v2823
        %2825 = vmatmul.f32.gmra.mxu0 %v2762
        %v2826 = vpop.f32.mrf.mxu0
        %v2827 = vadd.f32 0.0, %v2826
        %2828 = vmatmul.f32.gmra.mxu0 %v2765
        %v2829 = vpop.f32.mrf.mxu0
        %v2830 = vadd.f32 0.0, %v2829
        %2831 = vmatmul.f32.gmra.mxu0 %v2768
        %v2832 = vpop.f32.mrf.mxu0
        %v2833 = vadd.f32 0.0, %v2832
        %2834 = vmatmul.f32.gmra.mxu0 %v2771
        %v2835 = vpop.f32.mrf.mxu0
        %v2836 = vadd.f32 0.0, %v2835
        %2837 = vmatmul.f32.gmra.mxu0 %v2774
        %v2838 = vpop.f32.mrf.mxu0
        %v2839 = vadd.f32 0.0, %v2838
        %2840 = vmatmul.f32.gmra.mxu0 %v2777
        %v2841 = vpop.f32.mrf.mxu0
        %v2842 = vadd.f32 0.0, %v2841
        %2843 = vmatmul.f32.gmra.mxu0 %v2780
        %v2844 = vpop.f32.mrf.mxu0
        %v2845 = vadd.f32 0.0, %v2844
        %2846 = vmatmul.f32.gmra.mxu0 %v2783
        %v2847 = vpop.f32.mrf.mxu0
        %v2848 = vadd.f32 0.0, %v2847
        %2849 = vmatmul.f32.gmra.mxu0 %v2786
        %v2850 = vpop.f32.mrf.mxu0
        %v2851 = vadd.f32 0.0, %v2850
        %2852 = vmatmul.f32.gmra.mxu0 %v2789
        %v2853 = vpop.f32.mrf.mxu0
        %v2854 = vadd.f32 0.0, %v2853
        %2855 = vdwg.mxu0
        %2857 = vset.pattern.permute.xlu0 0
        %2858 = vperm.xlu0 %2857, %v2809
        %v2859 = vpop.permute.xlu0 %2858
        %2862 = vset.pattern.permute.xlu0 0
        %2863 = vperm.xlu0 %2862, %v2812
        %v2864 = vpop.permute.xlu0 %2863
        %2867 = vset.pattern.permute.xlu0 0
        %2868 = vperm.xlu0 %2867, %v2815
        %v2869 = vpop.permute.xlu0 %2868
        %2872 = vset.pattern.permute.xlu0 0
        %2873 = vperm.xlu0 %2872, %v2818
        %v2874 = vpop.permute.xlu0 %2873
        %2877 = vset.pattern.permute.xlu0 0
        %2878 = vperm.xlu0 %2877, %v2821
        %v2879 = vpop.permute.xlu0 %2878
        %2882 = vset.pattern.permute.xlu0 0
        %2883 = vperm.xlu0 %2882, %v2824
        %v2884 = vpop.permute.xlu0 %2883
        %2887 = vset.pattern.permute.xlu0 0
        %2888 = vperm.xlu0 %2887, %v2827
        %v2889 = vpop.permute.xlu0 %2888
        %2892 = vset.pattern.permute.xlu0 0
        %2893 = vperm.xlu0 %2892, %v2830
        %v2894 = vpop.permute.xlu0 %2893
        %2897 = vset.pattern.permute.xlu0 0
        %2898 = vperm.xlu0 %2897, %v2833
        %v2899 = vpop.permute.xlu0 %2898
        %2902 = vset.pattern.permute.xlu0 0
        %2903 = vperm.xlu0 %2902, %v2836
        %v2904 = vpop.permute.xlu0 %2903
        %2907 = vset.pattern.permute.xlu0 0
        %2908 = vperm.xlu0 %2907, %v2839
        %v2909 = vpop.permute.xlu0 %2908
        %2912 = vset.pattern.permute.xlu0 0
        %2913 = vperm.xlu0 %2912, %v2842
        %v2914 = vpop.permute.xlu0 %2913
        %2917 = vset.pattern.permute.xlu0 0
        %2918 = vperm.xlu0 %2917, %v2845
        %v2919 = vpop.permute.xlu0 %2918
        %2922 = vset.pattern.permute.xlu0 0
        %2923 = vperm.xlu0 %2922, %v2848
        %v2924 = vpop.permute.xlu0 %2923
        %2927 = vset.pattern.permute.xlu0 0
        %2928 = vperm.xlu0 %2927, %v2851
        %v2929 = vpop.permute.xlu0 %2928
        %2932 = vset.pattern.permute.xlu0 0
        %2933 = vperm.xlu0 %2932, %v2854
        %v2934 = vpop.permute.xlu0 %2933
        %v2936 = vsub.f32 %v2680, %v2859
        %v2937 = vsub.f32 %v2681, %v2864
        %v2938 = vsub.f32 %v2682, %v2869
        %v2939 = vsub.f32 %v2683, %v2874
        %v2940 = vsub.f32 %v2684, %v2879
        %v2941 = vsub.f32 %v2685, %v2884
        %v2942 = vsub.f32 %v2686, %v2889
        %v2943 = vsub.f32 %v2687, %v2894
        %v2944 = vsub.f32 %v2688, %v2899
        %v2945 = vsub.f32 %v2689, %v2904
        %v2946 = vsub.f32 %v2690, %v2909
        %v2947 = vsub.f32 %v2691, %v2914
        %v2948 = vsub.f32 %v2692, %v2919
        %v2949 = vsub.f32 %v2693, %v2924
        %v2950 = vsub.f32 %v2694, %v2929
        %v2951 = vsub.f32 %v2695, %v2934
        %v2952 = vmul.f32 %v2936, %v2936
        %v2953 = vmul.f32 %v2937, %v2937
        %v2954 = vmul.f32 %v2938, %v2938
        %v2955 = vmul.f32 %v2939, %v2939
        %v2956 = vmul.f32 %v2940, %v2940
        %v2957 = vmul.f32 %v2941, %v2941
        %v2958 = vmul.f32 %v2942, %v2942
        %v2959 = vmul.f32 %v2943, %v2943
        %v2960 = vmul.f32 %v2944, %v2944
        %v2961 = vmul.f32 %v2945, %v2945
        %v2962 = vmul.f32 %v2946, %v2946
        %v2963 = vmul.f32 %v2947, %v2947
        %v2964 = vmul.f32 %v2948, %v2948
        %v2965 = vmul.f32 %v2949, %v2949
        %v2966 = vmul.f32 %v2950, %v2950
        %v2967 = vmul.f32 %v2951, %v2951
        %2968 = vmatpush.msra.mxu0 %v2967
        %2969 = vmatpush.msra.mxu0 %v2966
        %2970 = vmatpush.msra.mxu0 %v2965
        %2971 = vmatpush.msra.mxu0 %v2964
        %2972 = vmatpush.msra.mxu0 %v2963
        %2973 = vmatpush.msra.mxu0 %v2962
        %2974 = vmatpush.msra.mxu0 %v2961
        %2975 = vmatpush.msra.mxu0 %v2960
        %2976 = vmatpush.msra.mxu0 %v2959
        %2977 = vmatpush.msra.mxu0 %v2958
        %2978 = vmatpush.msra.mxu0 %v2957
        %2979 = vmatpush.msra.mxu0 %v2956
        %2980 = vmatpush.msra.mxu0 %v2955
        %2981 = vmatpush.msra.mxu0 %v2954
        %2982 = vmatpush.msra.mxu0 %v2953
        %2983 = vmatpush.msra.mxu0 %v2952
        %2984 = vmatmul.f32.gmra.mxu0 %v2712
        %v2985 = vpop.f32.mrf.mxu0
        %v2986 = vadd.f32 0.0, %v2985
        %2987 = vmatmul.f32.gmra.mxu0 %v2713
        %v2988 = vpop.f32.mrf.mxu0
        %v2989 = vadd.f32 0.0, %v2988
        %2990 = vdwg.mxu0
        %v2991 = vsel %vm602, %v2986, 0.0
        %2992 = vadd.xlane.f32.xlu0 %v2991
        %v2993 = vpop.xlane.xlu0 %2992
        %v2994 = vsel %vm602, %v2989, 0.0
        %2995 = vadd.xlane.f32.xlu0 %v2994
        %v2996 = vpop.xlane.xlu0 %2995
        %v2997 = vadd.f32 %v2993, 1e-05
        %v2998 = vadd.f32 %v2996, 1e-05
        %v2999 = vrsqrt.pop %v2997
        %v3000 = vmul.f32 %v2999, %v2997
        %v3001 = vmul.f32 %v3000, %v2999
        %v3002 = vmul.f32 0.5, %v3001
        %v3003 = vsub.f32 1.5, %v3002
        %v3004 = vmul.f32 %v2999, %v3003
        %vm3005 = vweird.f32 %v2997
        %vm3006 = vweird.f32 %v2999
        %vm3007 = vmor %vm3005, %vm3006
        %v3008 = vsel %vm3007, %v2999, %v3004
        %v3009 = vrsqrt.pop %v2998
        %v3010 = vmul.f32 %v3009, %v2998
        %v3011 = vmul.f32 %v3010, %v3009
        %v3012 = vmul.f32 0.5, %v3011
        %v3013 = vsub.f32 1.5, %v3012
        %v3014 = vmul.f32 %v3009, %v3013
        %vm3015 = vweird.f32 %v2998
        %vm3016 = vweird.f32 %v3009
        %vm3017 = vmor %vm3015, %vm3016
        %v3018 = vsel %vm3017, %v3009, %v3014
        %3019 = vmatpush.msra.mxu0 0.0
        %3020 = vmatpush.msra.mxu0 0.0
        %3021 = vmatpush.msra.mxu0 0.0
        %3022 = vmatpush.msra.mxu0 0.0
        %3023 = vmatpush.msra.mxu0 0.0
        %3024 = vmatpush.msra.mxu0 0.0
        %3025 = vmatpush.msra.mxu0 0.0
        %3026 = vmatpush.msra.mxu0 0.0
        %3027 = vmatpush.msra.mxu0 0.0
        %3028 = vmatpush.msra.mxu0 0.0
        %3029 = vmatpush.msra.mxu0 0.0
        %3030 = vmatpush.msra.mxu0 0.0
        %3031 = vmatpush.msra.mxu0 0.0
        %3032 = vmatpush.msra.mxu0 0.0
        %3033 = vmatpush.msra.mxu0 %v3018
        %3034 = vmatpush.msra.mxu0 %v3008
        %3035 = vmatmul.f32.gmra.mxu0 %v2744
        %v3036 = vpop.f32.mrf.mxu0
        %v3037 = vadd.f32 0.0, %v3036
        %3038 = vmatmul.f32.gmra.mxu0 %v2747
        %v3039 = vpop.f32.mrf.mxu0
        %v3040 = vadd.f32 0.0, %v3039
        %3041 = vmatmul.f32.gmra.mxu0 %v2750
        %v3042 = vpop.f32.mrf.mxu0
        %v3043 = vadd.f32 0.0, %v3042
        %3044 = vmatmul.f32.gmra.mxu0 %v2753
        %v3045 = vpop.f32.mrf.mxu0
        %v3046 = vadd.f32 0.0, %v3045
        %3047 = vmatmul.f32.gmra.mxu0 %v2756
        %v3048 = vpop.f32.mrf.mxu0
        %v3049 = vadd.f32 0.0, %v3048
        %3050 = vmatmul.f32.gmra.mxu0 %v2759
        %v3051 = vpop.f32.mrf.mxu0
        %v3052 = vadd.f32 0.0, %v3051
        %3053 = vmatmul.f32.gmra.mxu0 %v2762
        %v3054 = vpop.f32.mrf.mxu0
        %v3055 = vadd.f32 0.0, %v3054
        %3056 = vmatmul.f32.gmra.mxu0 %v2765
        %v3057 = vpop.f32.mrf.mxu0
        %v3058 = vadd.f32 0.0, %v3057
        %3059 = vmatmul.f32.gmra.mxu0 %v2768
        %v3060 = vpop.f32.mrf.mxu0
        %v3061 = vadd.f32 0.0, %v3060
        %3062 = vmatmul.f32.gmra.mxu0 %v2771
        %v3063 = vpop.f32.mrf.mxu0
        %v3064 = vadd.f32 0.0, %v3063
        %3065 = vmatmul.f32.gmra.mxu0 %v2774
        %v3066 = vpop.f32.mrf.mxu0
        %v3067 = vadd.f32 0.0, %v3066
        %3068 = vmatmul.f32.gmra.mxu0 %v2777
        %v3069 = vpop.f32.mrf.mxu0
        %v3070 = vadd.f32 0.0, %v3069
        %3071 = vmatmul.f32.gmra.mxu0 %v2780
        %v3072 = vpop.f32.mrf.mxu0
        %v3073 = vadd.f32 0.0, %v3072
        %3074 = vmatmul.f32.gmra.mxu0 %v2783
        %v3075 = vpop.f32.mrf.mxu0
        %v3076 = vadd.f32 0.0, %v3075
        %3077 = vmatmul.f32.gmra.mxu0 %v2786
        %v3078 = vpop.f32.mrf.mxu0
        %v3079 = vadd.f32 0.0, %v3078
        %3080 = vmatmul.f32.gmra.mxu0 %v2789
        %v3081 = vpop.f32.mrf.mxu0
        %v3082 = vadd.f32 0.0, %v3081
        %3083 = vdwg.mxu0
        %3085 = vset.pattern.permute.xlu0 0
        %3086 = vperm.xlu0 %3085, %v3037
        %v3087 = vpop.permute.xlu0 %3086
        %3090 = vset.pattern.permute.xlu0 0
        %3091 = vperm.xlu0 %3090, %v3040
        %v3092 = vpop.permute.xlu0 %3091
        %3095 = vset.pattern.permute.xlu0 0
        %3096 = vperm.xlu0 %3095, %v3043
        %v3097 = vpop.permute.xlu0 %3096
        %3100 = vset.pattern.permute.xlu0 0
        %3101 = vperm.xlu0 %3100, %v3046
        %v3102 = vpop.permute.xlu0 %3101
        %3105 = vset.pattern.permute.xlu0 0
        %3106 = vperm.xlu0 %3105, %v3049
        %v3107 = vpop.permute.xlu0 %3106
        %3110 = vset.pattern.permute.xlu0 0
        %3111 = vperm.xlu0 %3110, %v3052
        %v3112 = vpop.permute.xlu0 %3111
        %3115 = vset.pattern.permute.xlu0 0
        %3116 = vperm.xlu0 %3115, %v3055
        %v3117 = vpop.permute.xlu0 %3116
        %3120 = vset.pattern.permute.xlu0 0
        %3121 = vperm.xlu0 %3120, %v3058
        %v3122 = vpop.permute.xlu0 %3121
        %3125 = vset.pattern.permute.xlu0 0
        %3126 = vperm.xlu0 %3125, %v3061
        %v3127 = vpop.permute.xlu0 %3126
        %3130 = vset.pattern.permute.xlu0 0
        %3131 = vperm.xlu0 %3130, %v3064
        %v3132 = vpop.permute.xlu0 %3131
        %3135 = vset.pattern.permute.xlu0 0
        %3136 = vperm.xlu0 %3135, %v3067
        %v3137 = vpop.permute.xlu0 %3136
        %3140 = vset.pattern.permute.xlu0 0
        %3141 = vperm.xlu0 %3140, %v3070
        %v3142 = vpop.permute.xlu0 %3141
        %3145 = vset.pattern.permute.xlu0 0
        %3146 = vperm.xlu0 %3145, %v3073
        %v3147 = vpop.permute.xlu0 %3146
        %3150 = vset.pattern.permute.xlu0 0
        %3151 = vperm.xlu0 %3150, %v3076
        %v3152 = vpop.permute.xlu0 %3151
        %3155 = vset.pattern.permute.xlu0 0
        %3156 = vperm.xlu0 %3155, %v3079
        %v3157 = vpop.permute.xlu0 %3156
        %3160 = vset.pattern.permute.xlu0 0
        %3161 = vperm.xlu0 %3160, %v3082
        %v3162 = vpop.permute.xlu0 %3161
        %v3164 = vmul.f32 %v2936, %v3087
        %v3165 = vmul.f32 %v2937, %v3092
        %v3166 = vmul.f32 %v2938, %v3097
        %v3167 = vmul.f32 %v2939, %v3102
        %v3168 = vmul.f32 %v2940, %v3107
        %v3169 = vmul.f32 %v2941, %v3112
        %v3170 = vmul.f32 %v2942, %v3117
        %v3171 = vmul.f32 %v2943, %v3122
        %v3172 = vmul.f32 %v2944, %v3127
        %v3173 = vmul.f32 %v2945, %v3132
        %v3174 = vmul.f32 %v2946, %v3137
        %v3175 = vmul.f32 %v2947, %v3142
        %v3176 = vmul.f32 %v2948, %v3147
        %v3177 = vmul.f32 %v2949, %v3152
        %v3178 = vmul.f32 %v2950, %v3157
        %v3179 = vmul.f32 %v2951, %v3162
        %3180 = vrot.lane.b32.xlu0 %v2678, 64
        %v3181 = vpop.permute.xlu0 %3180
        %v3183 = vmul.f32 %v3164, %v3181
        %v3184 = vmul.f32 %v3165, %v3181
        %v3185 = vmul.f32 %v3166, %v3181
        %v3186 = vmul.f32 %v3167, %v3181
        %v3187 = vmul.f32 %v3168, %v3181
        %v3188 = vmul.f32 %v3169, %v3181
        %v3189 = vmul.f32 %v3170, %v3181
        %v3190 = vmul.f32 %v3171, %v3181
        %v3191 = vmul.f32 %v3172, %v3181
        %v3192 = vmul.f32 %v3173, %v3181
        %v3193 = vmul.f32 %v3174, %v3181
        %v3194 = vmul.f32 %v3175, %v3181
        %v3195 = vmul.f32 %v3176, %v3181
        %v3196 = vmul.f32 %v3177, %v3181
        %v3197 = vmul.f32 %v3178, %v3181
        %v3198 = vmul.f32 %v3179, %v3181
        %3199 = vrot.lane.b32.xlu0 %v2678, 32
        %v3200 = vpop.permute.xlu0 %3199
        %v3202 = vadd.f32 %v3183, %v3200
        %v3203 = vadd.f32 %v3184, %v3200
        %v3204 = vadd.f32 %v3185, %v3200
        %v3205 = vadd.f32 %v3186, %v3200
        %v3206 = vadd.f32 %v3187, %v3200
        %v3207 = vadd.f32 %v3188, %v3200
        %v3208 = vadd.f32 %v3189, %v3200
        %v3209 = vadd.f32 %v3190, %v3200
        %v3210 = vadd.f32 %v3191, %v3200
        %v3211 = vadd.f32 %v3192, %v3200
        %v3212 = vadd.f32 %v3193, %v3200
        %v3213 = vadd.f32 %v3194, %v3200
        %v3214 = vadd.f32 %v3195, %v3200
        %v3215 = vadd.f32 %v3196, %v3200
        %v3216 = vadd.f32 %v3197, %v3200
        %v3217 = vadd.f32 %v3198, %v3200
        %vm3218 = vcmp.gt.f32.partialorder %v3202, 0.0
        %vm3219 = vcmp.gt.f32.partialorder %v3203, 0.0
        %vm3220 = vcmp.gt.f32.partialorder %v3204, 0.0
        %vm3221 = vcmp.gt.f32.partialorder %v3205, 0.0
        %vm3222 = vcmp.gt.f32.partialorder %v3206, 0.0
        %vm3223 = vcmp.gt.f32.partialorder %v3207, 0.0
        %vm3224 = vcmp.gt.f32.partialorder %v3208, 0.0
        %vm3225 = vcmp.gt.f32.partialorder %v3209, 0.0
        %vm3226 = vcmp.gt.f32.partialorder %v3210, 0.0
        %vm3227 = vcmp.gt.f32.partialorder %v3211, 0.0
        %vm3228 = vcmp.gt.f32.partialorder %v3212, 0.0
        %vm3229 = vcmp.gt.f32.partialorder %v3213, 0.0
        %vm3230 = vcmp.gt.f32.partialorder %v3214, 0.0
        %vm3231 = vcmp.gt.f32.partialorder %v3215, 0.0
        %vm3232 = vcmp.gt.f32.partialorder %v3216, 0.0
        %vm3233 = vcmp.gt.f32.partialorder %v3217, 0.0
        %v3234 = vmin.f32 %v3202, 0.0
        %v3235 = vmin.f32 %v3203, 0.0
        %v3236 = vmin.f32 %v3204, 0.0
        %v3237 = vmin.f32 %v3205, 0.0
        %v3238 = vmin.f32 %v3206, 0.0
        %v3239 = vmin.f32 %v3207, 0.0
        %v3240 = vmin.f32 %v3208, 0.0
        %v3241 = vmin.f32 %v3209, 0.0
        %v3242 = vmin.f32 %v3210, 0.0
        %v3243 = vmin.f32 %v3211, 0.0
        %v3244 = vmin.f32 %v3212, 0.0
        %v3245 = vmin.f32 %v3213, 0.0
        %v3246 = vmin.f32 %v3214, 0.0
        %v3247 = vmin.f32 %v3215, 0.0
        %v3248 = vmin.f32 %v3216, 0.0
        %v3249 = vmin.f32 %v3217, 0.0
        %v3250 = vmul.f32 %v3234, 1.442695
        %v3251 = vpow.pop %v3250
        %v3252 = vmul.f32 %v3235, 1.442695
        %v3253 = vpow.pop %v3252
        %v3254 = vmul.f32 %v3236, 1.442695
        %v3255 = vpow.pop %v3254
        %v3256 = vmul.f32 %v3237, 1.442695
        %v3257 = vpow.pop %v3256
        %v3258 = vmul.f32 %v3238, 1.442695
        %v3259 = vpow.pop %v3258
        %v3260 = vmul.f32 %v3239, 1.442695
        %v3261 = vpow.pop %v3260
        %v3262 = vmul.f32 %v3240, 1.442695
        %v3263 = vpow.pop %v3262
        %v3264 = vmul.f32 %v3241, 1.442695
        %v3265 = vpow.pop %v3264
        %v3266 = vmul.f32 %v3242, 1.442695
        %v3267 = vpow.pop %v3266
        %v3268 = vmul.f32 %v3243, 1.442695
        %v3269 = vpow.pop %v3268
        %v3270 = vmul.f32 %v3244, 1.442695
        %v3271 = vpow.pop %v3270
        %v3272 = vmul.f32 %v3245, 1.442695
        %v3273 = vpow.pop %v3272
        %v3274 = vmul.f32 %v3246, 1.442695
        %v3275 = vpow.pop %v3274
        %v3276 = vmul.f32 %v3247, 1.442695
        %v3277 = vpow.pop %v3276
        %v3278 = vmul.f32 %v3248, 1.442695
        %v3279 = vpow.pop %v3278
        %v3280 = vmul.f32 %v3249, 1.442695
        %v3281 = vpow.pop %v3280
        %v3282 = vsub.f32 %v3251, 1.0
        %v3283 = vsub.f32 %v3253, 1.0
        %v3284 = vsub.f32 %v3255, 1.0
        %v3285 = vsub.f32 %v3257, 1.0
        %v3286 = vsub.f32 %v3259, 1.0
        %v3287 = vsub.f32 %v3261, 1.0
        %v3288 = vsub.f32 %v3263, 1.0
        %v3289 = vsub.f32 %v3265, 1.0
        %v3290 = vsub.f32 %v3267, 1.0
        %v3291 = vsub.f32 %v3269, 1.0
        %v3292 = vsub.f32 %v3271, 1.0
        %v3293 = vsub.f32 %v3273, 1.0
        %v3294 = vsub.f32 %v3275, 1.0
        %v3295 = vsub.f32 %v3277, 1.0
        %v3296 = vsub.f32 %v3279, 1.0
        %v3297 = vsub.f32 %v3281, 1.0
        %v3298 = vsel %vm3218, %v3202, %v3282
        %v3299 = vsel %vm3219, %v3203, %v3283
        %v3300 = vsel %vm3220, %v3204, %v3284
        %v3301 = vsel %vm3221, %v3205, %v3285
        %v3302 = vsel %vm3222, %v3206, %v3286
        %v3303 = vsel %vm3223, %v3207, %v3287
        %v3304 = vsel %vm3224, %v3208, %v3288
        %v3305 = vsel %vm3225, %v3209, %v3289
        %v3306 = vsel %vm3226, %v3210, %v3290
        %v3307 = vsel %vm3227, %v3211, %v3291
        %v3308 = vsel %vm3228, %v3212, %v3292
        %v3309 = vsel %vm3229, %v3213, %v3293
        %v3310 = vsel %vm3230, %v3214, %v3294
        %v3311 = vsel %vm3231, %v3215, %v3295
        %v3312 = vsel %vm3232, %v3216, %v3296
        %v3313 = vsel %vm3233, %v3217, %v3297
        %v3314 = vld [vmem:[%s5] sm:$0xff]
        %v3315 = vld [vmem:[%s5 + $0x8] sm:$0xff]
        %v3316 = vld [vmem:[%s5 + $0x10] sm:$0xff]
        %v3317 = vld [vmem:[%s5 + $0x18] sm:$0xff]
        %v3319 = vsel %vm602, %v3298, 0
        %v3322 = vsel %vm602, %v3299, 0
        %v3325 = vsel %vm602, %v3300, 0
        %v3328 = vsel %vm602, %v3301, 0
        %v3331 = vsel %vm602, %v3302, 0
        %v3334 = vsel %vm602, %v3303, 0
        %v3337 = vsel %vm602, %v3304, 0
        %v3340 = vsel %vm602, %v3305, 0
        %v3343 = vsel %vm602, %v3306, 0
        %v3346 = vsel %vm602, %v3307, 0
        %v3349 = vsel %vm602, %v3308, 0
        %v3352 = vsel %vm602, %v3309, 0
        %v3355 = vsel %vm602, %v3310, 0
        %v3358 = vsel %vm602, %v3311, 0
        %v3361 = vsel %vm602, %v3312, 0
        %v3364 = vsel %vm602, %v3313, 0
        %3366 = vmatpush.msra.mxu0 0.0
        %3367 = vmatpush.msra.mxu0 0.0
        %3368 = vmatpush.msra.mxu0 0.0
        %3369 = vmatpush.msra.mxu0 0.0
        %3370 = vmatpush.msra.mxu0 0.0
        %3371 = vmatpush.msra.mxu0 0.0
        %3372 = vmatpush.msra.mxu0 0.0
        %3373 = vmatpush.msra.mxu0 0.0
        %3374 = vmatpush.msra.mxu0 0.0
        %3375 = vmatpush.msra.mxu0 0.0
        %3376 = vmatpush.msra.mxu0 0.0
        %3377 = vmatpush.msra.mxu0 0.0
        %3378 = vmatpush.msra.mxu0 %v3317
        %3379 = vmatpush.msra.mxu0 %v3316
        %3380 = vmatpush.msra.mxu0 %v3315
        %3381 = vmatpush.msra.mxu0 %v3314
        %3382 = vmatmul.f32.gmra.mxu0 %v3319
        %v3383 = vpop.f32.mrf.mxu0
        %v3384 = vadd.f32 0.0, %v3383
        %3385 = vmatmul.f32.gmra.mxu0 %v3322
        %v3386 = vpop.f32.mrf.mxu0
        %v3387 = vadd.f32 0.0, %v3386
        %3388 = vmatmul.f32.gmra.mxu0 %v3325
        %v3389 = vpop.f32.mrf.mxu0
        %v3390 = vadd.f32 0.0, %v3389
        %3391 = vmatmul.f32.gmra.mxu0 %v3328
        %v3392 = vpop.f32.mrf.mxu0
        %v3393 = vadd.f32 0.0, %v3392
        %3394 = vmatmul.f32.gmra.mxu0 %v3331
        %v3395 = vpop.f32.mrf.mxu0
        %v3396 = vadd.f32 0.0, %v3395
        %3397 = vmatmul.f32.gmra.mxu0 %v3334
        %v3398 = vpop.f32.mrf.mxu0
        %v3399 = vadd.f32 0.0, %v3398
        %3400 = vmatmul.f32.gmra.mxu0 %v3337
        %v3401 = vpop.f32.mrf.mxu0
        %v3402 = vadd.f32 0.0, %v3401
        %3403 = vmatmul.f32.gmra.mxu0 %v3340
        %v3404 = vpop.f32.mrf.mxu0
        %v3405 = vadd.f32 0.0, %v3404
        %3406 = vmatmul.f32.gmra.mxu0 %v3343
        %v3407 = vpop.f32.mrf.mxu0
        %v3408 = vadd.f32 0.0, %v3407
        %3409 = vmatmul.f32.gmra.mxu0 %v3346
        %v3410 = vpop.f32.mrf.mxu0
        %v3411 = vadd.f32 0.0, %v3410
        %3412 = vmatmul.f32.gmra.mxu0 %v3349
        %v3413 = vpop.f32.mrf.mxu0
        %v3414 = vadd.f32 0.0, %v3413
        %3415 = vmatmul.f32.gmra.mxu0 %v3352
        %v3416 = vpop.f32.mrf.mxu0
        %v3417 = vadd.f32 0.0, %v3416
        %3418 = vmatmul.f32.gmra.mxu0 %v3355
        %v3419 = vpop.f32.mrf.mxu0
        %v3420 = vadd.f32 0.0, %v3419
        %3421 = vmatmul.f32.gmra.mxu0 %v3358
        %v3422 = vpop.f32.mrf.mxu0
        %v3423 = vadd.f32 0.0, %v3422
        %3424 = vmatmul.f32.gmra.mxu0 %v3361
        %v3425 = vpop.f32.mrf.mxu0
        %v3426 = vadd.f32 0.0, %v3425
        %3427 = vmatmul.f32.gmra.mxu0 %v3364
        %v3428 = vpop.f32.mrf.mxu0
        %v3429 = vadd.f32 0.0, %v3428
        %3430 = vdwg.mxu0
        %v3431 = vld [vmem:[%s6] sm:$0x3]
        %v3432 = vld [vmem:[%s6 + $0x2] sm:$0x3]
        %v3434 = vsel %vm602, %v3431, 0
        %v3437 = vsel %vm602, %v3384, 0
        %v3440 = vsel %vm602, %v3387, 0
        %v3443 = vsel %vm602, %v3390, 0
        %v3446 = vsel %vm602, %v3393, 0
        %v3449 = vsel %vm602, %v3396, 0
        %v3452 = vsel %vm602, %v3399, 0
        %v3455 = vsel %vm602, %v3402, 0
        %v3458 = vsel %vm602, %v3405, 0
        %v3461 = vsel %vm602, %v3408, 0
        %v3464 = vsel %vm602, %v3411, 0
        %v3467 = vsel %vm602, %v3414, 0
        %v3470 = vsel %vm602, %v3417, 0
        %v3473 = vsel %vm602, %v3420, 0
        %v3476 = vsel %vm602, %v3423, 0
        %v3479 = vsel %vm602, %v3426, 0
        %v3482 = vsel %vm602, %v3429, 0
        %3484 = vmatpush.xpose.msra.mxu0 %v3482
        %3485 = vmatpush.xpose.msra.mxu0 %v3479
        %3486 = vmatpush.xpose.msra.mxu0 %v3476
        %3487 = vmatpush.xpose.msra.mxu0 %v3473
        %3488 = vmatpush.xpose.msra.mxu0 %v3470
        %3489 = vmatpush.xpose.msra.mxu0 %v3467
        %3490 = vmatpush.xpose.msra.mxu0 %v3464
        %3491 = vmatpush.xpose.msra.mxu0 %v3461
        %3492 = vmatpush.xpose.msra.mxu0 %v3458
        %3493 = vmatpush.xpose.msra.mxu0 %v3455
        %3494 = vmatpush.xpose.msra.mxu0 %v3452
        %3495 = vmatpush.xpose.msra.mxu0 %v3449
        %3496 = vmatpush.xpose.msra.mxu0 %v3446
        %3497 = vmatpush.xpose.msra.mxu0 %v3443
        %3498 = vmatpush.xpose.msra.mxu0 %v3440
        %3499 = vmatpush.xpose.msra.mxu0 %v3437
        %3500 = vmatmul.f32.gmra.mxu0 %v3434
        %v3501 = vpop.f32.mrf.mxu0
        %v3502 = vadd.f32 0.0, %v3501
        %3503 = vdwg.mxu0
        %v3505 = vsel %vm602, %v3432, 0
        %3507 = vmatpush.xpose.msra.mxu0 0.0
        %3508 = vmatpush.xpose.msra.mxu0 0.0
        %3509 = vmatpush.xpose.msra.mxu0 0.0
        %3510 = vmatpush.xpose.msra.mxu0 0.0
        %3511 = vmatpush.xpose.msra.mxu0 0.0
        %3512 = vmatpush.xpose.msra.mxu0 0.0
        %3513 = vmatpush.xpose.msra.mxu0 0.0
        %3514 = vmatpush.xpose.msra.mxu0 0.0
        %3515 = vmatpush.xpose.msra.mxu0 0.0
        %3516 = vmatpush.xpose.msra.mxu0 0.0
        %3517 = vmatpush.xpose.msra.mxu0 0.0
        %3518 = vmatpush.xpose.msra.mxu0 0.0
        %3519 = vmatpush.xpose.msra.mxu0 0.0
        %3520 = vmatpush.xpose.msra.mxu0 0.0
        %3521 = vmatpush.xpose.msra.mxu0 0.0
        %3522 = vmatpush.xpose.msra.mxu0 %v3505
        %3523 = vmatmul.f32.gmra.mxu0 %v3437
        %v3524 = vpop.f32.mrf.mxu0
        %v3525 = vadd.f32 0.0, %v3524
        %3526 = vmatmul.f32.gmra.mxu0 %v3440
        %v3527 = vpop.f32.mrf.mxu0
        %v3528 = vadd.f32 0.0, %v3527
        %3529 = vmatmul.f32.gmra.mxu0 %v3443
        %v3530 = vpop.f32.mrf.mxu0
        %v3531 = vadd.f32 0.0, %v3530
        %3532 = vmatmul.f32.gmra.mxu0 %v3446
        %v3533 = vpop.f32.mrf.mxu0
        %v3534 = vadd.f32 0.0, %v3533
        %3535 = vmatmul.f32.gmra.mxu0 %v3449
        %v3536 = vpop.f32.mrf.mxu0
        %v3537 = vadd.f32 0.0, %v3536
        %3538 = vmatmul.f32.gmra.mxu0 %v3452
        %v3539 = vpop.f32.mrf.mxu0
        %v3540 = vadd.f32 0.0, %v3539
        %3541 = vmatmul.f32.gmra.mxu0 %v3455
        %v3542 = vpop.f32.mrf.mxu0
        %v3543 = vadd.f32 0.0, %v3542
        %3544 = vmatmul.f32.gmra.mxu0 %v3458
        %v3545 = vpop.f32.mrf.mxu0
        %v3546 = vadd.f32 0.0, %v3545
        %3547 = vmatmul.f32.gmra.mxu0 %v3461
        %v3548 = vpop.f32.mrf.mxu0
        %v3549 = vadd.f32 0.0, %v3548
        %3550 = vmatmul.f32.gmra.mxu0 %v3464
        %v3551 = vpop.f32.mrf.mxu0
        %v3552 = vadd.f32 0.0, %v3551
        %3553 = vmatmul.f32.gmra.mxu0 %v3467
        %v3554 = vpop.f32.mrf.mxu0
        %v3555 = vadd.f32 0.0, %v3554
        %3556 = vmatmul.f32.gmra.mxu0 %v3470
        %v3557 = vpop.f32.mrf.mxu0
        %v3558 = vadd.f32 0.0, %v3557
        %3559 = vmatmul.f32.gmra.mxu0 %v3473
        %v3560 = vpop.f32.mrf.mxu0
        %v3561 = vadd.f32 0.0, %v3560
        %3562 = vmatmul.f32.gmra.mxu0 %v3476
        %v3563 = vpop.f32.mrf.mxu0
        %v3564 = vadd.f32 0.0, %v3563
        %3565 = vmatmul.f32.gmra.mxu0 %v3479
        %v3566 = vpop.f32.mrf.mxu0
        %v3567 = vadd.f32 0.0, %v3566
        %3568 = vmatmul.f32.gmra.mxu0 %v3482
        %v3569 = vpop.f32.mrf.mxu0
        %v3570 = vadd.f32 0.0, %v3569
        %3571 = vdwg.mxu0
        %v3572 = vld [vmem:[%s8] sm:$0xff]
        %v3573 = vld [vmem:[%s8 + $0x8] sm:$0xff]
        %v3574 = vld [vmem:[%s8 + $0x10] sm:$0xff]
        %v3575 = vld [vmem:[%s8 + $0x18] sm:$0xff]
        %v3576 = vld [vmem:[%s8 + $0x20] sm:$0xff]
        %v3577 = vld [vmem:[%s8 + $0x28] sm:$0xff]
        %v3578 = vld [vmem:[%s8 + $0x30] sm:$0xff]
        %v3579 = vld [vmem:[%s8 + $0x38] sm:$0xff]
        %v3580 = vld [vmem:[%s8 + $0x40] sm:$0xff]
        %v3581 = vld [vmem:[%s8 + $0x48] sm:$0xff]
        %v3582 = vld [vmem:[%s8 + $0x50] sm:$0xff]
        %v3583 = vld [vmem:[%s8 + $0x58] sm:$0xff]
        %v3584 = vld [vmem:[%s8 + $0x60] sm:$0xff]
        %v3585 = vld [vmem:[%s8 + $0x68] sm:$0xff]
        %v3586 = vld [vmem:[%s8 + $0x70] sm:$0xff]
        %v3587 = vld [vmem:[%s8 + $0x78] sm:$0xff]
        %3589 = vset.pattern.permute.xlu0 0
        %3590 = vperm.xlu0 %3589, %v3525
        %v3591 = vpop.permute.xlu0 %3590
        %3594 = vset.pattern.permute.xlu0 0
        %3595 = vperm.xlu0 %3594, %v3528
        %v3596 = vpop.permute.xlu0 %3595
        %3599 = vset.pattern.permute.xlu0 0
        %3600 = vperm.xlu0 %3599, %v3531
        %v3601 = vpop.permute.xlu0 %3600
        %3604 = vset.pattern.permute.xlu0 0
        %3605 = vperm.xlu0 %3604, %v3534
        %v3606 = vpop.permute.xlu0 %3605
        %3609 = vset.pattern.permute.xlu0 0
        %3610 = vperm.xlu0 %3609, %v3537
        %v3611 = vpop.permute.xlu0 %3610
        %3614 = vset.pattern.permute.xlu0 0
        %3615 = vperm.xlu0 %3614, %v3540
        %v3616 = vpop.permute.xlu0 %3615
        %3619 = vset.pattern.permute.xlu0 0
        %3620 = vperm.xlu0 %3619, %v3543
        %v3621 = vpop.permute.xlu0 %3620
        %3624 = vset.pattern.permute.xlu0 0
        %3625 = vperm.xlu0 %3624, %v3546
        %v3626 = vpop.permute.xlu0 %3625
        %3629 = vset.pattern.permute.xlu0 0
        %3630 = vperm.xlu0 %3629, %v3549
        %v3631 = vpop.permute.xlu0 %3630
        %3634 = vset.pattern.permute.xlu0 0
        %3635 = vperm.xlu0 %3634, %v3552
        %v3636 = vpop.permute.xlu0 %3635
        %3639 = vset.pattern.permute.xlu0 0
        %3640 = vperm.xlu0 %3639, %v3555
        %v3641 = vpop.permute.xlu0 %3640
        %3644 = vset.pattern.permute.xlu0 0
        %3645 = vperm.xlu0 %3644, %v3558
        %v3646 = vpop.permute.xlu0 %3645
        %3649 = vset.pattern.permute.xlu0 0
        %3650 = vperm.xlu0 %3649, %v3561
        %v3651 = vpop.permute.xlu0 %3650
        %3654 = vset.pattern.permute.xlu0 0
        %3655 = vperm.xlu0 %3654, %v3564
        %v3656 = vpop.permute.xlu0 %3655
        %3659 = vset.pattern.permute.xlu0 0
        %3660 = vperm.xlu0 %3659, %v3567
        %v3661 = vpop.permute.xlu0 %3660
        %3664 = vset.pattern.permute.xlu0 0
        %3665 = vperm.xlu0 %3664, %v3570
        %v3666 = vpop.permute.xlu0 %3665
        %v3668 = vperm.slane %v3502, 0
        %v3669 = vadd.f32 %v3591, %v3668
        %v3670 = vadd.f32 %v3596, %v3668
        %v3671 = vadd.f32 %v3601, %v3668
        %v3672 = vadd.f32 %v3606, %v3668
        %v3673 = vadd.f32 %v3611, %v3668
        %v3674 = vadd.f32 %v3616, %v3668
        %v3675 = vadd.f32 %v3621, %v3668
        %v3676 = vadd.f32 %v3626, %v3668
        %v3677 = vadd.f32 %v3631, %v3668
        %v3678 = vadd.f32 %v3636, %v3668
        %v3679 = vadd.f32 %v3641, %v3668
        %v3680 = vadd.f32 %v3646, %v3668
        %v3681 = vadd.f32 %v3651, %v3668
        %v3682 = vadd.f32 %v3656, %v3668
        %v3683 = vadd.f32 %v3661, %v3668
        %v3684 = vadd.f32 %v3666, %v3668
        %vm3685 = vcmp.gt.f32.partialorder %v3669, 0.0
        %vm3686 = vcmp.gt.f32.partialorder %v3670, 0.0
        %vm3687 = vcmp.gt.f32.partialorder %v3671, 0.0
        %vm3688 = vcmp.gt.f32.partialorder %v3672, 0.0
        %vm3689 = vcmp.gt.f32.partialorder %v3673, 0.0
        %vm3690 = vcmp.gt.f32.partialorder %v3674, 0.0
        %vm3691 = vcmp.gt.f32.partialorder %v3675, 0.0
        %vm3692 = vcmp.gt.f32.partialorder %v3676, 0.0
        %vm3693 = vcmp.gt.f32.partialorder %v3677, 0.0
        %vm3694 = vcmp.gt.f32.partialorder %v3678, 0.0
        %vm3695 = vcmp.gt.f32.partialorder %v3679, 0.0
        %vm3696 = vcmp.gt.f32.partialorder %v3680, 0.0
        %vm3697 = vcmp.gt.f32.partialorder %v3681, 0.0
        %vm3698 = vcmp.gt.f32.partialorder %v3682, 0.0
        %vm3699 = vcmp.gt.f32.partialorder %v3683, 0.0
        %vm3700 = vcmp.gt.f32.partialorder %v3684, 0.0
        %v3701 = vmul.f32 %v3669, 0.2
        %v3702 = vmul.f32 %v3670, 0.2
        %v3703 = vmul.f32 %v3671, 0.2
        %v3704 = vmul.f32 %v3672, 0.2
        %v3705 = vmul.f32 %v3673, 0.2
        %v3706 = vmul.f32 %v3674, 0.2
        %v3707 = vmul.f32 %v3675, 0.2
        %v3708 = vmul.f32 %v3676, 0.2
        %v3709 = vmul.f32 %v3677, 0.2
        %v3710 = vmul.f32 %v3678, 0.2
        %v3711 = vmul.f32 %v3679, 0.2
        %v3712 = vmul.f32 %v3680, 0.2
        %v3713 = vmul.f32 %v3681, 0.2
        %v3714 = vmul.f32 %v3682, 0.2
        %v3715 = vmul.f32 %v3683, 0.2
        %v3716 = vmul.f32 %v3684, 0.2
        %v3717 = vsel %vm3685, %v3669, %v3701
        %v3718 = vsel %vm3686, %v3670, %v3702
        %v3719 = vsel %vm3687, %v3671, %v3703
        %v3720 = vsel %vm3688, %v3672, %v3704
        %v3721 = vsel %vm3689, %v3673, %v3705
        %v3722 = vsel %vm3690, %v3674, %v3706
        %v3723 = vsel %vm3691, %v3675, %v3707
        %v3724 = vsel %vm3692, %v3676, %v3708
        %v3725 = vsel %vm3693, %v3677, %v3709
        %v3726 = vsel %vm3694, %v3678, %v3710
        %v3727 = vsel %vm3695, %v3679, %v3711
        %v3728 = vsel %vm3696, %v3680, %v3712
        %v3729 = vsel %vm3697, %v3681, %v3713
        %v3730 = vsel %vm3698, %v3682, %v3714
        %v3731 = vsel %vm3699, %v3683, %v3715
        %v3732 = vsel %vm3700, %v3684, %v3716
        %v3733 = vadd.f32 %v3717, %v565
        %v3734 = vadd.f32 %v3718, %v566
        %v3735 = vadd.f32 %v3719, %v567
        %v3736 = vadd.f32 %v3720, %v568
        %v3737 = vadd.f32 %v3721, %v569
        %v3738 = vadd.f32 %v3722, %v570
        %v3739 = vadd.f32 %v3723, %v571
        %v3740 = vadd.f32 %v3724, %v572
        %v3741 = vadd.f32 %v3725, %v573
        %v3742 = vadd.f32 %v3726, %v574
        %v3743 = vadd.f32 %v3727, %v575
        %v3744 = vadd.f32 %v3728, %v576
        %v3745 = vadd.f32 %v3729, %v577
        %v3746 = vadd.f32 %v3730, %v578
        %v3747 = vadd.f32 %v3731, %v579
        %v3748 = vadd.f32 %v3732, %v580
        %3749 = vmax.xlane.f32.xlu0 %v3733
        %v3750 = vpop.xlane.xlu0 %3749
        %3751 = vmax.xlane.f32.xlu0 %v3734
        %v3752 = vpop.xlane.xlu0 %3751
        %3753 = vmax.xlane.f32.xlu0 %v3735
        %v3754 = vpop.xlane.xlu0 %3753
        %3755 = vmax.xlane.f32.xlu0 %v3736
        %v3756 = vpop.xlane.xlu0 %3755
        %3757 = vmax.xlane.f32.xlu0 %v3737
        %v3758 = vpop.xlane.xlu0 %3757
        %3759 = vmax.xlane.f32.xlu0 %v3738
        %v3760 = vpop.xlane.xlu0 %3759
        %3761 = vmax.xlane.f32.xlu0 %v3739
        %v3762 = vpop.xlane.xlu0 %3761
        %3763 = vmax.xlane.f32.xlu0 %v3740
        %v3764 = vpop.xlane.xlu0 %3763
        %3765 = vmax.xlane.f32.xlu0 %v3741
        %v3766 = vpop.xlane.xlu0 %3765
        %3767 = vmax.xlane.f32.xlu0 %v3742
        %v3768 = vpop.xlane.xlu0 %3767
        %3769 = vmax.xlane.f32.xlu0 %v3743
        %v3770 = vpop.xlane.xlu0 %3769
        %3771 = vmax.xlane.f32.xlu0 %v3744
        %v3772 = vpop.xlane.xlu0 %3771
        %3773 = vmax.xlane.f32.xlu0 %v3745
        %v3774 = vpop.xlane.xlu0 %3773
        %3775 = vmax.xlane.f32.xlu0 %v3746
        %v3776 = vpop.xlane.xlu0 %3775
        %3777 = vmax.xlane.f32.xlu0 %v3747
        %v3778 = vpop.xlane.xlu0 %3777
        %3779 = vmax.xlane.f32.xlu0 %v3748
        %v3780 = vpop.xlane.xlu0 %3779
        %v3781 = vsub.f32 %v3733, %v3750
        %v3782 = vsub.f32 %v3734, %v3752
        %v3783 = vsub.f32 %v3735, %v3754
        %v3784 = vsub.f32 %v3736, %v3756
        %v3785 = vsub.f32 %v3737, %v3758
        %v3786 = vsub.f32 %v3738, %v3760
        %v3787 = vsub.f32 %v3739, %v3762
        %v3788 = vsub.f32 %v3740, %v3764
        %v3789 = vsub.f32 %v3741, %v3766
        %v3790 = vsub.f32 %v3742, %v3768
        %v3791 = vsub.f32 %v3743, %v3770
        %v3792 = vsub.f32 %v3744, %v3772
        %v3793 = vsub.f32 %v3745, %v3774
        %v3794 = vsub.f32 %v3746, %v3776
        %v3795 = vsub.f32 %v3747, %v3778
        %v3796 = vsub.f32 %v3748, %v3780
        %v3797 = vmul.f32 %v3781, 1.442695
        %v3798 = vpow.pop %v3797
        %v3799 = vmul.f32 %v3782, 1.442695
        %v3800 = vpow.pop %v3799
        %v3801 = vmul.f32 %v3783, 1.442695
        %v3802 = vpow.pop %v3801
        %v3803 = vmul.f32 %v3784, 1.442695
        %v3804 = vpow.pop %v3803
        %v3805 = vmul.f32 %v3785, 1.442695
        %v3806 = vpow.pop %v3805
        %v3807 = vmul.f32 %v3786, 1.442695
        %v3808 = vpow.pop %v3807
        %v3809 = vmul.f32 %v3787, 1.442695
        %v3810 = vpow.pop %v3809
        %v3811 = vmul.f32 %v3788, 1.442695
        %v3812 = vpow.pop %v3811
        %v3813 = vmul.f32 %v3789, 1.442695
        %v3814 = vpow.pop %v3813
        %v3815 = vmul.f32 %v3790, 1.442695
        %v3816 = vpow.pop %v3815
        %v3817 = vmul.f32 %v3791, 1.442695
        %v3818 = vpow.pop %v3817
        %v3819 = vmul.f32 %v3792, 1.442695
        %v3820 = vpow.pop %v3819
        %v3821 = vmul.f32 %v3793, 1.442695
        %v3822 = vpow.pop %v3821
        %v3823 = vmul.f32 %v3794, 1.442695
        %v3824 = vpow.pop %v3823
        %v3825 = vmul.f32 %v3795, 1.442695
        %v3826 = vpow.pop %v3825
        %v3827 = vmul.f32 %v3796, 1.442695
        %v3828 = vpow.pop %v3827
        %3829 = vadd.xlane.f32.xlu0 %v3798
        %v3830 = vpop.xlane.xlu0 %3829
        %3831 = vadd.xlane.f32.xlu0 %v3800
        %v3832 = vpop.xlane.xlu0 %3831
        %3833 = vadd.xlane.f32.xlu0 %v3802
        %v3834 = vpop.xlane.xlu0 %3833
        %3835 = vadd.xlane.f32.xlu0 %v3804
        %v3836 = vpop.xlane.xlu0 %3835
        %3837 = vadd.xlane.f32.xlu0 %v3806
        %v3838 = vpop.xlane.xlu0 %3837
        %3839 = vadd.xlane.f32.xlu0 %v3808
        %v3840 = vpop.xlane.xlu0 %3839
        %3841 = vadd.xlane.f32.xlu0 %v3810
        %v3842 = vpop.xlane.xlu0 %3841
        %3843 = vadd.xlane.f32.xlu0 %v3812
        %v3844 = vpop.xlane.xlu0 %3843
        %3845 = vadd.xlane.f32.xlu0 %v3814
        %v3846 = vpop.xlane.xlu0 %3845
        %3847 = vadd.xlane.f32.xlu0 %v3816
        %v3848 = vpop.xlane.xlu0 %3847
        %3849 = vadd.xlane.f32.xlu0 %v3818
        %v3850 = vpop.xlane.xlu0 %3849
        %3851 = vadd.xlane.f32.xlu0 %v3820
        %v3852 = vpop.xlane.xlu0 %3851
        %3853 = vadd.xlane.f32.xlu0 %v3822
        %v3854 = vpop.xlane.xlu0 %3853
        %3855 = vadd.xlane.f32.xlu0 %v3824
        %v3856 = vpop.xlane.xlu0 %3855
        %3857 = vadd.xlane.f32.xlu0 %v3826
        %v3858 = vpop.xlane.xlu0 %3857
        %3859 = vadd.xlane.f32.xlu0 %v3828
        %v3860 = vpop.xlane.xlu0 %3859
        %v3861 = vrcp.pop %v3830
        %v3862 = vrcp.pop %v3832
        %v3863 = vrcp.pop %v3834
        %v3864 = vrcp.pop %v3836
        %v3865 = vrcp.pop %v3838
        %v3866 = vrcp.pop %v3840
        %v3867 = vrcp.pop %v3842
        %v3868 = vrcp.pop %v3844
        %v3869 = vrcp.pop %v3846
        %v3870 = vrcp.pop %v3848
        %v3871 = vrcp.pop %v3850
        %v3872 = vrcp.pop %v3852
        %v3873 = vrcp.pop %v3854
        %v3874 = vrcp.pop %v3856
        %v3875 = vrcp.pop %v3858
        %v3876 = vrcp.pop %v3860
        %v3877 = vmul.f32 %v3798, %v3861
        %v3878 = vmul.f32 %v3800, %v3862
        %v3879 = vmul.f32 %v3802, %v3863
        %v3880 = vmul.f32 %v3804, %v3864
        %v3881 = vmul.f32 %v3806, %v3865
        %v3882 = vmul.f32 %v3808, %v3866
        %v3883 = vmul.f32 %v3810, %v3867
        %v3884 = vmul.f32 %v3812, %v3868
        %v3885 = vmul.f32 %v3814, %v3869
        %v3886 = vmul.f32 %v3816, %v3870
        %v3887 = vmul.f32 %v3818, %v3871
        %v3888 = vmul.f32 %v3820, %v3872
        %v3889 = vmul.f32 %v3822, %v3873
        %v3890 = vmul.f32 %v3824, %v3874
        %v3891 = vmul.f32 %v3826, %v3875
        %v3892 = vmul.f32 %v3828, %v3876
        %3909 = vrot.lane.b32.xlu0 %v3572, 16
        %v3910 = vpop.permute.xlu0 %3909
        %3911 = vrot.lane.b32.xlu0 %v3573, 16
        %v3912 = vpop.permute.xlu0 %3911
        %3913 = vrot.lane.b32.xlu0 %v3574, 16
        %v3914 = vpop.permute.xlu0 %3913
        %3915 = vrot.lane.b32.xlu0 %v3575, 16
        %v3916 = vpop.permute.xlu0 %3915
        %3917 = vrot.lane.b32.xlu0 %v3576, 16
        %v3918 = vpop.permute.xlu0 %3917
        %3919 = vrot.lane.b32.xlu0 %v3577, 16
        %v3920 = vpop.permute.xlu0 %3919
        %3921 = vrot.lane.b32.xlu0 %v3578, 16
        %v3922 = vpop.permute.xlu0 %3921
        %3923 = vrot.lane.b32.xlu0 %v3579, 16
        %v3924 = vpop.permute.xlu0 %3923
        %3925 = vrot.lane.b32.xlu0 %v3580, 16
        %v3926 = vpop.permute.xlu0 %3925
        %3927 = vrot.lane.b32.xlu0 %v3581, 16
        %v3928 = vpop.permute.xlu0 %3927
        %3929 = vrot.lane.b32.xlu0 %v3582, 16
        %v3930 = vpop.permute.xlu0 %3929
        %3931 = vrot.lane.b32.xlu0 %v3583, 16
        %v3932 = vpop.permute.xlu0 %3931
        %3933 = vrot.lane.b32.xlu0 %v3584, 16
        %v3934 = vpop.permute.xlu0 %3933
        %3935 = vrot.lane.b32.xlu0 %v3585, 16
        %v3936 = vpop.permute.xlu0 %3935
        %3937 = vrot.lane.b32.xlu0 %v3586, 16
        %v3938 = vpop.permute.xlu0 %3937
        %3939 = vrot.lane.b32.xlu0 %v3587, 16
        %v3940 = vpop.permute.xlu0 %3939
        %v3957 = vsel %vm2643, %v3384, %v3910
        %v3958 = vsel %vm2643, %v3387, %v3912
        %v3959 = vsel %vm2643, %v3390, %v3914
        %v3960 = vsel %vm2643, %v3393, %v3916
        %v3961 = vsel %vm2643, %v3396, %v3918
        %v3962 = vsel %vm2643, %v3399, %v3920
        %v3963 = vsel %vm2643, %v3402, %v3922
        %v3964 = vsel %vm2643, %v3405, %v3924
        %v3965 = vsel %vm2643, %v3408, %v3926
        %v3966 = vsel %vm2643, %v3411, %v3928
        %v3967 = vsel %vm2643, %v3414, %v3930
        %v3968 = vsel %vm2643, %v3417, %v3932
        %v3969 = vsel %vm2643, %v3420, %v3934
        %v3970 = vsel %vm2643, %v3423, %v3936
        %v3971 = vsel %vm2643, %v3426, %v3938
        %v3972 = vsel %vm2643, %v3429, %v3940
        %3973 = vmatpush.msra.mxu0 %v3972
        %3974 = vmatpush.msra.mxu0 %v3971
        %3975 = vmatpush.msra.mxu0 %v3970
        %3976 = vmatpush.msra.mxu0 %v3969
        %3977 = vmatpush.msra.mxu0 %v3968
        %3978 = vmatpush.msra.mxu0 %v3967
        %3979 = vmatpush.msra.mxu0 %v3966
        %3980 = vmatpush.msra.mxu0 %v3965
        %3981 = vmatpush.msra.mxu0 %v3964
        %3982 = vmatpush.msra.mxu0 %v3963
        %3983 = vmatpush.msra.mxu0 %v3962
        %3984 = vmatpush.msra.mxu0 %v3961
        %3985 = vmatpush.msra.mxu0 %v3960
        %3986 = vmatpush.msra.mxu0 %v3959
        %3987 = vmatpush.msra.mxu0 %v3958
        %3988 = vmatpush.msra.mxu0 %v3957
        %3989 = vmatmul.f32.gmra.mxu0 %v3877
        %v3990 = vpop.f32.mrf.mxu0
        %v3991 = vadd.f32 0.0, %v3990
        %3992 = vmatmul.f32.gmra.mxu0 %v3878
        %v3993 = vpop.f32.mrf.mxu0
        %v3994 = vadd.f32 0.0, %v3993
        %3995 = vmatmul.f32.gmra.mxu0 %v3879
        %v3996 = vpop.f32.mrf.mxu0
        %v3997 = vadd.f32 0.0, %v3996
        %3998 = vmatmul.f32.gmra.mxu0 %v3880
        %v3999 = vpop.f32.mrf.mxu0
        %v4000 = vadd.f32 0.0, %v3999
        %4001 = vmatmul.f32.gmra.mxu0 %v3881
        %v4002 = vpop.f32.mrf.mxu0
        %v4003 = vadd.f32 0.0, %v4002
        %4004 = vmatmul.f32.gmra.mxu0 %v3882
        %v4005 = vpop.f32.mrf.mxu0
        %v4006 = vadd.f32 0.0, %v4005
        %4007 = vmatmul.f32.gmra.mxu0 %v3883
        %v4008 = vpop.f32.mrf.mxu0
        %v4009 = vadd.f32 0.0, %v4008
        %4010 = vmatmul.f32.gmra.mxu0 %v3884
        %v4011 = vpop.f32.mrf.mxu0
        %v4012 = vadd.f32 0.0, %v4011
        %4013 = vmatmul.f32.gmra.mxu0 %v3885
        %v4014 = vpop.f32.mrf.mxu0
        %v4015 = vadd.f32 0.0, %v4014
        %4016 = vmatmul.f32.gmra.mxu0 %v3886
        %v4017 = vpop.f32.mrf.mxu0
        %v4018 = vadd.f32 0.0, %v4017
        %4019 = vmatmul.f32.gmra.mxu0 %v3887
        %v4020 = vpop.f32.mrf.mxu0
        %v4021 = vadd.f32 0.0, %v4020
        %4022 = vmatmul.f32.gmra.mxu0 %v3888
        %v4023 = vpop.f32.mrf.mxu0
        %v4024 = vadd.f32 0.0, %v4023
        %4025 = vmatmul.f32.gmra.mxu0 %v3889
        %v4026 = vpop.f32.mrf.mxu0
        %v4027 = vadd.f32 0.0, %v4026
        %4028 = vmatmul.f32.gmra.mxu0 %v3890
        %v4029 = vpop.f32.mrf.mxu0
        %v4030 = vadd.f32 0.0, %v4029
        %4031 = vmatmul.f32.gmra.mxu0 %v3891
        %v4032 = vpop.f32.mrf.mxu0
        %v4033 = vadd.f32 0.0, %v4032
        %4034 = vmatmul.f32.gmra.mxu0 %v3892
        %v4035 = vpop.f32.mrf.mxu0
        %v4036 = vadd.f32 0.0, %v4035
        %4037 = vdwg.mxu0
        %4038 = vrot.lane.b32.xlu0 %v2678, 96
        %v4039 = vpop.permute.xlu0 %4038
        %v4041 = vadd.f32 %v3991, %v4039
        %v4042 = vadd.f32 %v3994, %v4039
        %v4043 = vadd.f32 %v3997, %v4039
        %v4044 = vadd.f32 %v4000, %v4039
        %v4045 = vadd.f32 %v4003, %v4039
        %v4046 = vadd.f32 %v4006, %v4039
        %v4047 = vadd.f32 %v4009, %v4039
        %v4048 = vadd.f32 %v4012, %v4039
        %v4049 = vadd.f32 %v4015, %v4039
        %v4050 = vadd.f32 %v4018, %v4039
        %v4051 = vadd.f32 %v4021, %v4039
        %v4052 = vadd.f32 %v4024, %v4039
        %v4053 = vadd.f32 %v4027, %v4039
        %v4054 = vadd.f32 %v4030, %v4039
        %v4055 = vadd.f32 %v4033, %v4039
        %v4056 = vadd.f32 %v4036, %v4039
        %4057 = vset.pattern.permute.xlu0 1
        %4058 = vperm.xlu0 %4057, %v3525
        %v4059 = vpop.permute.xlu0 %4058
        %4061 = vset.pattern.permute.xlu0 1
        %4062 = vperm.xlu0 %4061, %v3528
        %v4063 = vpop.permute.xlu0 %4062
        %4065 = vset.pattern.permute.xlu0 1
        %4066 = vperm.xlu0 %4065, %v3531
        %v4067 = vpop.permute.xlu0 %4066
        %4069 = vset.pattern.permute.xlu0 1
        %4070 = vperm.xlu0 %4069, %v3534
        %v4071 = vpop.permute.xlu0 %4070
        %4073 = vset.pattern.permute.xlu0 1
        %4074 = vperm.xlu0 %4073, %v3537
        %v4075 = vpop.permute.xlu0 %4074
        %4077 = vset.pattern.permute.xlu0 1
        %4078 = vperm.xlu0 %4077, %v3540
        %v4079 = vpop.permute.xlu0 %4078
        %4081 = vset.pattern.permute.xlu0 1
        %4082 = vperm.xlu0 %4081, %v3543
        %v4083 = vpop.permute.xlu0 %4082
        %4085 = vset.pattern.permute.xlu0 1
        %4086 = vperm.xlu0 %4085, %v3546
        %v4087 = vpop.permute.xlu0 %4086
        %4089 = vset.pattern.permute.xlu0 1
        %4090 = vperm.xlu0 %4089, %v3549
        %v4091 = vpop.permute.xlu0 %4090
        %4093 = vset.pattern.permute.xlu0 1
        %4094 = vperm.xlu0 %4093, %v3552
        %v4095 = vpop.permute.xlu0 %4094
        %4097 = vset.pattern.permute.xlu0 1
        %4098 = vperm.xlu0 %4097, %v3555
        %v4099 = vpop.permute.xlu0 %4098
        %4101 = vset.pattern.permute.xlu0 1
        %4102 = vperm.xlu0 %4101, %v3558
        %v4103 = vpop.permute.xlu0 %4102
        %4105 = vset.pattern.permute.xlu0 1
        %4106 = vperm.xlu0 %4105, %v3561
        %v4107 = vpop.permute.xlu0 %4106
        %4109 = vset.pattern.permute.xlu0 1
        %4110 = vperm.xlu0 %4109, %v3564
        %v4111 = vpop.permute.xlu0 %4110
        %4113 = vset.pattern.permute.xlu0 1
        %4114 = vperm.xlu0 %4113, %v3567
        %v4115 = vpop.permute.xlu0 %4114
        %4117 = vset.pattern.permute.xlu0 1
        %4118 = vperm.xlu0 %4117, %v3570
        %v4119 = vpop.permute.xlu0 %4118
        %v4121 = vperm.slane %v3502, 1
        %v4122 = vadd.f32 %v4059, %v4121
        %v4123 = vadd.f32 %v4063, %v4121
        %v4124 = vadd.f32 %v4067, %v4121
        %v4125 = vadd.f32 %v4071, %v4121
        %v4126 = vadd.f32 %v4075, %v4121
        %v4127 = vadd.f32 %v4079, %v4121
        %v4128 = vadd.f32 %v4083, %v4121
        %v4129 = vadd.f32 %v4087, %v4121
        %v4130 = vadd.f32 %v4091, %v4121
        %v4131 = vadd.f32 %v4095, %v4121
        %v4132 = vadd.f32 %v4099, %v4121
        %v4133 = vadd.f32 %v4103, %v4121
        %v4134 = vadd.f32 %v4107, %v4121
        %v4135 = vadd.f32 %v4111, %v4121
        %v4136 = vadd.f32 %v4115, %v4121
        %v4137 = vadd.f32 %v4119, %v4121
        %vm4138 = vcmp.gt.f32.partialorder %v4122, 0.0
        %vm4139 = vcmp.gt.f32.partialorder %v4123, 0.0
        %vm4140 = vcmp.gt.f32.partialorder %v4124, 0.0
        %vm4141 = vcmp.gt.f32.partialorder %v4125, 0.0
        %vm4142 = vcmp.gt.f32.partialorder %v4126, 0.0
        %vm4143 = vcmp.gt.f32.partialorder %v4127, 0.0
        %vm4144 = vcmp.gt.f32.partialorder %v4128, 0.0
        %vm4145 = vcmp.gt.f32.partialorder %v4129, 0.0
        %vm4146 = vcmp.gt.f32.partialorder %v4130, 0.0
        %vm4147 = vcmp.gt.f32.partialorder %v4131, 0.0
        %vm4148 = vcmp.gt.f32.partialorder %v4132, 0.0
        %vm4149 = vcmp.gt.f32.partialorder %v4133, 0.0
        %vm4150 = vcmp.gt.f32.partialorder %v4134, 0.0
        %vm4151 = vcmp.gt.f32.partialorder %v4135, 0.0
        %vm4152 = vcmp.gt.f32.partialorder %v4136, 0.0
        %vm4153 = vcmp.gt.f32.partialorder %v4137, 0.0
        %v4154 = vmul.f32 %v4122, 0.2
        %v4155 = vmul.f32 %v4123, 0.2
        %v4156 = vmul.f32 %v4124, 0.2
        %v4157 = vmul.f32 %v4125, 0.2
        %v4158 = vmul.f32 %v4126, 0.2
        %v4159 = vmul.f32 %v4127, 0.2
        %v4160 = vmul.f32 %v4128, 0.2
        %v4161 = vmul.f32 %v4129, 0.2
        %v4162 = vmul.f32 %v4130, 0.2
        %v4163 = vmul.f32 %v4131, 0.2
        %v4164 = vmul.f32 %v4132, 0.2
        %v4165 = vmul.f32 %v4133, 0.2
        %v4166 = vmul.f32 %v4134, 0.2
        %v4167 = vmul.f32 %v4135, 0.2
        %v4168 = vmul.f32 %v4136, 0.2
        %v4169 = vmul.f32 %v4137, 0.2
        %v4170 = vsel %vm4138, %v4122, %v4154
        %v4171 = vsel %vm4139, %v4123, %v4155
        %v4172 = vsel %vm4140, %v4124, %v4156
        %v4173 = vsel %vm4141, %v4125, %v4157
        %v4174 = vsel %vm4142, %v4126, %v4158
        %v4175 = vsel %vm4143, %v4127, %v4159
        %v4176 = vsel %vm4144, %v4128, %v4160
        %v4177 = vsel %vm4145, %v4129, %v4161
        %v4178 = vsel %vm4146, %v4130, %v4162
        %v4179 = vsel %vm4147, %v4131, %v4163
        %v4180 = vsel %vm4148, %v4132, %v4164
        %v4181 = vsel %vm4149, %v4133, %v4165
        %v4182 = vsel %vm4150, %v4134, %v4166
        %v4183 = vsel %vm4151, %v4135, %v4167
        %v4184 = vsel %vm4152, %v4136, %v4168
        %v4185 = vsel %vm4153, %v4137, %v4169
        %v4186 = vadd.f32 %v4170, %v565
        %v4187 = vadd.f32 %v4171, %v566
        %v4188 = vadd.f32 %v4172, %v567
        %v4189 = vadd.f32 %v4173, %v568
        %v4190 = vadd.f32 %v4174, %v569
        %v4191 = vadd.f32 %v4175, %v570
        %v4192 = vadd.f32 %v4176, %v571
        %v4193 = vadd.f32 %v4177, %v572
        %v4194 = vadd.f32 %v4178, %v573
        %v4195 = vadd.f32 %v4179, %v574
        %v4196 = vadd.f32 %v4180, %v575
        %v4197 = vadd.f32 %v4181, %v576
        %v4198 = vadd.f32 %v4182, %v577
        %v4199 = vadd.f32 %v4183, %v578
        %v4200 = vadd.f32 %v4184, %v579
        %v4201 = vadd.f32 %v4185, %v580
        %4202 = vmax.xlane.f32.xlu0 %v4186
        %v4203 = vpop.xlane.xlu0 %4202
        %4204 = vmax.xlane.f32.xlu0 %v4187
        %v4205 = vpop.xlane.xlu0 %4204
        %4206 = vmax.xlane.f32.xlu0 %v4188
        %v4207 = vpop.xlane.xlu0 %4206
        %4208 = vmax.xlane.f32.xlu0 %v4189
        %v4209 = vpop.xlane.xlu0 %4208
        %4210 = vmax.xlane.f32.xlu0 %v4190
        %v4211 = vpop.xlane.xlu0 %4210
        %4212 = vmax.xlane.f32.xlu0 %v4191
        %v4213 = vpop.xlane.xlu0 %4212
        %4214 = vmax.xlane.f32.xlu0 %v4192
        %v4215 = vpop.xlane.xlu0 %4214
        %4216 = vmax.xlane.f32.xlu0 %v4193
        %v4217 = vpop.xlane.xlu0 %4216
        %4218 = vmax.xlane.f32.xlu0 %v4194
        %v4219 = vpop.xlane.xlu0 %4218
        %4220 = vmax.xlane.f32.xlu0 %v4195
        %v4221 = vpop.xlane.xlu0 %4220
        %4222 = vmax.xlane.f32.xlu0 %v4196
        %v4223 = vpop.xlane.xlu0 %4222
        %4224 = vmax.xlane.f32.xlu0 %v4197
        %v4225 = vpop.xlane.xlu0 %4224
        %4226 = vmax.xlane.f32.xlu0 %v4198
        %v4227 = vpop.xlane.xlu0 %4226
        %4228 = vmax.xlane.f32.xlu0 %v4199
        %v4229 = vpop.xlane.xlu0 %4228
        %4230 = vmax.xlane.f32.xlu0 %v4200
        %v4231 = vpop.xlane.xlu0 %4230
        %4232 = vmax.xlane.f32.xlu0 %v4201
        %v4233 = vpop.xlane.xlu0 %4232
        %v4234 = vsub.f32 %v4186, %v4203
        %v4235 = vsub.f32 %v4187, %v4205
        %v4236 = vsub.f32 %v4188, %v4207
        %v4237 = vsub.f32 %v4189, %v4209
        %v4238 = vsub.f32 %v4190, %v4211
        %v4239 = vsub.f32 %v4191, %v4213
        %v4240 = vsub.f32 %v4192, %v4215
        %v4241 = vsub.f32 %v4193, %v4217
        %v4242 = vsub.f32 %v4194, %v4219
        %v4243 = vsub.f32 %v4195, %v4221
        %v4244 = vsub.f32 %v4196, %v4223
        %v4245 = vsub.f32 %v4197, %v4225
        %v4246 = vsub.f32 %v4198, %v4227
        %v4247 = vsub.f32 %v4199, %v4229
        %v4248 = vsub.f32 %v4200, %v4231
        %v4249 = vsub.f32 %v4201, %v4233
        %v4250 = vmul.f32 %v4234, 1.442695
        %v4251 = vpow.pop %v4250
        %v4252 = vmul.f32 %v4235, 1.442695
        %v4253 = vpow.pop %v4252
        %v4254 = vmul.f32 %v4236, 1.442695
        %v4255 = vpow.pop %v4254
        %v4256 = vmul.f32 %v4237, 1.442695
        %v4257 = vpow.pop %v4256
        %v4258 = vmul.f32 %v4238, 1.442695
        %v4259 = vpow.pop %v4258
        %v4260 = vmul.f32 %v4239, 1.442695
        %v4261 = vpow.pop %v4260
        %v4262 = vmul.f32 %v4240, 1.442695
        %v4263 = vpow.pop %v4262
        %v4264 = vmul.f32 %v4241, 1.442695
        %v4265 = vpow.pop %v4264
        %v4266 = vmul.f32 %v4242, 1.442695
        %v4267 = vpow.pop %v4266
        %v4268 = vmul.f32 %v4243, 1.442695
        %v4269 = vpow.pop %v4268
        %v4270 = vmul.f32 %v4244, 1.442695
        %v4271 = vpow.pop %v4270
        %v4272 = vmul.f32 %v4245, 1.442695
        %v4273 = vpow.pop %v4272
        %v4274 = vmul.f32 %v4246, 1.442695
        %v4275 = vpow.pop %v4274
        %v4276 = vmul.f32 %v4247, 1.442695
        %v4277 = vpow.pop %v4276
        %v4278 = vmul.f32 %v4248, 1.442695
        %v4279 = vpow.pop %v4278
        %v4280 = vmul.f32 %v4249, 1.442695
        %v4281 = vpow.pop %v4280
        %4282 = vadd.xlane.f32.xlu0 %v4251
        %v4283 = vpop.xlane.xlu0 %4282
        %4284 = vadd.xlane.f32.xlu0 %v4253
        %v4285 = vpop.xlane.xlu0 %4284
        %4286 = vadd.xlane.f32.xlu0 %v4255
        %v4287 = vpop.xlane.xlu0 %4286
        %4288 = vadd.xlane.f32.xlu0 %v4257
        %v4289 = vpop.xlane.xlu0 %4288
        %4290 = vadd.xlane.f32.xlu0 %v4259
        %v4291 = vpop.xlane.xlu0 %4290
        %4292 = vadd.xlane.f32.xlu0 %v4261
        %v4293 = vpop.xlane.xlu0 %4292
        %4294 = vadd.xlane.f32.xlu0 %v4263
        %v4295 = vpop.xlane.xlu0 %4294
        %4296 = vadd.xlane.f32.xlu0 %v4265
        %v4297 = vpop.xlane.xlu0 %4296
        %4298 = vadd.xlane.f32.xlu0 %v4267
        %v4299 = vpop.xlane.xlu0 %4298
        %4300 = vadd.xlane.f32.xlu0 %v4269
        %v4301 = vpop.xlane.xlu0 %4300
        %4302 = vadd.xlane.f32.xlu0 %v4271
        %v4303 = vpop.xlane.xlu0 %4302
        %4304 = vadd.xlane.f32.xlu0 %v4273
        %v4305 = vpop.xlane.xlu0 %4304
        %4306 = vadd.xlane.f32.xlu0 %v4275
        %v4307 = vpop.xlane.xlu0 %4306
        %4308 = vadd.xlane.f32.xlu0 %v4277
        %v4309 = vpop.xlane.xlu0 %4308
        %4310 = vadd.xlane.f32.xlu0 %v4279
        %v4311 = vpop.xlane.xlu0 %4310
        %4312 = vadd.xlane.f32.xlu0 %v4281
        %v4313 = vpop.xlane.xlu0 %4312
        %v4314 = vrcp.pop %v4283
        %v4315 = vrcp.pop %v4285
        %v4316 = vrcp.pop %v4287
        %v4317 = vrcp.pop %v4289
        %v4318 = vrcp.pop %v4291
        %v4319 = vrcp.pop %v4293
        %v4320 = vrcp.pop %v4295
        %v4321 = vrcp.pop %v4297
        %v4322 = vrcp.pop %v4299
        %v4323 = vrcp.pop %v4301
        %v4324 = vrcp.pop %v4303
        %v4325 = vrcp.pop %v4305
        %v4326 = vrcp.pop %v4307
        %v4327 = vrcp.pop %v4309
        %v4328 = vrcp.pop %v4311
        %v4329 = vrcp.pop %v4313
        %v4330 = vmul.f32 %v4251, %v4314
        %v4331 = vmul.f32 %v4253, %v4315
        %v4332 = vmul.f32 %v4255, %v4316
        %v4333 = vmul.f32 %v4257, %v4317
        %v4334 = vmul.f32 %v4259, %v4318
        %v4335 = vmul.f32 %v4261, %v4319
        %v4336 = vmul.f32 %v4263, %v4320
        %v4337 = vmul.f32 %v4265, %v4321
        %v4338 = vmul.f32 %v4267, %v4322
        %v4339 = vmul.f32 %v4269, %v4323
        %v4340 = vmul.f32 %v4271, %v4324
        %v4341 = vmul.f32 %v4273, %v4325
        %v4342 = vmul.f32 %v4275, %v4326
        %v4343 = vmul.f32 %v4277, %v4327
        %v4344 = vmul.f32 %v4279, %v4328
        %v4345 = vmul.f32 %v4281, %v4329
        %4346 = vrot.lane.b32.xlu0 %v3384, 112
        %v4347 = vpop.permute.xlu0 %4346
        %4348 = vrot.lane.b32.xlu0 %v3387, 112
        %v4349 = vpop.permute.xlu0 %4348
        %4350 = vrot.lane.b32.xlu0 %v3390, 112
        %v4351 = vpop.permute.xlu0 %4350
        %4352 = vrot.lane.b32.xlu0 %v3393, 112
        %v4353 = vpop.permute.xlu0 %4352
        %4354 = vrot.lane.b32.xlu0 %v3396, 112
        %v4355 = vpop.permute.xlu0 %4354
        %4356 = vrot.lane.b32.xlu0 %v3399, 112
        %v4357 = vpop.permute.xlu0 %4356
        %4358 = vrot.lane.b32.xlu0 %v3402, 112
        %v4359 = vpop.permute.xlu0 %4358
        %4360 = vrot.lane.b32.xlu0 %v3405, 112
        %v4361 = vpop.permute.xlu0 %4360
        %4362 = vrot.lane.b32.xlu0 %v3408, 112
        %v4363 = vpop.permute.xlu0 %4362
        %4364 = vrot.lane.b32.xlu0 %v3411, 112
        %v4365 = vpop.permute.xlu0 %4364
        %4366 = vrot.lane.b32.xlu0 %v3414, 112
        %v4367 = vpop.permute.xlu0 %4366
        %4368 = vrot.lane.b32.xlu0 %v3417, 112
        %v4369 = vpop.permute.xlu0 %4368
        %4370 = vrot.lane.b32.xlu0 %v3420, 112
        %v4371 = vpop.permute.xlu0 %4370
        %4372 = vrot.lane.b32.xlu0 %v3423, 112
        %v4373 = vpop.permute.xlu0 %4372
        %4374 = vrot.lane.b32.xlu0 %v3426, 112
        %v4375 = vpop.permute.xlu0 %4374
        %4376 = vrot.lane.b32.xlu0 %v3429, 112
        %v4377 = vpop.permute.xlu0 %4376
        %v4394 = vsel %vm2643, %v4347, %v3910
        %v4395 = vsel %vm2643, %v4349, %v3912
        %v4396 = vsel %vm2643, %v4351, %v3914
        %v4397 = vsel %vm2643, %v4353, %v3916
        %v4398 = vsel %vm2643, %v4355, %v3918
        %v4399 = vsel %vm2643, %v4357, %v3920
        %v4400 = vsel %vm2643, %v4359, %v3922
        %v4401 = vsel %vm2643, %v4361, %v3924
        %v4402 = vsel %vm2643, %v4363, %v3926
        %v4403 = vsel %vm2643, %v4365, %v3928
        %v4404 = vsel %vm2643, %v4367, %v3930
        %v4405 = vsel %vm2643, %v4369, %v3932
        %v4406 = vsel %vm2643, %v4371, %v3934
        %v4407 = vsel %vm2643, %v4373, %v3936
        %v4408 = vsel %vm2643, %v4375, %v3938
        %v4409 = vsel %vm2643, %v4377, %v3940
        %4410 = vmatpush.msra.mxu0 %v4409
        %4411 = vmatpush.msra.mxu0 %v4408
        %4412 = vmatpush.msra.mxu0 %v4407
        %4413 = vmatpush.msra.mxu0 %v4406
        %4414 = vmatpush.msra.mxu0 %v4405
        %4415 = vmatpush.msra.mxu0 %v4404
        %4416 = vmatpush.msra.mxu0 %v4403
        %4417 = vmatpush.msra.mxu0 %v4402
        %4418 = vmatpush.msra.mxu0 %v4401
        %4419 = vmatpush.msra.mxu0 %v4400
        %4420 = vmatpush.msra.mxu0 %v4399
        %4421 = vmatpush.msra.mxu0 %v4398
        %4422 = vmatpush.msra.mxu0 %v4397
        %4423 = vmatpush.msra.mxu0 %v4396
        %4424 = vmatpush.msra.mxu0 %v4395
        %4425 = vmatpush.msra.mxu0 %v4394
        %4426 = vmatmul.f32.gmra.mxu0 %v4330
        %v4427 = vpop.f32.mrf.mxu0
        %v4428 = vadd.f32 0.0, %v4427
        %4429 = vmatmul.f32.gmra.mxu0 %v4331
        %v4430 = vpop.f32.mrf.mxu0
        %v4431 = vadd.f32 0.0, %v4430
        %4432 = vmatmul.f32.gmra.mxu0 %v4332
        %v4433 = vpop.f32.mrf.mxu0
        %v4434 = vadd.f32 0.0, %v4433
        %4435 = vmatmul.f32.gmra.mxu0 %v4333
        %v4436 = vpop.f32.mrf.mxu0
        %v4437 = vadd.f32 0.0, %v4436
        %4438 = vmatmul.f32.gmra.mxu0 %v4334
        %v4439 = vpop.f32.mrf.mxu0
        %v4440 = vadd.f32 0.0, %v4439
        %4441 = vmatmul.f32.gmra.mxu0 %v4335
        %v4442 = vpop.f32.mrf.mxu0
        %v4443 = vadd.f32 0.0, %v4442
        %4444 = vmatmul.f32.gmra.mxu0 %v4336
        %v4445 = vpop.f32.mrf.mxu0
        %v4446 = vadd.f32 0.0, %v4445
        %4447 = vmatmul.f32.gmra.mxu0 %v4337
        %v4448 = vpop.f32.mrf.mxu0
        %v4449 = vadd.f32 0.0, %v4448
        %4450 = vmatmul.f32.gmra.mxu0 %v4338
        %v4451 = vpop.f32.mrf.mxu0
        %v4452 = vadd.f32 0.0, %v4451
        %4453 = vmatmul.f32.gmra.mxu0 %v4339
        %v4454 = vpop.f32.mrf.mxu0
        %v4455 = vadd.f32 0.0, %v4454
        %4456 = vmatmul.f32.gmra.mxu0 %v4340
        %v4457 = vpop.f32.mrf.mxu0
        %v4458 = vadd.f32 0.0, %v4457
        %4459 = vmatmul.f32.gmra.mxu0 %v4341
        %v4460 = vpop.f32.mrf.mxu0
        %v4461 = vadd.f32 0.0, %v4460
        %4462 = vmatmul.f32.gmra.mxu0 %v4342
        %v4463 = vpop.f32.mrf.mxu0
        %v4464 = vadd.f32 0.0, %v4463
        %4465 = vmatmul.f32.gmra.mxu0 %v4343
        %v4466 = vpop.f32.mrf.mxu0
        %v4467 = vadd.f32 0.0, %v4466
        %4468 = vmatmul.f32.gmra.mxu0 %v4344
        %v4469 = vpop.f32.mrf.mxu0
        %v4470 = vadd.f32 0.0, %v4469
        %4471 = vmatmul.f32.gmra.mxu0 %v4345
        %v4472 = vpop.f32.mrf.mxu0
        %v4473 = vadd.f32 0.0, %v4472
        %4474 = vdwg.mxu0
        %4475 = vrot.lane.b32.xlu0 %v2678, 80
        %v4476 = vpop.permute.xlu0 %4475
        %v4478 = vadd.f32 %v4428, %v4476
        %v4479 = vadd.f32 %v4431, %v4476
        %v4480 = vadd.f32 %v4434, %v4476
        %v4481 = vadd.f32 %v4437, %v4476
        %v4482 = vadd.f32 %v4440, %v4476
        %v4483 = vadd.f32 %v4443, %v4476
        %v4484 = vadd.f32 %v4446, %v4476
        %v4485 = vadd.f32 %v4449, %v4476
        %v4486 = vadd.f32 %v4452, %v4476
        %v4487 = vadd.f32 %v4455, %v4476
        %v4488 = vadd.f32 %v4458, %v4476
        %v4489 = vadd.f32 %v4461, %v4476
        %v4490 = vadd.f32 %v4464, %v4476
        %v4491 = vadd.f32 %v4467, %v4476
        %v4492 = vadd.f32 %v4470, %v4476
        %v4493 = vadd.f32 %v4473, %v4476
        %4510 = vrot.lane.b32.xlu0 %v4478, 16
        %v4511 = vpop.permute.xlu0 %4510
        %4512 = vrot.lane.b32.xlu0 %v4479, 16
        %v4513 = vpop.permute.xlu0 %4512
        %4514 = vrot.lane.b32.xlu0 %v4480, 16
        %v4515 = vpop.permute.xlu0 %4514
        %4516 = vrot.lane.b32.xlu0 %v4481, 16
        %v4517 = vpop.permute.xlu0 %4516
        %4518 = vrot.lane.b32.xlu0 %v4482, 16
        %v4519 = vpop.permute.xlu0 %4518
        %4520 = vrot.lane.b32.xlu0 %v4483, 16
        %v4521 = vpop.permute.xlu0 %4520
        %4522 = vrot.lane.b32.xlu0 %v4484, 16
        %v4523 = vpop.permute.xlu0 %4522
        %4524 = vrot.lane.b32.xlu0 %v4485, 16
        %v4525 = vpop.permute.xlu0 %4524
        %4526 = vrot.lane.b32.xlu0 %v4486, 16
        %v4527 = vpop.permute.xlu0 %4526
        %4528 = vrot.lane.b32.xlu0 %v4487, 16
        %v4529 = vpop.permute.xlu0 %4528
        %4530 = vrot.lane.b32.xlu0 %v4488, 16
        %v4531 = vpop.permute.xlu0 %4530
        %4532 = vrot.lane.b32.xlu0 %v4489, 16
        %v4533 = vpop.permute.xlu0 %4532
        %4534 = vrot.lane.b32.xlu0 %v4490, 16
        %v4535 = vpop.permute.xlu0 %4534
        %4536 = vrot.lane.b32.xlu0 %v4491, 16
        %v4537 = vpop.permute.xlu0 %4536
        %4538 = vrot.lane.b32.xlu0 %v4492, 16
        %v4539 = vpop.permute.xlu0 %4538
        %4540 = vrot.lane.b32.xlu0 %v4493, 16
        %v4541 = vpop.permute.xlu0 %4540
        %4574 = vrot.lane.b32.xlu0 %v3991, 16
        %v4575 = vpop.permute.xlu0 %4574
        %4576 = vrot.lane.b32.xlu0 %v3994, 16
        %v4577 = vpop.permute.xlu0 %4576
        %4578 = vrot.lane.b32.xlu0 %v3997, 16
        %v4579 = vpop.permute.xlu0 %4578
        %4580 = vrot.lane.b32.xlu0 %v4000, 16
        %v4581 = vpop.permute.xlu0 %4580
        %4582 = vrot.lane.b32.xlu0 %v4003, 16
        %v4583 = vpop.permute.xlu0 %4582
        %4584 = vrot.lane.b32.xlu0 %v4006, 16
        %v4585 = vpop.permute.xlu0 %4584
        %4586 = vrot.lane.b32.xlu0 %v4009, 16
        %v4587 = vpop.permute.xlu0 %4586
        %4588 = vrot.lane.b32.xlu0 %v4012, 16
        %v4589 = vpop.permute.xlu0 %4588
        %4590 = vrot.lane.b32.xlu0 %v4015, 16
        %v4591 = vpop.permute.xlu0 %4590
        %4592 = vrot.lane.b32.xlu0 %v4018, 16
        %v4593 = vpop.permute.xlu0 %4592
        %4594 = vrot.lane.b32.xlu0 %v4021, 16
        %v4595 = vpop.permute.xlu0 %4594
        %4596 = vrot.lane.b32.xlu0 %v4024, 16
        %v4597 = vpop.permute.xlu0 %4596
        %4598 = vrot.lane.b32.xlu0 %v4027, 16
        %v4599 = vpop.permute.xlu0 %4598
        %4600 = vrot.lane.b32.xlu0 %v4030, 16
        %v4601 = vpop.permute.xlu0 %4600
        %4602 = vrot.lane.b32.xlu0 %v4033, 16
        %v4603 = vpop.permute.xlu0 %4602
        %4604 = vrot.lane.b32.xlu0 %v4036, 16
        %v4605 = vpop.permute.xlu0 %4604
        %4638 = vrot.lane.b32.xlu0 %v4428, 24
        %v4639 = vpop.permute.xlu0 %4638
        %4640 = vrot.lane.b32.xlu0 %v4431, 24
        %v4641 = vpop.permute.xlu0 %4640
        %4642 = vrot.lane.b32.xlu0 %v4434, 24
        %v4643 = vpop.permute.xlu0 %4642
        %4644 = vrot.lane.b32.xlu0 %v4437, 24
        %v4645 = vpop.permute.xlu0 %4644
        %4646 = vrot.lane.b32.xlu0 %v4440, 24
        %v4647 = vpop.permute.xlu0 %4646
        %4648 = vrot.lane.b32.xlu0 %v4443, 24
        %v4649 = vpop.permute.xlu0 %4648
        %4650 = vrot.lane.b32.xlu0 %v4446, 24
        %v4651 = vpop.permute.xlu0 %4650
        %4652 = vrot.lane.b32.xlu0 %v4449, 24
        %v4653 = vpop.permute.xlu0 %4652
        %4654 = vrot.lane.b32.xlu0 %v4452, 24
        %v4655 = vpop.permute.xlu0 %4654
        %4656 = vrot.lane.b32.xlu0 %v4455, 24
        %v4657 = vpop.permute.xlu0 %4656
        %4658 = vrot.lane.b32.xlu0 %v4458, 24
        %v4659 = vpop.permute.xlu0 %4658
        %4660 = vrot.lane.b32.xlu0 %v4461, 24
        %v4661 = vpop.permute.xlu0 %4660
        %4662 = vrot.lane.b32.xlu0 %v4464, 24
        %v4663 = vpop.permute.xlu0 %4662
        %4664 = vrot.lane.b32.xlu0 %v4467, 24
        %v4665 = vpop.permute.xlu0 %4664
        %4666 = vrot.lane.b32.xlu0 %v4470, 24
        %v4667 = vpop.permute.xlu0 %4666
        %4668 = vrot.lane.b32.xlu0 %v4473, 24
        %v4669 = vpop.permute.xlu0 %4668
        %v4686 = vsel %vm2643, %v4041, %v4511
        %v4687 = vsel %vm2643, %v4042, %v4513
        %v4688 = vsel %vm2643, %v4043, %v4515
        %v4689 = vsel %vm2643, %v4044, %v4517
        %v4690 = vsel %vm2643, %v4045, %v4519
        %v4691 = vsel %vm2643, %v4046, %v4521
        %v4692 = vsel %vm2643, %v4047, %v4523
        %v4693 = vsel %vm2643, %v4048, %v4525
        %v4694 = vsel %vm2643, %v4049, %v4527
        %v4695 = vsel %vm2643, %v4050, %v4529
        %v4696 = vsel %vm2643, %v4051, %v4531
        %v4697 = vsel %vm2643, %v4052, %v4533
        %v4698 = vsel %vm2643, %v4053, %v4535
        %v4699 = vsel %vm2643, %v4054, %v4537
        %v4700 = vsel %vm2643, %v4055, %v4539
        %v4701 = vsel %vm2643, %v4056, %v4541
        %v4702 = vsel %vm602, %v4686, %v4575
        %v4703 = vsel %vm602, %v4687, %v4577
        %v4704 = vsel %vm602, %v4688, %v4579
        %v4705 = vsel %vm602, %v4689, %v4581
        %v4706 = vsel %vm602, %v4690, %v4583
        %v4707 = vsel %vm602, %v4691, %v4585
        %v4708 = vsel %vm602, %v4692, %v4587
        %v4709 = vsel %vm602, %v4693, %v4589
        %v4710 = vsel %vm602, %v4694, %v4591
        %v4711 = vsel %vm602, %v4695, %v4593
        %v4712 = vsel %vm602, %v4696, %v4595
        %v4713 = vsel %vm602, %v4697, %v4597
        %v4714 = vsel %vm602, %v4698, %v4599
        %v4715 = vsel %vm602, %v4699, %v4601
        %v4716 = vsel %vm602, %v4700, %v4603
        %v4717 = vsel %vm602, %v4701, %v4605
        %vm4718 = vcmask 326656
        %v4719 = vsel %vm4718, %v4702, %v4639
        %v4720 = vsel %vm4718, %v4703, %v4641
        %v4721 = vsel %vm4718, %v4704, %v4643
        %v4722 = vsel %vm4718, %v4705, %v4645
        %v4723 = vsel %vm4718, %v4706, %v4647
        %v4724 = vsel %vm4718, %v4707, %v4649
        %v4725 = vsel %vm4718, %v4708, %v4651
        %v4726 = vsel %vm4718, %v4709, %v4653
        %v4727 = vsel %vm4718, %v4710, %v4655
        %v4728 = vsel %vm4718, %v4711, %v4657
        %v4729 = vsel %vm4718, %v4712, %v4659
        %v4730 = vsel %vm4718, %v4713, %v4661
        %v4731 = vsel %vm4718, %v4714, %v4663
        %v4732 = vsel %vm4718, %v4715, %v4665
        %v4733 = vsel %vm4718, %v4716, %v4667
        %v4734 = vsel %vm4718, %v4717, %v4669
        %v4735 = vsel %vm718, %v4719, 0.0
        %v4736 = vsel %vm718, %v4720, 0.0
        %v4737 = vsel %vm718, %v4721, 0.0
        %v4738 = vsel %vm718, %v4722, 0.0
        %v4739 = vsel %vm718, %v4723, 0.0
        %v4740 = vsel %vm718, %v4724, 0.0
        %v4741 = vsel %vm718, %v4725, 0.0
        %v4742 = vsel %vm718, %v4726, 0.0
        %v4743 = vsel %vm718, %v4727, 0.0
        %v4744 = vsel %vm718, %v4728, 0.0
        %v4745 = vsel %vm718, %v4729, 0.0
        %v4746 = vsel %vm718, %v4730, 0.0
        %v4747 = vsel %vm718, %v4731, 0.0
        %v4748 = vsel %vm718, %v4732, 0.0
        %v4749 = vsel %vm718, %v4733, 0.0
        %v4750 = vsel %vm718, %v4734, 0.0
        %4751 = vst [vmem:[%s438] sm:$0xff] %v4735
        %4752 = vst [vmem:[%s438 + $0x8] sm:$0xff] %v4736
        %4753 = vst [vmem:[%s438 + $0x10] sm:$0xff] %v4737
        %4754 = vst [vmem:[%s438 + $0x18] sm:$0xff] %v4738
        %4755 = vst [vmem:[%s438 + $0x20] sm:$0xff] %v4739
        %4756 = vst [vmem:[%s438 + $0x28] sm:$0xff] %v4740
        %4757 = vst [vmem:[%s438 + $0x30] sm:$0xff] %v4741
        %4758 = vst [vmem:[%s438 + $0x38] sm:$0xff] %v4742
        %4759 = vst [vmem:[%s438 + $0x40] sm:$0xff] %v4743
        %4760 = vst [vmem:[%s438 + $0x48] sm:$0xff] %v4744
        %4761 = vst [vmem:[%s438 + $0x50] sm:$0xff] %v4745
        %4762 = vst [vmem:[%s438 + $0x58] sm:$0xff] %v4746
        %4763 = vst [vmem:[%s438 + $0x60] sm:$0xff] %v4747
        %4764 = vst [vmem:[%s438 + $0x68] sm:$0xff] %v4748
        %4765 = vst [vmem:[%s438 + $0x70] sm:$0xff] %v4749
        %4766 = vst [vmem:[%s438 + $0x78] sm:$0xff] %v4750
        %s4767 = sand.u32 %s282, 1
        %s4768 = scalar_lea.sflag [#allocation4], %s4767
        %s4769 = sand.u32 %s282, 1
        %s4770 = smul.addr %s4769, 128
        %s4771 = scalar_lea.vmem [#allocation5], %s4770
        // Predicated region
        $region69: #{run_block.1} parent=63 // pred_check
          %p4772 = pneg %p292
        $region70: #{run_block.1} parent=63 // pred_check_branch
          %4774 = sbr.rel (%p4772) target = $region72
        $region71: #{run_block.1} parent=63 // pred_region
          %s4775 = smul.u32 16, %s28
          %4777 = vsyncadd %s4768, 0
          %s4778 = smul.addr %s4775, 8
          %s4779 = scalar_lea.hbm %s11, %s4778
          %s4780 = sshll.u32 %s4771, 4
          %s4781 = int_to_ptr.vmem [resolvable:$true] %s4780
          %s4782 = sshll.u32 %s4779, 4
          %s4783 = int_to_ptr.hbm [resolvable:$true] %s4782
          %4788 = dma.vmem_to_hbm [thread:$0]  %s4781, 2048, %s4783, %s4768, 128, 128, 8
        $region72: #{run_block.1} parent=63 // pred_fallthru
          _
      $region64: #{run_block.1} parent=5 // pred_fallthru
        _
      %p4789 = scmp.le.s32.totalorder 2, %s23
      // Predicated region
      $region73: #{run_block.1} parent=5 // pred_check
        %p4790 = pneg %p4789
      $region74: #{run_block.1} parent=5 // pred_check_branch
        %4792 = sbr.rel (%p4790) target = $region76
      $region75: #{run_block.1} parent=5 // pred_region
        %s4793 = ssub.s32 %s23, 2
        // Predicated region
        $region77: #{run_block.1} parent=75 // pred_check
          %p4794 = pneg %p298
        $region78: #{run_block.1} parent=75 // pred_check_branch
          %4796 = sbr.rel (%p4794) target = $region80
        $region79: #{run_block.1} parent=75 // pred_region
          %s4797 = sand.u32 %s283, 1
          %s4798 = scalar_lea.sflag [#allocation4], %s4797
          %s4799 = sand.u32 %s283, 1
          %s4800 = smul.addr %s4799, 128
          %s4801 = scalar_lea.vmem [#allocation5], %s4800
          %4803 = dma.done %s4798, 2048
        $region80: #{run_block.1} parent=75 // pred_fallthru
          _
      $region76: #{run_block.1} parent=5 // pred_fallthru
        _
    $region6: #{run_block.1} parent=1 // loop_footer
      %s27 = sadd.s32 1, %s23
    $region7: #{run_block.1} parent=1 // loop_footer_branch
      %22 = sbr.rel target = $region3
    $region8: #{run_block.1} parent=1 // loop_exit
      _
    %4804 = vsyncpa [#allocation3], 1
    %s4805 = scalar_lea.sflag [#allocation3], 1
    %4806 = vsyncpa %s4805, 1
    %4807 = vsyncpa [#allocation4], 1
    %s4808 = scalar_lea.sflag [#allocation4], 1
    %4809 = vsyncpa %s4808, 1

</llo_original>
